<compile_context>
chip_gen: v7x
topology: tpu7x:2x2x1
jax: 0.10.0
libtpu: 0.0.40
codegen_flags: <defaults>
</compile_context>

<pallas_src>
import math
import functools

import numpy as np
import jax
import jax.numpy as jnp
from jax.experimental import pallas as pl
from jax.experimental.pallas import tpu as pltpu

# ---------------- model config (small demo sizes) ----------------
D_MODEL = 32
NHEAD = 4
DIM_FF = 64
L_TGT = 8     # target sequence length
S_MEM = 16    # memory sequence length
BATCH = 2


# ---------------- in-kernel helpers ----------------
def _layernorm(x, w, b, eps=1e-5):
    mu = jnp.mean(x, axis=-1, keepdims=True)
    var = jnp.mean((x - mu) ** 2, axis=-1, keepdims=True)
    return (x - mu) * jax.lax.rsqrt(var + eps) * w + b


def _softmax_rows(s):
    m = jnp.max(s, axis=-1, keepdims=True)
    p = jnp.exp(s - m)
    # approx=True lowers to the EUP vrcp slot (otherwise idle).
    return p * pl.reciprocal(jnp.sum(p, axis=-1, keepdims=True), approx=True)


def _mha_block(acc_ref, q, k, v, wo, *, N, Lq, Lk, H, dh, scale):
    """Multi-head attention with the output projection folded per head.

    q: (N*Lq, E) batch-major rows; k, v: (N*Lk, E); wo: (E, E) (in->out).
    Writes (attn @ wo) into acc_ref (N*Lq, E) and returns its value.
    """
    E = wo.shape[1]
    for n in range(N):                      # static unroll: N*H tiny matmuls,
        r0 = n * Lq                         # all inside the single kernel.
        s0 = n * Lk
        out_n = jnp.zeros((Lq, E), jnp.float32)
        for h in range(H):
            c0 = h * dh
            qn = q[r0:r0 + Lq, c0:c0 + dh]            # (Lq, dh)
            kn = k[s0:s0 + Lk, c0:c0 + dh]            # (Lk, dh)
            vn = v[s0:s0 + Lk, c0:c0 + dh]            # (Lk, dh)
            s = jax.lax.dot_general(                   # q @ k.T (no transpose
                qn, kn, (((1,), (1,)), ((), ())),      #  materialized)
                preferred_element_type=jnp.float32) * scale
            p = _softmax_rows(s)
            o = jnp.dot(p, vn, preferred_element_type=jnp.float32)  # (Lq, dh)
            # Fold the out-projection per head: keeps everything full-width so
            # the narrow (Lq, dh) layout never needs assembling or storing.
            out_n = out_n + jnp.dot(o, wo[c0:c0 + dh, :],
                                    preferred_element_type=jnp.float32)
        acc_ref[r0:r0 + Lq, :] = out_n
    return acc_ref[...]


# ---------------- the fused decoder-layer kernel ----------------
def _decoder_layer_kernel(
        x_ref, mem_ref, qpos_ref, mpos_ref,
        n1w_ref, n1b_ref, n2w_ref, n2b_ref, n3w_ref, n3b_ref,
        self_wqk_ref, self_wv_ref, self_wo_ref,
        cross_wq_ref, cross_wk_ref, cross_wv_ref, cross_wo_ref,
        lin1_wt_ref, lin1_b_ref, lin2_wt_ref, lin2_b_ref,
        out_ref, acc_ref,
        *, N, L, S, H):
    E = x_ref.shape[-1]
    dh = E // H
    scale = 1.0 / math.sqrt(dh)

    x = x_ref[...]        # (N*L, E), batch-major rows
    mem = mem_ref[...]    # (N*S, E)
    qpos = qpos_ref[...]  # (N*L, E)
    mpos = mpos_ref[...]  # (N*S, E)

    # ---- self-attention block (pre-norm) ----
    t2 = _layernorm(x, n1w_ref[...], n1b_ref[...])
    qk_in = t2 + qpos
    qk = jnp.dot(qk_in, self_wqk_ref[...],                 # fused Q|K projection
                 preferred_element_type=jnp.float32)        # (N*L, 2E)
    q = qk[:, :E]
    k = qk[:, E:]
    v = jnp.dot(t2, self_wv_ref[...], preferred_element_type=jnp.float32)
    attn = _mha_block(acc_ref, q, k, v, self_wo_ref[...],
                      N=N, Lq=L, Lk=L, H=H, dh=dh, scale=scale)
    x = x + attn

    # ---- cross-attention block ----
    t2 = _layernorm(x, n2w_ref[...], n2b_ref[...])
    q = jnp.dot(t2 + qpos, cross_wq_ref[...], preferred_element_type=jnp.float32)
    k = jnp.dot(mem + mpos, cross_wk_ref[...], preferred_element_type=jnp.float32)
    v = jnp.dot(mem, cross_wv_ref[...], preferred_element_type=jnp.float32)
    attn = _mha_block(acc_ref, q, k, v, cross_wo_ref[...],
                      N=N, Lq=L, Lk=S, H=H, dh=dh, scale=scale)
    x = x + attn

    # ---- feed-forward block ----
    t2 = _layernorm(x, n3w_ref[...], n3b_ref[...])
    hdn = jnp.maximum(
        jnp.dot(t2, lin1_wt_ref[...], preferred_element_type=jnp.float32)
        + lin1_b_ref[...], 0.0)
    x = x + (jnp.dot(hdn, lin2_wt_ref[...], preferred_element_type=jnp.float32)
             + lin2_b_ref[...])

    out_ref[...] = x


# ---------------- jitted host wrapper ----------------
@functools.partial(jax.jit, static_argnames=("nhead",))
def _decoder_layer_jit(pp, tgt, memory, pos, query_pos, nhead):
    L, N, E = tgt.shape
    S = memory.shape[0]
    # Batch-major, 2-D, lane-dense layouts for the kernel (XLA folds these
    # tiny transposes/reshapes; they never hit a separate Pallas launch).
    x = jnp.transpose(tgt, (1, 0, 2)).reshape(N * L, E)
    mem = jnp.transpose(memory, (1, 0, 2)).reshape(N * S, E)
    qp = jnp.transpose(query_pos, (1, 0, 2)).reshape(N * L, E)
    mp = jnp.transpose(pos, (1, 0, 2)).reshape(N * S, E)

    kernel = functools.partial(_decoder_layer_kernel, N=N, L=L, S=S, H=nhead)
    out = pl.pallas_call(
        kernel,
        # No grid: the whole (tiny) working set fits in VMEM; one grid step
        # avoids per-step (~600 cyc) overhead.  At production sizes, tile rows
        # across a "parallel" grid axis instead (v7x: 2 TensorCores).
        out_shape=jax.ShapeDtypeStruct((N * L, E), jnp.float32),
        scratch_shapes=[pltpu.VMEM((N * L, E), jnp.float32)],
    )(x, mem, qp, mp,
      pp["norm1_w"], pp["norm1_b"], pp["norm2_w"], pp["norm2_b"],
      pp["norm3_w"], pp["norm3_b"],
      pp["self_wqk"], pp["self_wv"], pp["self_wo"],
      pp["cross_wq"], pp["cross_wk"], pp["cross_wv"], pp["cross_wo"],
      pp["lin1_wt"], pp["lin1_b"], pp["lin2_wt"], pp["lin2_b"])
    return jnp.transpose(out.reshape(N, L, E), (1, 0, 2))


def decoder_layer_forward(packed_params, tgt, memory, pos=None, query_pos=None,
                          nhead=NHEAD):
    # Dropout == identity (eval mode); None positional embeddings == zeros.
    if pos is None:
        pos = jnp.zeros_like(memory)
    if query_pos is None:
        query_pos = jnp.zeros_like(tgt)
    return _decoder_layer_jit(packed_params, tgt, memory, pos, query_pos,
                              nhead=nhead)


# ---------------- one-time parameter packing ----------------
def pack_params(params, d_model=D_MODEL):
    """Pre-transpose / pre-slice weights so the hot path has zero reshapes."""
    E = d_model

    def split_in(w):                       # PyTorch in_proj_weight (3E, E)
        return w[:E], w[E:2 * E], w[2 * E:]

    swq, swk, swv = split_in(params["self_in_w"])
    cwq, cwk, cwv = split_in(params["cross_in_w"])
    return {
        "norm1_w": params["norm1_w"].reshape(1, E),
        "norm1_b": params["norm1_b"].reshape(1, E),
        "norm2_w": params["norm2_w"].reshape(1, E),
        "norm2_b": params["norm2_b"].reshape(1, E),
        "norm3_w": params["norm3_w"].reshape(1, E),
        "norm3_b": params["norm3_b"].reshape(1, E),
        "self_wqk": jnp.concatenate([swq.T, swk.T], axis=1),   # (E, 2E)
        "self_wv": swv.T,                                      # (E, E)
        "self_wo": params["self_out_w"].T,                     # (E, E)
        "cross_wq": cwq.T,
        "cross_wk": cwk.T,
        "cross_wv": cwv.T,
        "cross_wo": params["cross_out_w"].T,
        "lin1_wt": params["lin1_w"].T,                         # (E, FF)
        "lin1_b": params["lin1_b"].reshape(1, -1),             # (1, FF)
        "lin2_wt": params["lin2_w"].T,                         # (FF, E)
        "lin2_b": params["lin2_b"].reshape(1, -1),             # (1, E)
    }


# ---------------- numpy reference (float64) ----------------
def numpy_reference(params, tgt, memory, pos, query_pos, nhead):
    p = {k: np.asarray(v, np.float64) for k, v in params.items()}
    tgt = np.asarray(tgt, np.float64)
    memory = np.asarray(memory, np.float64)
    pos = np.asarray(pos, np.float64)
    query_pos = np.asarray(query_pos, np.float64)

    def ln(x, w, b):
        m = x.mean(-1, keepdims=True)
        v = ((x - m) ** 2).mean(-1, keepdims=True)
        return (x - m) / np.sqrt(v + 1e-5) * w + b

    def mha(q_in, k_in, v_in, w_in, w_out):
        Lq, N, E = q_in.shape
        Lk = k_in.shape[0]
        dh = E // nhead
        wq, wk, wv = w_in[:E], w_in[E:2 * E], w_in[2 * E:]
        q = q_in.reshape(Lq * N, E) @ wq.T
        k = k_in.reshape(Lk * N, E) @ wk.T
        v = v_in.reshape(Lk * N, E) @ wv.T

        def heads(x, Lx):
            return x.reshape(Lx, N, nhead, dh).transpose(1, 2, 0, 3).reshape(
                N * nhead, Lx, dh)

        qh, kh, vh = heads(q, Lq), heads(k, Lk), heads(v, Lk)
        s = np.einsum("bld,bsd->bls", qh, kh) / math.sqrt(dh)
        s = s - s.max(-1, keepdims=True)
        a = np.exp(s)
        a = a / a.sum(-1, keepdims=True)
        o = np.einsum("bls,bsd->bld", a, vh)
        o = o.reshape(N, nhead, Lq, dh).transpose(2, 0, 1, 3).reshape(Lq * N, E)
        o = o @ w_out.T
        return o.reshape(Lq, N, E)

    L, N, E = tgt.shape
    t2 = ln(tgt, p["norm1_w"], p["norm1_b"])
    qk = t2 + query_pos
    tgt = tgt + mha(qk, qk, t2, p["self_in_w"], p["self_out_w"])
    t2 = ln(tgt, p["norm2_w"], p["norm2_b"])
    tgt = tgt + mha(t2 + query_pos, memory + pos, memory,
                    p["cross_in_w"], p["cross_out_w"])
    t2 = ln(tgt, p["norm3_w"], p["norm3_b"])
    h = np.maximum(t2.reshape(L * N, E) @ p["lin1_w"].T + p["lin1_b"], 0.0)
    t2 = h @ p["lin2_w"].T + p["lin2_b"]
    return tgt + t2.reshape(L, N, E)


# ---------------- deterministic parameter init ----------------
def init_params(key, d_model, nhead, dim_ff):
    keys = jax.random.split(key, 12)
    s = 0.1
    return {
        "self_in_w":  s * jax.random.normal(keys[0], (3 * d_model, d_model), jnp.float32),
        "self_out_w": s * jax.random.normal(keys[1], (d_model, d_model), jnp.float32),
        "cross_in_w": s * jax.random.normal(keys[2], (3 * d_model, d_model), jnp.float32),
        "cross_out_w": s * jax.random.normal(keys[3], (d_model, d_model), jnp.float32),
        "lin1_w": s * jax.random.normal(keys[4], (dim_ff, d_model), jnp.float32),
        "lin1_b": s * jax.random.normal(keys[5], (dim_ff,), jnp.float32),
        "lin2_w": s * jax.random.normal(keys[6], (d_model, dim_ff), jnp.float32),
        "lin2_b": s * jax.random.normal(keys[7], (d_model,), jnp.float32),
        "norm1_w": 1.0 + s * jax.random.normal(keys[8], (d_model,), jnp.float32),
        "norm1_b": s * jax.random.normal(keys[9], (d_model,), jnp.float32),
        "norm2_w": 1.0 + s * jax.random.normal(keys[10], (d_model,), jnp.float32),
        "norm2_b": s * jax.random.normal(keys[11], (d_model,), jnp.float32),
        "norm3_w": jnp.ones((d_model,), jnp.float32),
        "norm3_b": jnp.zeros((d_model,), jnp.float32),
    }


if __name__ == "__main__":
    key = jax.random.PRNGKey(0)
    kp, k1, k2, k3, k4 = jax.random.split(key, 5)

    params = init_params(kp, D_MODEL, NHEAD, DIM_FF)
    packed = pack_params(params, D_MODEL)

    tgt = jax.random.normal(k1, (L_TGT, BATCH, D_MODEL), jnp.float32)
    memory = jax.random.normal(k2, (S_MEM, BATCH, D_MODEL), jnp.float32)
    query_pos = 0.5 * jax.random.normal(k3, (L_TGT, BATCH, D_MODEL), jnp.float32)
    pos = 0.5 * jax.random.normal(k4, (S_MEM, BATCH, D_MODEL), jnp.float32)

    out = decoder_layer_forward(packed, tgt, memory, pos=pos,
                                query_pos=query_pos, nhead=NHEAD)
    out = jax.block_until_ready(out)

    ref = numpy_reference(params, tgt, memory, pos, query_pos, NHEAD)
    if not np.allclose(np.asarray(out), ref, atol=2e-3, rtol=2e-3):
        raise AssertionError(
            "mismatch vs reference: max abs err = "
            f"{np.max(np.abs(np.asarray(out) - ref))}")
    print("KERNEL_OK")
</pallas_src>

<mosaic_0001>
module attributes {stable_mosaic.version = 11 : i64} {
  func.func @_decoder_layer_kernel(%arg0: memref<16x32xf32, #tpu.memory_space<vmem>>, %arg1: memref<32x32xf32, #tpu.memory_space<vmem>>, %arg2: memref<16x32xf32, #tpu.memory_space<vmem>>, %arg3: memref<32x32xf32, #tpu.memory_space<vmem>>, %arg4: memref<1x32xf32, #tpu.memory_space<vmem>>, %arg5: memref<1x32xf32, #tpu.memory_space<vmem>>, %arg6: memref<1x32xf32, #tpu.memory_space<vmem>>, %arg7: memref<1x32xf32, #tpu.memory_space<vmem>>, %arg8: memref<1x32xf32, #tpu.memory_space<vmem>>, %arg9: memref<1x32xf32, #tpu.memory_space<vmem>>, %arg10: memref<32x64xf32, #tpu.memory_space<vmem>>, %arg11: memref<32x32xf32, #tpu.memory_space<vmem>>, %arg12: memref<32x32xf32, #tpu.memory_space<vmem>>, %arg13: memref<32x32xf32, #tpu.memory_space<vmem>>, %arg14: memref<32x32xf32, #tpu.memory_space<vmem>>, %arg15: memref<32x32xf32, #tpu.memory_space<vmem>>, %arg16: memref<32x32xf32, #tpu.memory_space<vmem>>, %arg17: memref<32x64xf32, #tpu.memory_space<vmem>>, %arg18: memref<1x64xf32, #tpu.memory_space<vmem>>, %arg19: memref<64x32xf32, #tpu.memory_space<vmem>>, %arg20: memref<1x32xf32, #tpu.memory_space<vmem>>, %arg21: memref<16x32xf32, #tpu.memory_space<vmem>>, %arg22: memref<16x32xf32, #tpu.memory_space<vmem>>) attributes {dimension_semantics = [], scalar_prefetch = 0 : i64, scratch_operands = 1 : i64, tpu.core_type = #tpu.core_type<tc>} {
    %c0 = arith.constant 0 : index
    %c0_0 = arith.constant 0 : index
    %0 = vector.load %arg0[%c0, %c0_0] : memref<16x32xf32, #tpu.memory_space<vmem>>, vector<16x32xf32>
    %c0_1 = arith.constant 0 : index
    %c0_2 = arith.constant 0 : index
    %1 = vector.load %arg1[%c0_1, %c0_2] : memref<32x32xf32, #tpu.memory_space<vmem>>, vector<32x32xf32>
    %c0_3 = arith.constant 0 : index
    %c0_4 = arith.constant 0 : index
    %2 = vector.load %arg2[%c0_3, %c0_4] : memref<16x32xf32, #tpu.memory_space<vmem>>, vector<16x32xf32>
    %c0_5 = arith.constant 0 : index
    %c0_6 = arith.constant 0 : index
    %3 = vector.load %arg3[%c0_5, %c0_6] : memref<32x32xf32, #tpu.memory_space<vmem>>, vector<32x32xf32>
    %c0_7 = arith.constant 0 : index
    %c0_8 = arith.constant 0 : index
    %4 = vector.load %arg4[%c0_7, %c0_8] : memref<1x32xf32, #tpu.memory_space<vmem>>, vector<1x32xf32>
    %c0_9 = arith.constant 0 : index
    %c0_10 = arith.constant 0 : index
    %5 = vector.load %arg5[%c0_9, %c0_10] : memref<1x32xf32, #tpu.memory_space<vmem>>, vector<1x32xf32>
    %cst = arith.constant dense<0.000000e+00> : vector<16xf32>
    %6 = vector.multi_reduction <add>, %0, %cst [1] : vector<16x32xf32> to vector<16xf32>
    %7 = vector.shape_cast %6 : vector<16xf32> to vector<16x1xf32>
    %cst_11 = arith.constant 3.200000e+01 : f32
    %8 = vector.broadcast %cst_11 : f32 to vector<16x1xf32>
    %9 = arith.divf %7, %8 : vector<16x1xf32>
    %10 = vector.broadcast %9 : vector<16x1xf32> to vector<16x32xf32>
    %11 = arith.subf %0, %10 : vector<16x32xf32>
    %12 = arith.mulf %11, %11 : vector<16x32xf32>
    %cst_12 = arith.constant dense<0.000000e+00> : vector<16xf32>
    %13 = vector.multi_reduction <add>, %12, %cst_12 [1] : vector<16x32xf32> to vector<16xf32>
    %14 = vector.shape_cast %13 : vector<16xf32> to vector<16x1xf32>
    %cst_13 = arith.constant 3.200000e+01 : f32
    %15 = vector.broadcast %cst_13 : f32 to vector<16x1xf32>
    %16 = arith.divf %14, %15 : vector<16x1xf32>
    %17 = vector.broadcast %9 : vector<16x1xf32> to vector<16x32xf32>
    %18 = arith.subf %0, %17 : vector<16x32xf32>
    %cst_14 = arith.constant 9.99999974E-6 : f32
    %19 = vector.broadcast %cst_14 : f32 to vector<16x1xf32>
    %20 = arith.addf %16, %19 : vector<16x1xf32>
    %21 = math.rsqrt %20 : vector<16x1xf32>
    %22 = vector.broadcast %21 : vector<16x1xf32> to vector<16x32xf32>
    %23 = arith.mulf %18, %22 : vector<16x32xf32>
    %24 = vector.broadcast %4 : vector<1x32xf32> to vector<16x32xf32>
    %25 = arith.mulf %23, %24 : vector<16x32xf32>
    %26 = vector.broadcast %5 : vector<1x32xf32> to vector<16x32xf32>
    %27 = arith.addf %25, %26 : vector<16x32xf32>
    %28 = arith.addf %27, %2 : vector<16x32xf32>
    %c0_15 = arith.constant 0 : index
    %c0_16 = arith.constant 0 : index
    %29 = vector.load %arg10[%c0_15, %c0_16] : memref<32x64xf32, #tpu.memory_space<vmem>>, vector<32x64xf32>
    %cst_17 = arith.constant dense<0.000000e+00> : vector<16x64xf32>
    %30 = tpu.matmul %28, %29, %cst_17 {dimension_numbers = #tpu.dot_dimension_numbers<[1], [0], [0], [1], [0, 0, 1, 1], [], []>} : vector<16x32xf32>, vector<32x64xf32>, vector<16x64xf32> -> vector<16x64xf32>
    %31 = vector.extract_strided_slice %30 {offsets = [0, 0], sizes = [16, 32], strides = [1, 1]} : vector<16x64xf32> to vector<16x32xf32>
    %32 = vector.extract_strided_slice %30 {offsets = [0, 32], sizes = [16, 32], strides = [1, 1]} : vector<16x64xf32> to vector<16x32xf32>
    %c0_18 = arith.constant 0 : index
    %c0_19 = arith.constant 0 : index
    %33 = vector.load %arg11[%c0_18, %c0_19] : memref<32x32xf32, #tpu.memory_space<vmem>>, vector<32x32xf32>
    %cst_20 = arith.constant dense<0.000000e+00> : vector<16x32xf32>
    %34 = tpu.matmul %27, %33, %cst_20 {dimension_numbers = #tpu.dot_dimension_numbers<[1], [0], [0], [1], [0, 0, 1, 1], [], []>} : vector<16x32xf32>, vector<32x32xf32>, vector<16x32xf32> -> vector<16x32xf32>
    %c0_21 = arith.constant 0 : index
    %c0_22 = arith.constant 0 : index
    %35 = vector.load %arg12[%c0_21, %c0_22] : memref<32x32xf32, #tpu.memory_space<vmem>>, vector<32x32xf32>
    %cst_23 = arith.constant 0.000000e+00 : f32
    %36 = vector.broadcast %cst_23 : f32 to vector<8x32xf32>
    %37 = vector.extract_strided_slice %31 {offsets = [0, 0], sizes = [8, 8], strides = [1, 1]} : vector<16x32xf32> to vector<8x8xf32>
    %38 = vector.extract_strided_slice %32 {offsets = [0, 0], sizes = [8, 8], strides = [1, 1]} : vector<16x32xf32> to vector<8x8xf32>
    %39 = vector.extract_strided_slice %34 {offsets = [0, 0], sizes = [8, 8], strides = [1, 1]} : vector<16x32xf32> to vector<8x8xf32>
    %cst_24 = arith.constant dense<0.000000e+00> : vector<8x8xf32>
    %40 = tpu.matmul %37, %38, %cst_24 {dimension_numbers = #tpu.dot_dimension_numbers<[1], [1], [0], [0], [0, 0, 1, 0], [], []>} : vector<8x8xf32>, vector<8x8xf32>, vector<8x8xf32> -> vector<8x8xf32>
    %cst_25 = arith.constant 0.353553385 : f32
    %41 = vector.broadcast %cst_25 : f32 to vector<8x8xf32>
    %42 = arith.mulf %40, %41 : vector<8x8xf32>
    %cst_26 = arith.constant dense<0xFF800000> : vector<8xf32>
    %43 = vector.multi_reduction <maximumf>, %42, %cst_26 [1] : vector<8x8xf32> to vector<8xf32>
    %44 = vector.shape_cast %43 : vector<8xf32> to vector<8x1xf32>
    %45 = vector.broadcast %44 : vector<8x1xf32> to vector<8x8xf32>
    %46 = arith.subf %42, %45 : vector<8x8xf32>
    %47 = math.exp %46 : vector<8x8xf32>
    %cst_27 = arith.constant dense<0.000000e+00> : vector<8xf32>
    %48 = vector.multi_reduction <add>, %47, %cst_27 [1] : vector<8x8xf32> to vector<8xf32>
    %49 = vector.shape_cast %48 : vector<8xf32> to vector<8x1xf32>
    %50 = tpu.reciprocal %49 {approx = true} : vector<8x1xf32> -> vector<8x1xf32>
    %51 = vector.broadcast %50 : vector<8x1xf32> to vector<8x8xf32>
    %52 = arith.mulf %47, %51 : vector<8x8xf32>
    %cst_28 = arith.constant dense<0.000000e+00> : vector<8x8xf32>
    %53 = tpu.matmul %52, %39, %cst_28 {dimension_numbers = #tpu.dot_dimension_numbers<[1], [0], [0], [1], [0, 0, 1, 1], [], []>} : vector<8x8xf32>, vector<8x8xf32>, vector<8x8xf32> -> vector<8x8xf32>
    %54 = vector.extract_strided_slice %35 {offsets = [0, 0], sizes = [8, 32], strides = [1, 1]} : vector<32x32xf32> to vector<8x32xf32>
    %cst_29 = arith.constant dense<0.000000e+00> : vector<8x32xf32>
    %55 = tpu.matmul %53, %54, %cst_29 {dimension_numbers = #tpu.dot_dimension_numbers<[1], [0], [0], [1], [0, 0, 1, 1], [], []>} : vector<8x8xf32>, vector<8x32xf32>, vector<8x32xf32> -> vector<8x32xf32>
    %56 = arith.addf %36, %55 : vector<8x32xf32>
    %57 = vector.extract_strided_slice %31 {offsets = [0, 8], sizes = [8, 8], strides = [1, 1]} : vector<16x32xf32> to vector<8x8xf32>
    %58 = vector.extract_strided_slice %32 {offsets = [0, 8], sizes = [8, 8], strides = [1, 1]} : vector<16x32xf32> to vector<8x8xf32>
    %59 = vector.extract_strided_slice %34 {offsets = [0, 8], sizes = [8, 8], strides = [1, 1]} : vector<16x32xf32> to vector<8x8xf32>
    %cst_30 = arith.constant dense<0.000000e+00> : vector<8x8xf32>
    %60 = tpu.matmul %57, %58, %cst_30 {dimension_numbers = #tpu.dot_dimension_numbers<[1], [1], [0], [0], [0, 0, 1, 0], [], []>} : vector<8x8xf32>, vector<8x8xf32>, vector<8x8xf32> -> vector<8x8xf32>
    %cst_31 = arith.constant 0.353553385 : f32
    %61 = vector.broadcast %cst_31 : f32 to vector<8x8xf32>
    %62 = arith.mulf %60, %61 : vector<8x8xf32>
    %cst_32 = arith.constant dense<0xFF800000> : vector<8xf32>
    %63 = vector.multi_reduction <maximumf>, %62, %cst_32 [1] : vector<8x8xf32> to vector<8xf32>
    %64 = vector.shape_cast %63 : vector<8xf32> to vector<8x1xf32>
    %65 = vector.broadcast %64 : vector<8x1xf32> to vector<8x8xf32>
    %66 = arith.subf %62, %65 : vector<8x8xf32>
    %67 = math.exp %66 : vector<8x8xf32>
    %cst_33 = arith.constant dense<0.000000e+00> : vector<8xf32>
    %68 = vector.multi_reduction <add>, %67, %cst_33 [1] : vector<8x8xf32> to vector<8xf32>
    %69 = vector.shape_cast %68 : vector<8xf32> to vector<8x1xf32>
    %70 = tpu.reciprocal %69 {approx = true} : vector<8x1xf32> -> vector<8x1xf32>
    %71 = vector.broadcast %70 : vector<8x1xf32> to vector<8x8xf32>
    %72 = arith.mulf %67, %71 : vector<8x8xf32>
    %cst_34 = arith.constant dense<0.000000e+00> : vector<8x8xf32>
    %73 = tpu.matmul %72, %59, %cst_34 {dimension_numbers = #tpu.dot_dimension_numbers<[1], [0], [0], [1], [0, 0, 1, 1], [], []>} : vector<8x8xf32>, vector<8x8xf32>, vector<8x8xf32> -> vector<8x8xf32>
    %74 = vector.extract_strided_slice %35 {offsets = [8, 0], sizes = [8, 32], strides = [1, 1]} : vector<32x32xf32> to vector<8x32xf32>
    %cst_35 = arith.constant dense<0.000000e+00> : vector<8x32xf32>
    %75 = tpu.matmul %73, %74, %cst_35 {dimension_numbers = #tpu.dot_dimension_numbers<[1], [0], [0], [1], [0, 0, 1, 1], [], []>} : vector<8x8xf32>, vector<8x32xf32>, vector<8x32xf32> -> vector<8x32xf32>
    %76 = arith.addf %56, %75 : vector<8x32xf32>
    %77 = vector.extract_strided_slice %31 {offsets = [0, 16], sizes = [8, 8], strides = [1, 1]} : vector<16x32xf32> to vector<8x8xf32>
    %78 = vector.extract_strided_slice %32 {offsets = [0, 16], sizes = [8, 8], strides = [1, 1]} : vector<16x32xf32> to vector<8x8xf32>
    %79 = vector.extract_strided_slice %34 {offsets = [0, 16], sizes = [8, 8], strides = [1, 1]} : vector<16x32xf32> to vector<8x8xf32>
    %cst_36 = arith.constant dense<0.000000e+00> : vector<8x8xf32>
    %80 = tpu.matmul %77, %78, %cst_36 {dimension_numbers = #tpu.dot_dimension_numbers<[1], [1], [0], [0], [0, 0, 1, 0], [], []>} : vector<8x8xf32>, vector<8x8xf32>, vector<8x8xf32> -> vector<8x8xf32>
    %cst_37 = arith.constant 0.353553385 : f32
    %81 = vector.broadcast %cst_37 : f32 to vector<8x8xf32>
    %82 = arith.mulf %80, %81 : vector<8x8xf32>
    %cst_38 = arith.constant dense<0xFF800000> : vector<8xf32>
    %83 = vector.multi_reduction <maximumf>, %82, %cst_38 [1] : vector<8x8xf32> to vector<8xf32>
    %84 = vector.shape_cast %83 : vector<8xf32> to vector<8x1xf32>
    %85 = vector.broadcast %84 : vector<8x1xf32> to vector<8x8xf32>
    %86 = arith.subf %82, %85 : vector<8x8xf32>
    %87 = math.exp %86 : vector<8x8xf32>
    %cst_39 = arith.constant dense<0.000000e+00> : vector<8xf32>
    %88 = vector.multi_reduction <add>, %87, %cst_39 [1] : vector<8x8xf32> to vector<8xf32>
    %89 = vector.shape_cast %88 : vector<8xf32> to vector<8x1xf32>
    %90 = tpu.reciprocal %89 {approx = true} : vector<8x1xf32> -> vector<8x1xf32>
    %91 = vector.broadcast %90 : vector<8x1xf32> to vector<8x8xf32>
    %92 = arith.mulf %87, %91 : vector<8x8xf32>
    %cst_40 = arith.constant dense<0.000000e+00> : vector<8x8xf32>
    %93 = tpu.matmul %92, %79, %cst_40 {dimension_numbers = #tpu.dot_dimension_numbers<[1], [0], [0], [1], [0, 0, 1, 1], [], []>} : vector<8x8xf32>, vector<8x8xf32>, vector<8x8xf32> -> vector<8x8xf32>
    %94 = vector.extract_strided_slice %35 {offsets = [16, 0], sizes = [8, 32], strides = [1, 1]} : vector<32x32xf32> to vector<8x32xf32>
    %cst_41 = arith.constant dense<0.000000e+00> : vector<8x32xf32>
    %95 = tpu.matmul %93, %94, %cst_41 {dimension_numbers = #tpu.dot_dimension_numbers<[1], [0], [0], [1], [0, 0, 1, 1], [], []>} : vector<8x8xf32>, vector<8x32xf32>, vector<8x32xf32> -> vector<8x32xf32>
    %96 = arith.addf %76, %95 : vector<8x32xf32>
    %97 = vector.extract_strided_slice %31 {offsets = [0, 24], sizes = [8, 8], strides = [1, 1]} : vector<16x32xf32> to vector<8x8xf32>
    %98 = vector.extract_strided_slice %32 {offsets = [0, 24], sizes = [8, 8], strides = [1, 1]} : vector<16x32xf32> to vector<8x8xf32>
    %99 = vector.extract_strided_slice %34 {offsets = [0, 24], sizes = [8, 8], strides = [1, 1]} : vector<16x32xf32> to vector<8x8xf32>
    %cst_42 = arith.constant dense<0.000000e+00> : vector<8x8xf32>
    %100 = tpu.matmul %97, %98, %cst_42 {dimension_numbers = #tpu.dot_dimension_numbers<[1], [1], [0], [0], [0, 0, 1, 0], [], []>} : vector<8x8xf32>, vector<8x8xf32>, vector<8x8xf32> -> vector<8x8xf32>
    %cst_43 = arith.constant 0.353553385 : f32
    %101 = vector.broadcast %cst_43 : f32 to vector<8x8xf32>
    %102 = arith.mulf %100, %101 : vector<8x8xf32>
    %cst_44 = arith.constant dense<0xFF800000> : vector<8xf32>
    %103 = vector.multi_reduction <maximumf>, %102, %cst_44 [1] : vector<8x8xf32> to vector<8xf32>
    %104 = vector.shape_cast %103 : vector<8xf32> to vector<8x1xf32>
    %105 = vector.broadcast %104 : vector<8x1xf32> to vector<8x8xf32>
    %106 = arith.subf %102, %105 : vector<8x8xf32>
    %107 = math.exp %106 : vector<8x8xf32>
    %cst_45 = arith.constant dense<0.000000e+00> : vector<8xf32>
    %108 = vector.multi_reduction <add>, %107, %cst_45 [1] : vector<8x8xf32> to vector<8xf32>
    %109 = vector.shape_cast %108 : vector<8xf32> to vector<8x1xf32>
    %110 = tpu.reciprocal %109 {approx = true} : vector<8x1xf32> -> vector<8x1xf32>
    %111 = vector.broadcast %110 : vector<8x1xf32> to vector<8x8xf32>
    %112 = arith.mulf %107, %111 : vector<8x8xf32>
    %cst_46 = arith.constant dense<0.000000e+00> : vector<8x8xf32>
    %113 = tpu.matmul %112, %99, %cst_46 {dimension_numbers = #tpu.dot_dimension_numbers<[1], [0], [0], [1], [0, 0, 1, 1], [], []>} : vector<8x8xf32>, vector<8x8xf32>, vector<8x8xf32> -> vector<8x8xf32>
    %114 = vector.extract_strided_slice %35 {offsets = [24, 0], sizes = [8, 32], strides = [1, 1]} : vector<32x32xf32> to vector<8x32xf32>
    %cst_47 = arith.constant dense<0.000000e+00> : vector<8x32xf32>
    %115 = tpu.matmul %113, %114, %cst_47 {dimension_numbers = #tpu.dot_dimension_numbers<[1], [0], [0], [1], [0, 0, 1, 1], [], []>} : vector<8x8xf32>, vector<8x32xf32>, vector<8x32xf32> -> vector<8x32xf32>
    %116 = arith.addf %96, %115 : vector<8x32xf32>
    %c0_48 = arith.constant 0 : index
    %c0_49 = arith.constant 0 : index
    %117 = vector.load %arg22[%c0_48, %c0_49] : memref<16x32xf32, #tpu.memory_space<vmem>>, vector<8x32xf32>
    tpu.vector_store %arg22[%c0_48, %c0_49], %116 {strides = array<i32>} : memref<16x32xf32, #tpu.memory_space<vmem>>, vector<8x32xf32>,
    %cst_50 = arith.constant 0.000000e+00 : f32
    %118 = vector.broadcast %cst_50 : f32 to vector<8x32xf32>
    %119 = vector.extract_strided_slice %31 {offsets = [8, 0], sizes = [8, 8], strides = [1, 1]} : vector<16x32xf32> to vector<8x8xf32>
    %120 = vector.extract_strided_slice %32 {offsets = [8, 0], sizes = [8, 8], strides = [1, 1]} : vector<16x32xf32> to vector<8x8xf32>
    %121 = vector.extract_strided_slice %34 {offsets = [8, 0], sizes = [8, 8], strides = [1, 1]} : vector<16x32xf32> to vector<8x8xf32>
    %cst_51 = arith.constant dense<0.000000e+00> : vector<8x8xf32>
    %122 = tpu.matmul %119, %120, %cst_51 {dimension_numbers = #tpu.dot_dimension_numbers<[1], [1], [0], [0], [0, 0, 1, 0], [], []>} : vector<8x8xf32>, vector<8x8xf32>, vector<8x8xf32> -> vector<8x8xf32>
    %cst_52 = arith.constant 0.353553385 : f32
    %123 = vector.broadcast %cst_52 : f32 to vector<8x8xf32>
    %124 = arith.mulf %122, %123 : vector<8x8xf32>
    %cst_53 = arith.constant dense<0xFF800000> : vector<8xf32>
    %125 = vector.multi_reduction <maximumf>, %124, %cst_53 [1] : vector<8x8xf32> to vector<8xf32>
    %126 = vector.shape_cast %125 : vector<8xf32> to vector<8x1xf32>
    %127 = vector.broadcast %126 : vector<8x1xf32> to vector<8x8xf32>
    %128 = arith.subf %124, %127 : vector<8x8xf32>
    %129 = math.exp %128 : vector<8x8xf32>
    %cst_54 = arith.constant dense<0.000000e+00> : vector<8xf32>
    %130 = vector.multi_reduction <add>, %129, %cst_54 [1] : vector<8x8xf32> to vector<8xf32>
    %131 = vector.shape_cast %130 : vector<8xf32> to vector<8x1xf32>
    %132 = tpu.reciprocal %131 {approx = true} : vector<8x1xf32> -> vector<8x1xf32>
    %133 = vector.broadcast %132 : vector<8x1xf32> to vector<8x8xf32>
    %134 = arith.mulf %129, %133 : vector<8x8xf32>
    %cst_55 = arith.constant dense<0.000000e+00> : vector<8x8xf32>
    %135 = tpu.matmul %134, %121, %cst_55 {dimension_numbers = #tpu.dot_dimension_numbers<[1], [0], [0], [1], [0, 0, 1, 1], [], []>} : vector<8x8xf32>, vector<8x8xf32>, vector<8x8xf32> -> vector<8x8xf32>
    %136 = vector.extract_strided_slice %35 {offsets = [0, 0], sizes = [8, 32], strides = [1, 1]} : vector<32x32xf32> to vector<8x32xf32>
    %cst_56 = arith.constant dense<0.000000e+00> : vector<8x32xf32>
    %137 = tpu.matmul %135, %136, %cst_56 {dimension_numbers = #tpu.dot_dimension_numbers<[1], [0], [0], [1], [0, 0, 1, 1], [], []>} : vector<8x8xf32>, vector<8x32xf32>, vector<8x32xf32> -> vector<8x32xf32>
    %138 = arith.addf %118, %137 : vector<8x32xf32>
    %139 = vector.extract_strided_slice %31 {offsets = [8, 8], sizes = [8, 8], strides = [1, 1]} : vector<16x32xf32> to vector<8x8xf32>
    %140 = vector.extract_strided_slice %32 {offsets = [8, 8], sizes = [8, 8], strides = [1, 1]} : vector<16x32xf32> to vector<8x8xf32>
    %141 = vector.extract_strided_slice %34 {offsets = [8, 8], sizes = [8, 8], strides = [1, 1]} : vector<16x32xf32> to vector<8x8xf32>
    %cst_57 = arith.constant dense<0.000000e+00> : vector<8x8xf32>
    %142 = tpu.matmul %139, %140, %cst_57 {dimension_numbers = #tpu.dot_dimension_numbers<[1], [1], [0], [0], [0, 0, 1, 0], [], []>} : vector<8x8xf32>, vector<8x8xf32>, vector<8x8xf32> -> vector<8x8xf32>
    %cst_58 = arith.constant 0.353553385 : f32
    %143 = vector.broadcast %cst_58 : f32 to vector<8x8xf32>
    %144 = arith.mulf %142, %143 : vector<8x8xf32>
    %cst_59 = arith.constant dense<0xFF800000> : vector<8xf32>
    %145 = vector.multi_reduction <maximumf>, %144, %cst_59 [1] : vector<8x8xf32> to vector<8xf32>
    %146 = vector.shape_cast %145 : vector<8xf32> to vector<8x1xf32>
    %147 = vector.broadcast %146 : vector<8x1xf32> to vector<8x8xf32>
    %148 = arith.subf %144, %147 : vector<8x8xf32>
    %149 = math.exp %148 : vector<8x8xf32>
    %cst_60 = arith.constant dense<0.000000e+00> : vector<8xf32>
    %150 = vector.multi_reduction <add>, %149, %cst_60 [1] : vector<8x8xf32> to vector<8xf32>
    %151 = vector.shape_cast %150 : vector<8xf32> to vector<8x1xf32>
    %152 = tpu.reciprocal %151 {approx = true} : vector<8x1xf32> -> vector<8x1xf32>
    %153 = vector.broadcast %152 : vector<8x1xf32> to vector<8x8xf32>
    %154 = arith.mulf %149, %153 : vector<8x8xf32>
    %cst_61 = arith.constant dense<0.000000e+00> : vector<8x8xf32>
    %155 = tpu.matmul %154, %141, %cst_61 {dimension_numbers = #tpu.dot_dimension_numbers<[1], [0], [0], [1], [0, 0, 1, 1], [], []>} : vector<8x8xf32>, vector<8x8xf32>, vector<8x8xf32> -> vector<8x8xf32>
    %156 = vector.extract_strided_slice %35 {offsets = [8, 0], sizes = [8, 32], strides = [1, 1]} : vector<32x32xf32> to vector<8x32xf32>
    %cst_62 = arith.constant dense<0.000000e+00> : vector<8x32xf32>
    %157 = tpu.matmul %155, %156, %cst_62 {dimension_numbers = #tpu.dot_dimension_numbers<[1], [0], [0], [1], [0, 0, 1, 1], [], []>} : vector<8x8xf32>, vector<8x32xf32>, vector<8x32xf32> -> vector<8x32xf32>
    %158 = arith.addf %138, %157 : vector<8x32xf32>
    %159 = vector.extract_strided_slice %31 {offsets = [8, 16], sizes = [8, 8], strides = [1, 1]} : vector<16x32xf32> to vector<8x8xf32>
    %160 = vector.extract_strided_slice %32 {offsets = [8, 16], sizes = [8, 8], strides = [1, 1]} : vector<16x32xf32> to vector<8x8xf32>
    %161 = vector.extract_strided_slice %34 {offsets = [8, 16], sizes = [8, 8], strides = [1, 1]} : vector<16x32xf32> to vector<8x8xf32>
    %cst_63 = arith.constant dense<0.000000e+00> : vector<8x8xf32>
    %162 = tpu.matmul %159, %160, %cst_63 {dimension_numbers = #tpu.dot_dimension_numbers<[1], [1], [0], [0], [0, 0, 1, 0], [], []>} : vector<8x8xf32>, vector<8x8xf32>, vector<8x8xf32> -> vector<8x8xf32>
    %cst_64 = arith.constant 0.353553385 : f32
    %163 = vector.broadcast %cst_64 : f32 to vector<8x8xf32>
    %164 = arith.mulf %162, %163 : vector<8x8xf32>
    %cst_65 = arith.constant dense<0xFF800000> : vector<8xf32>
    %165 = vector.multi_reduction <maximumf>, %164, %cst_65 [1] : vector<8x8xf32> to vector<8xf32>
    %166 = vector.shape_cast %165 : vector<8xf32> to vector<8x1xf32>
    %167 = vector.broadcast %166 : vector<8x1xf32> to vector<8x8xf32>
    %168 = arith.subf %164, %167 : vector<8x8xf32>
    %169 = math.exp %168 : vector<8x8xf32>
    %cst_66 = arith.constant dense<0.000000e+00> : vector<8xf32>
    %170 = vector.multi_reduction <add>, %169, %cst_66 [1] : vector<8x8xf32> to vector<8xf32>
    %171 = vector.shape_cast %170 : vector<8xf32> to vector<8x1xf32>
    %172 = tpu.reciprocal %171 {approx = true} : vector<8x1xf32> -> vector<8x1xf32>
    %173 = vector.broadcast %172 : vector<8x1xf32> to vector<8x8xf32>
    %174 = arith.mulf %169, %173 : vector<8x8xf32>
    %cst_67 = arith.constant dense<0.000000e+00> : vector<8x8xf32>
    %175 = tpu.matmul %174, %161, %cst_67 {dimension_numbers = #tpu.dot_dimension_numbers<[1], [0], [0], [1], [0, 0, 1, 1], [], []>} : vector<8x8xf32>, vector<8x8xf32>, vector<8x8xf32> -> vector<8x8xf32>
    %176 = vector.extract_strided_slice %35 {offsets = [16, 0], sizes = [8, 32], strides = [1, 1]} : vector<32x32xf32> to vector<8x32xf32>
    %cst_68 = arith.constant dense<0.000000e+00> : vector<8x32xf32>
    %177 = tpu.matmul %175, %176, %cst_68 {dimension_numbers = #tpu.dot_dimension_numbers<[1], [0], [0], [1], [0, 0, 1, 1], [], []>} : vector<8x8xf32>, vector<8x32xf32>, vector<8x32xf32> -> vector<8x32xf32>
    %178 = arith.addf %158, %177 : vector<8x32xf32>
    %179 = vector.extract_strided_slice %31 {offsets = [8, 24], sizes = [8, 8], strides = [1, 1]} : vector<16x32xf32> to vector<8x8xf32>
    %180 = vector.extract_strided_slice %32 {offsets = [8, 24], sizes = [8, 8], strides = [1, 1]} : vector<16x32xf32> to vector<8x8xf32>
    %181 = vector.extract_strided_slice %34 {offsets = [8, 24], sizes = [8, 8], strides = [1, 1]} : vector<16x32xf32> to vector<8x8xf32>
    %cst_69 = arith.constant dense<0.000000e+00> : vector<8x8xf32>
    %182 = tpu.matmul %179, %180, %cst_69 {dimension_numbers = #tpu.dot_dimension_numbers<[1], [1], [0], [0], [0, 0, 1, 0], [], []>} : vector<8x8xf32>, vector<8x8xf32>, vector<8x8xf32> -> vector<8x8xf32>
    %cst_70 = arith.constant 0.353553385 : f32
    %183 = vector.broadcast %cst_70 : f32 to vector<8x8xf32>
    %184 = arith.mulf %182, %183 : vector<8x8xf32>
    %cst_71 = arith.constant dense<0xFF800000> : vector<8xf32>
    %185 = vector.multi_reduction <maximumf>, %184, %cst_71 [1] : vector<8x8xf32> to vector<8xf32>
    %186 = vector.shape_cast %185 : vector<8xf32> to vector<8x1xf32>
    %187 = vector.broadcast %186 : vector<8x1xf32> to vector<8x8xf32>
    %188 = arith.subf %184, %187 : vector<8x8xf32>
    %189 = math.exp %188 : vector<8x8xf32>
    %cst_72 = arith.constant dense<0.000000e+00> : vector<8xf32>
    %190 = vector.multi_reduction <add>, %189, %cst_72 [1] : vector<8x8xf32> to vector<8xf32>
    %191 = vector.shape_cast %190 : vector<8xf32> to vector<8x1xf32>
    %192 = tpu.reciprocal %191 {approx = true} : vector<8x1xf32> -> vector<8x1xf32>
    %193 = vector.broadcast %192 : vector<8x1xf32> to vector<8x8xf32>
    %194 = arith.mulf %189, %193 : vector<8x8xf32>
    %cst_73 = arith.constant dense<0.000000e+00> : vector<8x8xf32>
    %195 = tpu.matmul %194, %181, %cst_73 {dimension_numbers = #tpu.dot_dimension_numbers<[1], [0], [0], [1], [0, 0, 1, 1], [], []>} : vector<8x8xf32>, vector<8x8xf32>, vector<8x8xf32> -> vector<8x8xf32>
    %196 = vector.extract_strided_slice %35 {offsets = [24, 0], sizes = [8, 32], strides = [1, 1]} : vector<32x32xf32> to vector<8x32xf32>
    %cst_74 = arith.constant dense<0.000000e+00> : vector<8x32xf32>
    %197 = tpu.matmul %195, %196, %cst_74 {dimension_numbers = #tpu.dot_dimension_numbers<[1], [0], [0], [1], [0, 0, 1, 1], [], []>} : vector<8x8xf32>, vector<8x32xf32>, vector<8x32xf32> -> vector<8x32xf32>
    %198 = arith.addf %178, %197 : vector<8x32xf32>
    %c8 = arith.constant 8 : index
    %c0_75 = arith.constant 0 : index
    %199 = vector.load %arg22[%c8, %c0_75] : memref<16x32xf32, #tpu.memory_space<vmem>>, vector<8x32xf32>
    tpu.vector_store %arg22[%c8, %c0_75], %198 {strides = array<i32>} : memref<16x32xf32, #tpu.memory_space<vmem>>, vector<8x32xf32>,
    %c0_76 = arith.constant 0 : index
    %c0_77 = arith.constant 0 : index
    %200 = vector.load %arg22[%c0_76, %c0_77] : memref<16x32xf32, #tpu.memory_space<vmem>>, vector<16x32xf32>
    %201 = arith.addf %0, %200 : vector<16x32xf32>
    %c0_78 = arith.constant 0 : index
    %c0_79 = arith.constant 0 : index
    %202 = vector.load %arg6[%c0_78, %c0_79] : memref<1x32xf32, #tpu.memory_space<vmem>>, vector<1x32xf32>
    %c0_80 = arith.constant 0 : index
    %c0_81 = arith.constant 0 : index
    %203 = vector.load %arg7[%c0_80, %c0_81] : memref<1x32xf32, #tpu.memory_space<vmem>>, vector<1x32xf32>
    %cst_82 = arith.constant dense<0.000000e+00> : vector<16xf32>
    %204 = vector.multi_reduction <add>, %201, %cst_82 [1] : vector<16x32xf32> to vector<16xf32>
    %205 = vector.shape_cast %204 : vector<16xf32> to vector<16x1xf32>
    %cst_83 = arith.constant 3.200000e+01 : f32
    %206 = vector.broadcast %cst_83 : f32 to vector<16x1xf32>
    %207 = arith.divf %205, %206 : vector<16x1xf32>
    %208 = vector.broadcast %207 : vector<16x1xf32> to vector<16x32xf32>
    %209 = arith.subf %201, %208 : vector<16x32xf32>
    %210 = arith.mulf %209, %209 : vector<16x32xf32>
    %cst_84 = arith.constant dense<0.000000e+00> : vector<16xf32>
    %211 = vector.multi_reduction <add>, %210, %cst_84 [1] : vector<16x32xf32> to vector<16xf32>
    %212 = vector.shape_cast %211 : vector<16xf32> to vector<16x1xf32>
    %cst_85 = arith.constant 3.200000e+01 : f32
    %213 = vector.broadcast %cst_85 : f32 to vector<16x1xf32>
    %214 = arith.divf %212, %213 : vector<16x1xf32>
    %215 = vector.broadcast %207 : vector<16x1xf32> to vector<16x32xf32>
    %216 = arith.subf %201, %215 : vector<16x32xf32>
    %cst_86 = arith.constant 9.99999974E-6 : f32
    %217 = vector.broadcast %cst_86 : f32 to vector<16x1xf32>
    %218 = arith.addf %214, %217 : vector<16x1xf32>
    %219 = math.rsqrt %218 : vector<16x1xf32>
    %220 = vector.broadcast %219 : vector<16x1xf32> to vector<16x32xf32>
    %221 = arith.mulf %216, %220 : vector<16x32xf32>
    %222 = vector.broadcast %202 : vector<1x32xf32> to vector<16x32xf32>
    %223 = arith.mulf %221, %222 : vector<16x32xf32>
    %224 = vector.broadcast %203 : vector<1x32xf32> to vector<16x32xf32>
    %225 = arith.addf %223, %224 : vector<16x32xf32>
    %226 = arith.addf %225, %2 : vector<16x32xf32>
    %c0_87 = arith.constant 0 : index
    %c0_88 = arith.constant 0 : index
    %227 = vector.load %arg13[%c0_87, %c0_88] : memref<32x32xf32, #tpu.memory_space<vmem>>, vector<32x32xf32>
    %cst_89 = arith.constant dense<0.000000e+00> : vector<16x32xf32>
    %228 = tpu.matmul %226, %227, %cst_89 {dimension_numbers = #tpu.dot_dimension_numbers<[1], [0], [0], [1], [0, 0, 1, 1], [], []>} : vector<16x32xf32>, vector<32x32xf32>, vector<16x32xf32> -> vector<16x32xf32>
    %229 = arith.addf %1, %3 : vector<32x32xf32>
    %c0_90 = arith.constant 0 : index
    %c0_91 = arith.constant 0 : index
    %230 = vector.load %arg14[%c0_90, %c0_91] : memref<32x32xf32, #tpu.memory_space<vmem>>, vector<32x32xf32>
    %cst_92 = arith.constant dense<0.000000e+00> : vector<32x32xf32>
    %231 = tpu.matmul %229, %230, %cst_92 {dimension_numbers = #tpu.dot_dimension_numbers<[1], [0], [0], [1], [0, 0, 1, 1], [], []>} : vector<32x32xf32>, vector<32x32xf32>, vector<32x32xf32> -> vector<32x32xf32>
    %c0_93 = arith.constant 0 : index
    %c0_94 = arith.constant 0 : index
    %232 = vector.load %arg15[%c0_93, %c0_94] : memref<32x32xf32, #tpu.memory_space<vmem>>, vector<32x32xf32>
    %cst_95 = arith.constant dense<0.000000e+00> : vector<32x32xf32>
    %233 = tpu.matmul %1, %232, %cst_95 {dimension_numbers = #tpu.dot_dimension_numbers<[1], [0], [0], [1], [0, 0, 1, 1], [], []>} : vector<32x32xf32>, vector<32x32xf32>, vector<32x32xf32> -> vector<32x32xf32>
    %c0_96 = arith.constant 0 : index
    %c0_97 = arith.constant 0 : index
    %234 = vector.load %arg16[%c0_96, %c0_97] : memref<32x32xf32, #tpu.memory_space<vmem>>, vector<32x32xf32>
    %cst_98 = arith.constant 0.000000e+00 : f32
    %235 = vector.broadcast %cst_98 : f32 to vector<8x32xf32>
    %236 = vector.extract_strided_slice %228 {offsets = [0, 0], sizes = [8, 8], strides = [1, 1]} : vector<16x32xf32> to vector<8x8xf32>
    %237 = vector.extract_strided_slice %231 {offsets = [0, 0], sizes = [16, 8], strides = [1, 1]} : vector<32x32xf32> to vector<16x8xf32>
    %238 = vector.extract_strided_slice %233 {offsets = [0, 0], sizes = [16, 8], strides = [1, 1]} : vector<32x32xf32> to vector<16x8xf32>
    %cst_99 = arith.constant dense<0.000000e+00> : vector<8x16xf32>
    %239 = tpu.matmul %236, %237, %cst_99 {dimension_numbers = #tpu.dot_dimension_numbers<[1], [1], [0], [0], [0, 0, 1, 0], [], []>} : vector<8x8xf32>, vector<16x8xf32>, vector<8x16xf32> -> vector<8x16xf32>
    %cst_100 = arith.constant 0.353553385 : f32
    %240 = vector.broadcast %cst_100 : f32 to vector<8x16xf32>
    %241 = arith.mulf %239, %240 : vector<8x16xf32>
    %cst_101 = arith.constant dense<0xFF800000> : vector<8xf32>
    %242 = vector.multi_reduction <maximumf>, %241, %cst_101 [1] : vector<8x16xf32> to vector<8xf32>
    %243 = vector.shape_cast %242 : vector<8xf32> to vector<8x1xf32>
    %244 = vector.broadcast %243 : vector<8x1xf32> to vector<8x16xf32>
    %245 = arith.subf %241, %244 : vector<8x16xf32>
    %246 = math.exp %245 : vector<8x16xf32>
    %cst_102 = arith.constant dense<0.000000e+00> : vector<8xf32>
    %247 = vector.multi_reduction <add>, %246, %cst_102 [1] : vector<8x16xf32> to vector<8xf32>
    %248 = vector.shape_cast %247 : vector<8xf32> to vector<8x1xf32>
    %249 = tpu.reciprocal %248 {approx = true} : vector<8x1xf32> -> vector<8x1xf32>
    %250 = vector.broadcast %249 : vector<8x1xf32> to vector<8x16xf32>
    %251 = arith.mulf %246, %250 : vector<8x16xf32>
    %cst_103 = arith.constant dense<0.000000e+00> : vector<8x8xf32>
    %252 = tpu.matmul %251, %238, %cst_103 {dimension_numbers = #tpu.dot_dimension_numbers<[1], [0], [0], [1], [0, 0, 1, 1], [], []>} : vector<8x16xf32>, vector<16x8xf32>, vector<8x8xf32> -> vector<8x8xf32>
    %253 = vector.extract_strided_slice %234 {offsets = [0, 0], sizes = [8, 32], strides = [1, 1]} : vector<32x32xf32> to vector<8x32xf32>
    %cst_104 = arith.constant dense<0.000000e+00> : vector<8x32xf32>
    %254 = tpu.matmul %252, %253, %cst_104 {dimension_numbers = #tpu.dot_dimension_numbers<[1], [0], [0], [1], [0, 0, 1, 1], [], []>} : vector<8x8xf32>, vector<8x32xf32>, vector<8x32xf32> -> vector<8x32xf32>
    %255 = arith.addf %235, %254 : vector<8x32xf32>
    %256 = vector.extract_strided_slice %228 {offsets = [0, 8], sizes = [8, 8], strides = [1, 1]} : vector<16x32xf32> to vector<8x8xf32>
    %257 = vector.extract_strided_slice %231 {offsets = [0, 8], sizes = [16, 8], strides = [1, 1]} : vector<32x32xf32> to vector<16x8xf32>
    %258 = vector.extract_strided_slice %233 {offsets = [0, 8], sizes = [16, 8], strides = [1, 1]} : vector<32x32xf32> to vector<16x8xf32>
    %cst_105 = arith.constant dense<0.000000e+00> : vector<8x16xf32>
    %259 = tpu.matmul %256, %257, %cst_105 {dimension_numbers = #tpu.dot_dimension_numbers<[1], [1], [0], [0], [0, 0, 1, 0], [], []>} : vector<8x8xf32>, vector<16x8xf32>, vector<8x16xf32> -> vector<8x16xf32>
    %cst_106 = arith.constant 0.353553385 : f32
    %260 = vector.broadcast %cst_106 : f32 to vector<8x16xf32>
    %261 = arith.mulf %259, %260 : vector<8x16xf32>
    %cst_107 = arith.constant dense<0xFF800000> : vector<8xf32>
    %262 = vector.multi_reduction <maximumf>, %261, %cst_107 [1] : vector<8x16xf32> to vector<8xf32>
    %263 = vector.shape_cast %262 : vector<8xf32> to vector<8x1xf32>
    %264 = vector.broadcast %263 : vector<8x1xf32> to vector<8x16xf32>
    %265 = arith.subf %261, %264 : vector<8x16xf32>
    %266 = math.exp %265 : vector<8x16xf32>
    %cst_108 = arith.constant dense<0.000000e+00> : vector<8xf32>
    %267 = vector.multi_reduction <add>, %266, %cst_108 [1] : vector<8x16xf32> to vector<8xf32>
    %268 = vector.shape_cast %267 : vector<8xf32> to vector<8x1xf32>
    %269 = tpu.reciprocal %268 {approx = true} : vector<8x1xf32> -> vector<8x1xf32>
    %270 = vector.broadcast %269 : vector<8x1xf32> to vector<8x16xf32>
    %271 = arith.mulf %266, %270 : vector<8x16xf32>
    %cst_109 = arith.constant dense<0.000000e+00> : vector<8x8xf32>
    %272 = tpu.matmul %271, %258, %cst_109 {dimension_numbers = #tpu.dot_dimension_numbers<[1], [0], [0], [1], [0, 0, 1, 1], [], []>} : vector<8x16xf32>, vector<16x8xf32>, vector<8x8xf32> -> vector<8x8xf32>
    %273 = vector.extract_strided_slice %234 {offsets = [8, 0], sizes = [8, 32], strides = [1, 1]} : vector<32x32xf32> to vector<8x32xf32>
    %cst_110 = arith.constant dense<0.000000e+00> : vector<8x32xf32>
    %274 = tpu.matmul %272, %273, %cst_110 {dimension_numbers = #tpu.dot_dimension_numbers<[1], [0], [0], [1], [0, 0, 1, 1], [], []>} : vector<8x8xf32>, vector<8x32xf32>, vector<8x32xf32> -> vector<8x32xf32>
    %275 = arith.addf %255, %274 : vector<8x32xf32>
    %276 = vector.extract_strided_slice %228 {offsets = [0, 16], sizes = [8, 8], strides = [1, 1]} : vector<16x32xf32> to vector<8x8xf32>
    %277 = vector.extract_strided_slice %231 {offsets = [0, 16], sizes = [16, 8], strides = [1, 1]} : vector<32x32xf32> to vector<16x8xf32>
    %278 = vector.extract_strided_slice %233 {offsets = [0, 16], sizes = [16, 8], strides = [1, 1]} : vector<32x32xf32> to vector<16x8xf32>
    %cst_111 = arith.constant dense<0.000000e+00> : vector<8x16xf32>
    %279 = tpu.matmul %276, %277, %cst_111 {dimension_numbers = #tpu.dot_dimension_numbers<[1], [1], [0], [0], [0, 0, 1, 0], [], []>} : vector<8x8xf32>, vector<16x8xf32>, vector<8x16xf32> -> vector<8x16xf32>
    %cst_112 = arith.constant 0.353553385 : f32
    %280 = vector.broadcast %cst_112 : f32 to vector<8x16xf32>
    %281 = arith.mulf %279, %280 : vector<8x16xf32>
    %cst_113 = arith.constant dense<0xFF800000> : vector<8xf32>
    %282 = vector.multi_reduction <maximumf>, %281, %cst_113 [1] : vector<8x16xf32> to vector<8xf32>
    %283 = vector.shape_cast %282 : vector<8xf32> to vector<8x1xf32>
    %284 = vector.broadcast %283 : vector<8x1xf32> to vector<8x16xf32>
    %285 = arith.subf %281, %284 : vector<8x16xf32>
    %286 = math.exp %285 : vector<8x16xf32>
    %cst_114 = arith.constant dense<0.000000e+00> : vector<8xf32>
    %287 = vector.multi_reduction <add>, %286, %cst_114 [1] : vector<8x16xf32> to vector<8xf32>
    %288 = vector.shape_cast %287 : vector<8xf32> to vector<8x1xf32>
    %289 = tpu.reciprocal %288 {approx = true} : vector<8x1xf32> -> vector<8x1xf32>
    %290 = vector.broadcast %289 : vector<8x1xf32> to vector<8x16xf32>
    %291 = arith.mulf %286, %290 : vector<8x16xf32>
    %cst_115 = arith.constant dense<0.000000e+00> : vector<8x8xf32>
    %292 = tpu.matmul %291, %278, %cst_115 {dimension_numbers = #tpu.dot_dimension_numbers<[1], [0], [0], [1], [0, 0, 1, 1], [], []>} : vector<8x16xf32>, vector<16x8xf32>, vector<8x8xf32> -> vector<8x8xf32>
    %293 = vector.extract_strided_slice %234 {offsets = [16, 0], sizes = [8, 32], strides = [1, 1]} : vector<32x32xf32> to vector<8x32xf32>
    %cst_116 = arith.constant dense<0.000000e+00> : vector<8x32xf32>
    %294 = tpu.matmul %292, %293, %cst_116 {dimension_numbers = #tpu.dot_dimension_numbers<[1], [0], [0], [1], [0, 0, 1, 1], [], []>} : vector<8x8xf32>, vector<8x32xf32>, vector<8x32xf32> -> vector<8x32xf32>
    %295 = arith.addf %275, %294 : vector<8x32xf32>
    %296 = vector.extract_strided_slice %228 {offsets = [0, 24], sizes = [8, 8], strides = [1, 1]} : vector<16x32xf32> to vector<8x8xf32>
    %297 = vector.extract_strided_slice %231 {offsets = [0, 24], sizes = [16, 8], strides = [1, 1]} : vector<32x32xf32> to vector<16x8xf32>
    %298 = vector.extract_strided_slice %233 {offsets = [0, 24], sizes = [16, 8], strides = [1, 1]} : vector<32x32xf32> to vector<16x8xf32>
    %cst_117 = arith.constant dense<0.000000e+00> : vector<8x16xf32>
    %299 = tpu.matmul %296, %297, %cst_117 {dimension_numbers = #tpu.dot_dimension_numbers<[1], [1], [0], [0], [0, 0, 1, 0], [], []>} : vector<8x8xf32>, vector<16x8xf32>, vector<8x16xf32> -> vector<8x16xf32>
    %cst_118 = arith.constant 0.353553385 : f32
    %300 = vector.broadcast %cst_118 : f32 to vector<8x16xf32>
    %301 = arith.mulf %299, %300 : vector<8x16xf32>
    %cst_119 = arith.constant dense<0xFF800000> : vector<8xf32>
    %302 = vector.multi_reduction <maximumf>, %301, %cst_119 [1] : vector<8x16xf32> to vector<8xf32>
    %303 = vector.shape_cast %302 : vector<8xf32> to vector<8x1xf32>
    %304 = vector.broadcast %303 : vector<8x1xf32> to vector<8x16xf32>
    %305 = arith.subf %301, %304 : vector<8x16xf32>
    %306 = math.exp %305 : vector<8x16xf32>
    %cst_120 = arith.constant dense<0.000000e+00> : vector<8xf32>
    %307 = vector.multi_reduction <add>, %306, %cst_120 [1] : vector<8x16xf32> to vector<8xf32>
    %308 = vector.shape_cast %307 : vector<8xf32> to vector<8x1xf32>
    %309 = tpu.reciprocal %308 {approx = true} : vector<8x1xf32> -> vector<8x1xf32>
    %310 = vector.broadcast %309 : vector<8x1xf32> to vector<8x16xf32>
    %311 = arith.mulf %306, %310 : vector<8x16xf32>
    %cst_121 = arith.constant dense<0.000000e+00> : vector<8x8xf32>
    %312 = tpu.matmul %311, %298, %cst_121 {dimension_numbers = #tpu.dot_dimension_numbers<[1], [0], [0], [1], [0, 0, 1, 1], [], []>} : vector<8x16xf32>, vector<16x8xf32>, vector<8x8xf32> -> vector<8x8xf32>
    %313 = vector.extract_strided_slice %234 {offsets = [24, 0], sizes = [8, 32], strides = [1, 1]} : vector<32x32xf32> to vector<8x32xf32>
    %cst_122 = arith.constant dense<0.000000e+00> : vector<8x32xf32>
    %314 = tpu.matmul %312, %313, %cst_122 {dimension_numbers = #tpu.dot_dimension_numbers<[1], [0], [0], [1], [0, 0, 1, 1], [], []>} : vector<8x8xf32>, vector<8x32xf32>, vector<8x32xf32> -> vector<8x32xf32>
    %315 = arith.addf %295, %314 : vector<8x32xf32>
    %c0_123 = arith.constant 0 : index
    %c0_124 = arith.constant 0 : index
    %316 = vector.load %arg22[%c0_123, %c0_124] : memref<16x32xf32, #tpu.memory_space<vmem>>, vector<8x32xf32>
    tpu.vector_store %arg22[%c0_123, %c0_124], %315 {strides = array<i32>} : memref<16x32xf32, #tpu.memory_space<vmem>>, vector<8x32xf32>,
    %cst_125 = arith.constant 0.000000e+00 : f32
    %317 = vector.broadcast %cst_125 : f32 to vector<8x32xf32>
    %318 = vector.extract_strided_slice %228 {offsets = [8, 0], sizes = [8, 8], strides = [1, 1]} : vector<16x32xf32> to vector<8x8xf32>
    %319 = vector.extract_strided_slice %231 {offsets = [16, 0], sizes = [16, 8], strides = [1, 1]} : vector<32x32xf32> to vector<16x8xf32>
    %320 = vector.extract_strided_slice %233 {offsets = [16, 0], sizes = [16, 8], strides = [1, 1]} : vector<32x32xf32> to vector<16x8xf32>
    %cst_126 = arith.constant dense<0.000000e+00> : vector<8x16xf32>
    %321 = tpu.matmul %318, %319, %cst_126 {dimension_numbers = #tpu.dot_dimension_numbers<[1], [1], [0], [0], [0, 0, 1, 0], [], []>} : vector<8x8xf32>, vector<16x8xf32>, vector<8x16xf32> -> vector<8x16xf32>
    %cst_127 = arith.constant 0.353553385 : f32
    %322 = vector.broadcast %cst_127 : f32 to vector<8x16xf32>
    %323 = arith.mulf %321, %322 : vector<8x16xf32>
    %cst_128 = arith.constant dense<0xFF800000> : vector<8xf32>
    %324 = vector.multi_reduction <maximumf>, %323, %cst_128 [1] : vector<8x16xf32> to vector<8xf32>
    %325 = vector.shape_cast %324 : vector<8xf32> to vector<8x1xf32>
    %326 = vector.broadcast %325 : vector<8x1xf32> to vector<8x16xf32>
    %327 = arith.subf %323, %326 : vector<8x16xf32>
    %328 = math.exp %327 : vector<8x16xf32>
    %cst_129 = arith.constant dense<0.000000e+00> : vector<8xf32>
    %329 = vector.multi_reduction <add>, %328, %cst_129 [1] : vector<8x16xf32> to vector<8xf32>
    %330 = vector.shape_cast %329 : vector<8xf32> to vector<8x1xf32>
    %331 = tpu.reciprocal %330 {approx = true} : vector<8x1xf32> -> vector<8x1xf32>
    %332 = vector.broadcast %331 : vector<8x1xf32> to vector<8x16xf32>
    %333 = arith.mulf %328, %332 : vector<8x16xf32>
    %cst_130 = arith.constant dense<0.000000e+00> : vector<8x8xf32>
    %334 = tpu.matmul %333, %320, %cst_130 {dimension_numbers = #tpu.dot_dimension_numbers<[1], [0], [0], [1], [0, 0, 1, 1], [], []>} : vector<8x16xf32>, vector<16x8xf32>, vector<8x8xf32> -> vector<8x8xf32>
    %335 = vector.extract_strided_slice %234 {offsets = [0, 0], sizes = [8, 32], strides = [1, 1]} : vector<32x32xf32> to vector<8x32xf32>
    %cst_131 = arith.constant dense<0.000000e+00> : vector<8x32xf32>
    %336 = tpu.matmul %334, %335, %cst_131 {dimension_numbers = #tpu.dot_dimension_numbers<[1], [0], [0], [1], [0, 0, 1, 1], [], []>} : vector<8x8xf32>, vector<8x32xf32>, vector<8x32xf32> -> vector<8x32xf32>
    %337 = arith.addf %317, %336 : vector<8x32xf32>
    %338 = vector.extract_strided_slice %228 {offsets = [8, 8], sizes = [8, 8], strides = [1, 1]} : vector<16x32xf32> to vector<8x8xf32>
    %339 = vector.extract_strided_slice %231 {offsets = [16, 8], sizes = [16, 8], strides = [1, 1]} : vector<32x32xf32> to vector<16x8xf32>
    %340 = vector.extract_strided_slice %233 {offsets = [16, 8], sizes = [16, 8], strides = [1, 1]} : vector<32x32xf32> to vector<16x8xf32>
    %cst_132 = arith.constant dense<0.000000e+00> : vector<8x16xf32>
    %341 = tpu.matmul %338, %339, %cst_132 {dimension_numbers = #tpu.dot_dimension_numbers<[1], [1], [0], [0], [0, 0, 1, 0], [], []>} : vector<8x8xf32>, vector<16x8xf32>, vector<8x16xf32> -> vector<8x16xf32>
    %cst_133 = arith.constant 0.353553385 : f32
    %342 = vector.broadcast %cst_133 : f32 to vector<8x16xf32>
    %343 = arith.mulf %341, %342 : vector<8x16xf32>
    %cst_134 = arith.constant dense<0xFF800000> : vector<8xf32>
    %344 = vector.multi_reduction <maximumf>, %343, %cst_134 [1] : vector<8x16xf32> to vector<8xf32>
    %345 = vector.shape_cast %344 : vector<8xf32> to vector<8x1xf32>
    %346 = vector.broadcast %345 : vector<8x1xf32> to vector<8x16xf32>
    %347 = arith.subf %343, %346 : vector<8x16xf32>
    %348 = math.exp %347 : vector<8x16xf32>
    %cst_135 = arith.constant dense<0.000000e+00> : vector<8xf32>
    %349 = vector.multi_reduction <add>, %348, %cst_135 [1] : vector<8x16xf32> to vector<8xf32>
    %350 = vector.shape_cast %349 : vector<8xf32> to vector<8x1xf32>
    %351 = tpu.reciprocal %350 {approx = true} : vector<8x1xf32> -> vector<8x1xf32>
    %352 = vector.broadcast %351 : vector<8x1xf32> to vector<8x16xf32>
    %353 = arith.mulf %348, %352 : vector<8x16xf32>
    %cst_136 = arith.constant dense<0.000000e+00> : vector<8x8xf32>
    %354 = tpu.matmul %353, %340, %cst_136 {dimension_numbers = #tpu.dot_dimension_numbers<[1], [0], [0], [1], [0, 0, 1, 1], [], []>} : vector<8x16xf32>, vector<16x8xf32>, vector<8x8xf32> -> vector<8x8xf32>
    %355 = vector.extract_strided_slice %234 {offsets = [8, 0], sizes = [8, 32], strides = [1, 1]} : vector<32x32xf32> to vector<8x32xf32>
    %cst_137 = arith.constant dense<0.000000e+00> : vector<8x32xf32>
    %356 = tpu.matmul %354, %355, %cst_137 {dimension_numbers = #tpu.dot_dimension_numbers<[1], [0], [0], [1], [0, 0, 1, 1], [], []>} : vector<8x8xf32>, vector<8x32xf32>, vector<8x32xf32> -> vector<8x32xf32>
    %357 = arith.addf %337, %356 : vector<8x32xf32>
    %358 = vector.extract_strided_slice %228 {offsets = [8, 16], sizes = [8, 8], strides = [1, 1]} : vector<16x32xf32> to vector<8x8xf32>
    %359 = vector.extract_strided_slice %231 {offsets = [16, 16], sizes = [16, 8], strides = [1, 1]} : vector<32x32xf32> to vector<16x8xf32>
    %360 = vector.extract_strided_slice %233 {offsets = [16, 16], sizes = [16, 8], strides = [1, 1]} : vector<32x32xf32> to vector<16x8xf32>
    %cst_138 = arith.constant dense<0.000000e+00> : vector<8x16xf32>
    %361 = tpu.matmul %358, %359, %cst_138 {dimension_numbers = #tpu.dot_dimension_numbers<[1], [1], [0], [0], [0, 0, 1, 0], [], []>} : vector<8x8xf32>, vector<16x8xf32>, vector<8x16xf32> -> vector<8x16xf32>
    %cst_139 = arith.constant 0.353553385 : f32
    %362 = vector.broadcast %cst_139 : f32 to vector<8x16xf32>
    %363 = arith.mulf %361, %362 : vector<8x16xf32>
    %cst_140 = arith.constant dense<0xFF800000> : vector<8xf32>
    %364 = vector.multi_reduction <maximumf>, %363, %cst_140 [1] : vector<8x16xf32> to vector<8xf32>
    %365 = vector.shape_cast %364 : vector<8xf32> to vector<8x1xf32>
    %366 = vector.broadcast %365 : vector<8x1xf32> to vector<8x16xf32>
    %367 = arith.subf %363, %366 : vector<8x16xf32>
    %368 = math.exp %367 : vector<8x16xf32>
    %cst_141 = arith.constant dense<0.000000e+00> : vector<8xf32>
    %369 = vector.multi_reduction <add>, %368, %cst_141 [1] : vector<8x16xf32> to vector<8xf32>
    %370 = vector.shape_cast %369 : vector<8xf32> to vector<8x1xf32>
    %371 = tpu.reciprocal %370 {approx = true} : vector<8x1xf32> -> vector<8x1xf32>
    %372 = vector.broadcast %371 : vector<8x1xf32> to vector<8x16xf32>
    %373 = arith.mulf %368, %372 : vector<8x16xf32>
    %cst_142 = arith.constant dense<0.000000e+00> : vector<8x8xf32>
    %374 = tpu.matmul %373, %360, %cst_142 {dimension_numbers = #tpu.dot_dimension_numbers<[1], [0], [0], [1], [0, 0, 1, 1], [], []>} : vector<8x16xf32>, vector<16x8xf32>, vector<8x8xf32> -> vector<8x8xf32>
    %375 = vector.extract_strided_slice %234 {offsets = [16, 0], sizes = [8, 32], strides = [1, 1]} : vector<32x32xf32> to vector<8x32xf32>
    %cst_143 = arith.constant dense<0.000000e+00> : vector<8x32xf32>
    %376 = tpu.matmul %374, %375, %cst_143 {dimension_numbers = #tpu.dot_dimension_numbers<[1], [0], [0], [1], [0, 0, 1, 1], [], []>} : vector<8x8xf32>, vector<8x32xf32>, vector<8x32xf32> -> vector<8x32xf32>
    %377 = arith.addf %357, %376 : vector<8x32xf32>
    %378 = vector.extract_strided_slice %228 {offsets = [8, 24], sizes = [8, 8], strides = [1, 1]} : vector<16x32xf32> to vector<8x8xf32>
    %379 = vector.extract_strided_slice %231 {offsets = [16, 24], sizes = [16, 8], strides = [1, 1]} : vector<32x32xf32> to vector<16x8xf32>
    %380 = vector.extract_strided_slice %233 {offsets = [16, 24], sizes = [16, 8], strides = [1, 1]} : vector<32x32xf32> to vector<16x8xf32>
    %cst_144 = arith.constant dense<0.000000e+00> : vector<8x16xf32>
    %381 = tpu.matmul %378, %379, %cst_144 {dimension_numbers = #tpu.dot_dimension_numbers<[1], [1], [0], [0], [0, 0, 1, 0], [], []>} : vector<8x8xf32>, vector<16x8xf32>, vector<8x16xf32> -> vector<8x16xf32>
    %cst_145 = arith.constant 0.353553385 : f32
    %382 = vector.broadcast %cst_145 : f32 to vector<8x16xf32>
    %383 = arith.mulf %381, %382 : vector<8x16xf32>
    %cst_146 = arith.constant dense<0xFF800000> : vector<8xf32>
    %384 = vector.multi_reduction <maximumf>, %383, %cst_146 [1] : vector<8x16xf32> to vector<8xf32>
    %385 = vector.shape_cast %384 : vector<8xf32> to vector<8x1xf32>
    %386 = vector.broadcast %385 : vector<8x1xf32> to vector<8x16xf32>
    %387 = arith.subf %383, %386 : vector<8x16xf32>
    %388 = math.exp %387 : vector<8x16xf32>
    %cst_147 = arith.constant dense<0.000000e+00> : vector<8xf32>
    %389 = vector.multi_reduction <add>, %388, %cst_147 [1] : vector<8x16xf32> to vector<8xf32>
    %390 = vector.shape_cast %389 : vector<8xf32> to vector<8x1xf32>
    %391 = tpu.reciprocal %390 {approx = true} : vector<8x1xf32> -> vector<8x1xf32>
    %392 = vector.broadcast %391 : vector<8x1xf32> to vector<8x16xf32>
    %393 = arith.mulf %388, %392 : vector<8x16xf32>
    %cst_148 = arith.constant dense<0.000000e+00> : vector<8x8xf32>
    %394 = tpu.matmul %393, %380, %cst_148 {dimension_numbers = #tpu.dot_dimension_numbers<[1], [0], [0], [1], [0, 0, 1, 1], [], []>} : vector<8x16xf32>, vector<16x8xf32>, vector<8x8xf32> -> vector<8x8xf32>
    %395 = vector.extract_strided_slice %234 {offsets = [24, 0], sizes = [8, 32], strides = [1, 1]} : vector<32x32xf32> to vector<8x32xf32>
    %cst_149 = arith.constant dense<0.000000e+00> : vector<8x32xf32>
    %396 = tpu.matmul %394, %395, %cst_149 {dimension_numbers = #tpu.dot_dimension_numbers<[1], [0], [0], [1], [0, 0, 1, 1], [], []>} : vector<8x8xf32>, vector<8x32xf32>, vector<8x32xf32> -> vector<8x32xf32>
    %397 = arith.addf %377, %396 : vector<8x32xf32>
    %c8_150 = arith.constant 8 : index
    %c0_151 = arith.constant 0 : index
    %398 = vector.load %arg22[%c8_150, %c0_151] : memref<16x32xf32, #tpu.memory_space<vmem>>, vector<8x32xf32>
    tpu.vector_store %arg22[%c8_150, %c0_151], %397 {strides = array<i32>} : memref<16x32xf32, #tpu.memory_space<vmem>>, vector<8x32xf32>,
    %c0_152 = arith.constant 0 : index
    %c0_153 = arith.constant 0 : index
    %399 = vector.load %arg22[%c0_152, %c0_153] : memref<16x32xf32, #tpu.memory_space<vmem>>, vector<16x32xf32>
    %400 = arith.addf %201, %399 : vector<16x32xf32>
    %c0_154 = arith.constant 0 : index
    %c0_155 = arith.constant 0 : index
    %401 = vector.load %arg8[%c0_154, %c0_155] : memref<1x32xf32, #tpu.memory_space<vmem>>, vector<1x32xf32>
    %c0_156 = arith.constant 0 : index
    %c0_157 = arith.constant 0 : index
    %402 = vector.load %arg9[%c0_156, %c0_157] : memref<1x32xf32, #tpu.memory_space<vmem>>, vector<1x32xf32>
    %cst_158 = arith.constant dense<0.000000e+00> : vector<16xf32>
    %403 = vector.multi_reduction <add>, %400, %cst_158 [1] : vector<16x32xf32> to vector<16xf32>
    %404 = vector.shape_cast %403 : vector<16xf32> to vector<16x1xf32>
    %cst_159 = arith.constant 3.200000e+01 : f32
    %405 = vector.broadcast %cst_159 : f32 to vector<16x1xf32>
    %406 = arith.divf %404, %405 : vector<16x1xf32>
    %407 = vector.broadcast %406 : vector<16x1xf32> to vector<16x32xf32>
    %408 = arith.subf %400, %407 : vector<16x32xf32>
    %409 = arith.mulf %408, %408 : vector<16x32xf32>
    %cst_160 = arith.constant dense<0.000000e+00> : vector<16xf32>
    %410 = vector.multi_reduction <add>, %409, %cst_160 [1] : vector<16x32xf32> to vector<16xf32>
    %411 = vector.shape_cast %410 : vector<16xf32> to vector<16x1xf32>
    %cst_161 = arith.constant 3.200000e+01 : f32
    %412 = vector.broadcast %cst_161 : f32 to vector<16x1xf32>
    %413 = arith.divf %411, %412 : vector<16x1xf32>
    %414 = vector.broadcast %406 : vector<16x1xf32> to vector<16x32xf32>
    %415 = arith.subf %400, %414 : vector<16x32xf32>
    %cst_162 = arith.constant 9.99999974E-6 : f32
    %416 = vector.broadcast %cst_162 : f32 to vector<16x1xf32>
    %417 = arith.addf %413, %416 : vector<16x1xf32>
    %418 = math.rsqrt %417 : vector<16x1xf32>
    %419 = vector.broadcast %418 : vector<16x1xf32> to vector<16x32xf32>
    %420 = arith.mulf %415, %419 : vector<16x32xf32>
    %421 = vector.broadcast %401 : vector<1x32xf32> to vector<16x32xf32>
    %422 = arith.mulf %420, %421 : vector<16x32xf32>
    %423 = vector.broadcast %402 : vector<1x32xf32> to vector<16x32xf32>
    %424 = arith.addf %422, %423 : vector<16x32xf32>
    %c0_163 = arith.constant 0 : index
    %c0_164 = arith.constant 0 : index
    %425 = vector.load %arg17[%c0_163, %c0_164] : memref<32x64xf32, #tpu.memory_space<vmem>>, vector<32x64xf32>
    %cst_165 = arith.constant dense<0.000000e+00> : vector<16x64xf32>
    %426 = tpu.matmul %424, %425, %cst_165 {dimension_numbers = #tpu.dot_dimension_numbers<[1], [0], [0], [1], [0, 0, 1, 1], [], []>} : vector<16x32xf32>, vector<32x64xf32>, vector<16x64xf32> -> vector<16x64xf32>
    %c0_166 = arith.constant 0 : index
    %c0_167 = arith.constant 0 : index
    %427 = vector.load %arg18[%c0_166, %c0_167] : memref<1x64xf32, #tpu.memory_space<vmem>>, vector<1x64xf32>
    %428 = vector.broadcast %427 : vector<1x64xf32> to vector<16x64xf32>
    %429 = arith.addf %426, %428 : vector<16x64xf32>
    %cst_168 = arith.constant 0.000000e+00 : f32
    %430 = vector.broadcast %cst_168 : f32 to vector<16x64xf32>
    %431 = arith.maximumf %429, %430 : vector<16x64xf32>
    %c0_169 = arith.constant 0 : index
    %c0_170 = arith.constant 0 : index
    %432 = vector.load %arg19[%c0_169, %c0_170] : memref<64x32xf32, #tpu.memory_space<vmem>>, vector<64x32xf32>
    %cst_171 = arith.constant dense<0.000000e+00> : vector<16x32xf32>
    %433 = tpu.matmul %431, %432, %cst_171 {dimension_numbers = #tpu.dot_dimension_numbers<[1], [0], [0], [1], [0, 0, 1, 1], [], []>} : vector<16x64xf32>, vector<64x32xf32>, vector<16x32xf32> -> vector<16x32xf32>
    %c0_172 = arith.constant 0 : index
    %c0_173 = arith.constant 0 : index
    %434 = vector.load %arg20[%c0_172, %c0_173] : memref<1x32xf32, #tpu.memory_space<vmem>>, vector<1x32xf32>
    %435 = vector.broadcast %434 : vector<1x32xf32> to vector<16x32xf32>
    %436 = arith.addf %433, %435 : vector<16x32xf32>
    %437 = arith.addf %400, %436 : vector<16x32xf32>
    %c0_174 = arith.constant 0 : index
    %c0_175 = arith.constant 0 : index
    %438 = vector.load %arg21[%c0_174, %c0_175] : memref<16x32xf32, #tpu.memory_space<vmem>>, vector<16x32xf32>
    tpu.vector_store %arg21[%c0_174, %c0_175], %437 {strides = array<i32>} : memref<16x32xf32, #tpu.memory_space<vmem>>, vector<16x32xf32>,
    return
  }
}

</mosaic_0001>

<llo_original>
// kernel: _decoder_layer_jit.1
$region0: #{_decoder_layer_jit.1}
  #allocation0 [shape = 'u32[]', space=smem, size = 0x4, offset = 0x4, fixed_abs, tag = 'smem constant byte address 0x4 - core index']
  #allocation1 [shape = 'u32[144,128]{1,0:T(1,128)}', space=vmem, size = 0x12000, scoped, tag = 'internal scratch']
  #allocation2 [shape = 'f32[16,32]{1,0:T(8,128)}', space=vmem, size = 0x2000, scoped, tag = 'scratch operand']
  %s0 = inlined_call_operand.vmem [shape: f32[16,32], index: 0, kind: input, shape index: {}]
  %s1 = inlined_call_operand.vmem [shape: f32[32,32], index: 1, kind: input, shape index: {}]
  %s2 = inlined_call_operand.vmem [shape: f32[16,32], index: 2, kind: input, shape index: {}]
  %s3 = inlined_call_operand.vmem [shape: f32[32,32], index: 3, kind: input, shape index: {}]
  %s4 = inlined_call_operand.vmem [shape: f32[1,32], index: 4, kind: input, shape index: {}]
  %s5 = inlined_call_operand.vmem [shape: f32[1,32], index: 5, kind: input, shape index: {}]
  %s6 = inlined_call_operand.vmem [shape: f32[1,32], index: 6, kind: input, shape index: {}]
  %s7 = inlined_call_operand.hbm [shape: f32[1,32], index: 7, kind: input, shape index: {}]
  %s8 = inlined_call_operand.hbm [shape: f32[1,32], index: 8, kind: input, shape index: {}]
  %s9 = inlined_call_operand.hbm [shape: f32[1,32], index: 9, kind: input, shape index: {}]
  %s10 = inlined_call_operand.vmem [shape: f32[32,64], index: 10, kind: input, shape index: {}]
  %s11 = inlined_call_operand.vmem [shape: f32[32,32], index: 11, kind: input, shape index: {}]
  %s12 = inlined_call_operand.vmem [shape: f32[32,32], index: 12, kind: input, shape index: {}]
  %s13 = inlined_call_operand.vmem [shape: f32[32,32], index: 13, kind: input, shape index: {}]
  %s14 = inlined_call_operand.vmem [shape: f32[32,32], index: 14, kind: input, shape index: {}]
  %s15 = inlined_call_operand.vmem [shape: f32[32,32], index: 15, kind: input, shape index: {}]
  %s16 = inlined_call_operand.vmem [shape: f32[32,32], index: 16, kind: input, shape index: {}]
  %s17 = inlined_call_operand.vmem [shape: f32[32,64], index: 17, kind: input, shape index: {}]
  %s18 = inlined_call_operand.hbm [shape: f32[1,64], index: 18, kind: input, shape index: {}]
  %s19 = inlined_call_operand.vmem [shape: f32[64,32], index: 19, kind: input, shape index: {}]
  %s20 = inlined_call_operand.hbm [shape: f32[1,32], index: 20, kind: input, shape index: {}]
  %s21 = inlined_call_operand.vmem [shape: f32[16,32], index: 21, kind: output, shape index: {}]
  %s22 = sld [smem:[#allocation0]]
  $region114: #{_decoder_layer_jit.1} parent=0
    _
  %s24 = ssub.s32 1, %s22
  %s25 = scalar_select 0, %s24, %s22
  $region1: #{_decoder_layer_jit.1} parent=0
    #allocation3 [shape = 'u8[512]{0}', space=vmem, size = 0x400, scoped, tag = 'input window, operand 7, single buffered']
    #allocation4 [shape = 's32[1]{0}', space=sflag, size = 0x4, scoped, tag = 'scoped memory for _decoder_layer_jit.1']
    #allocation5 [shape = 'u8[512]{0}', space=vmem, size = 0x400, scoped, tag = 'input window, operand 8, single buffered']
    #allocation6 [shape = 's32[1]{0}', space=sflag, size = 0x4, scoped, tag = 'scoped memory for _decoder_layer_jit.1']
    #allocation7 [shape = 'u8[512]{0}', space=vmem, size = 0x400, scoped, tag = 'input window, operand 9, single buffered']
    #allocation8 [shape = 'u8[512]{0}', space=vmem, size = 0x400, scoped, tag = 'input window, operand 18, single buffered']
    #allocation9 [shape = 's32[1]{0}', space=sflag, size = 0x4, scoped, tag = 'scoped memory for _decoder_layer_jit.1']
    #allocation10 [shape = 'u8[512]{0}', space=vmem, size = 0x400, scoped, tag = 'input window, operand 20, single buffered']
    %26 = vsyncpa [#allocation4], 0
    %27 = vsyncpa [#allocation6], 0
    %28 = vsyncpa [#allocation9], 0
    // Predicated region
    $region2: #{_decoder_layer_jit.1} parent=1 // pred_check
      _
    $region3: #{_decoder_layer_jit.1} parent=1 // pred_check_branch
      %30 = sbr.rel (0) target = $region5
    $region4: #{_decoder_layer_jit.1} parent=1 // pred_region
      _
    $region5: #{_decoder_layer_jit.1} parent=1 // pred_fallthru
      _
    // Predicated region
    $region6: #{_decoder_layer_jit.1} parent=1 // pred_check
      _
    $region7: #{_decoder_layer_jit.1} parent=1 // pred_check_branch
      %32 = sbr.rel (0) target = $region9
    $region8: #{_decoder_layer_jit.1} parent=1 // pred_region
      _
    $region9: #{_decoder_layer_jit.1} parent=1 // pred_fallthru
      _
    // Predicated region
    $region10: #{_decoder_layer_jit.1} parent=1 // pred_check
      _
    $region11: #{_decoder_layer_jit.1} parent=1 // pred_check_branch
      %34 = sbr.rel (0) target = $region13
    $region12: #{_decoder_layer_jit.1} parent=1 // pred_region
      _
    $region13: #{_decoder_layer_jit.1} parent=1 // pred_fallthru
      _
    // Predicated region
    $region14: #{_decoder_layer_jit.1} parent=1 // pred_check
      _
    $region15: #{_decoder_layer_jit.1} parent=1 // pred_check_branch
      %36 = sbr.rel (0) target = $region17
    $region16: #{_decoder_layer_jit.1} parent=1 // pred_region
      _
    $region17: #{_decoder_layer_jit.1} parent=1 // pred_fallthru
      _
    // Predicated region
    $region18: #{_decoder_layer_jit.1} parent=1 // pred_check
      _
    $region19: #{_decoder_layer_jit.1} parent=1 // pred_check_branch
      %38 = sbr.rel (0) target = $region21
    $region20: #{_decoder_layer_jit.1} parent=1 // pred_region
      _
    $region21: #{_decoder_layer_jit.1} parent=1 // pred_fallthru
      _
    // Predicated region
    $region22: #{_decoder_layer_jit.1} parent=1 // pred_check
      _
    $region23: #{_decoder_layer_jit.1} parent=1 // pred_check_branch
      %40 = sbr.rel (0) target = $region25
    $region24: #{_decoder_layer_jit.1} parent=1 // pred_region
      _
    $region25: #{_decoder_layer_jit.1} parent=1 // pred_fallthru
      _
    // Predicated region
    $region26: #{_decoder_layer_jit.1} parent=1 // pred_check
      _
    $region27: #{_decoder_layer_jit.1} parent=1 // pred_check_branch
      %42 = sbr.rel (0) target = $region29
    $region28: #{_decoder_layer_jit.1} parent=1 // pred_region
      _
    $region29: #{_decoder_layer_jit.1} parent=1 // pred_fallthru
      _
    // Predicated region
    $region30: #{_decoder_layer_jit.1} parent=1 // pred_check
      _
    $region31: #{_decoder_layer_jit.1} parent=1 // pred_check_branch
      %44 = sbr.rel (0) target = $region33
    $region32: #{_decoder_layer_jit.1} parent=1 // pred_region
      %s46 = ssub.s32 16, 16
      %47 = vsyncadd [#allocation4], %s46
      %s49 = sshll.u32 [#allocation3], 4
      %s50 = int_to_ptr.vmem [resolvable:$true] %s49
      %52 = dma.hbm_to_vmem [thread:$0]  %s7, 16, %s50, [#allocation4]
    $region33: #{_decoder_layer_jit.1} parent=1 // pred_fallthru
      _
    // Predicated region
    $region34: #{_decoder_layer_jit.1} parent=1 // pred_check
      _
    $region35: #{_decoder_layer_jit.1} parent=1 // pred_check_branch
      %54 = sbr.rel (0) target = $region37
    $region36: #{_decoder_layer_jit.1} parent=1 // pred_region
      %s56 = ssub.s32 16, 16
      %57 = vsyncadd [#allocation6], %s56
      %s59 = sshll.u32 [#allocation5], 4
      %s60 = int_to_ptr.vmem [resolvable:$true] %s59
      %62 = dma.hbm_to_vmem [thread:$0]  %s8, 16, %s60, [#allocation6]
    $region37: #{_decoder_layer_jit.1} parent=1 // pred_fallthru
      _
    // Predicated region
    $region38: #{_decoder_layer_jit.1} parent=1 // pred_check
      _
    $region39: #{_decoder_layer_jit.1} parent=1 // pred_check_branch
      %64 = sbr.rel (0) target = $region41
    $region40: #{_decoder_layer_jit.1} parent=1 // pred_region
      %s66 = ssub.s32 16, 16
      %67 = vsyncadd [#allocation6], %s66
      %s69 = sshll.u32 [#allocation7], 4
      %s70 = int_to_ptr.vmem [resolvable:$true] %s69
      %72 = dma.hbm_to_vmem [thread:$0]  %s9, 16, %s70, [#allocation6]
    $region41: #{_decoder_layer_jit.1} parent=1 // pred_fallthru
      _
    // Predicated region
    $region42: #{_decoder_layer_jit.1} parent=1 // pred_check
      _
    $region43: #{_decoder_layer_jit.1} parent=1 // pred_check_branch
      %74 = sbr.rel (0) target = $region45
    $region44: #{_decoder_layer_jit.1} parent=1 // pred_region
      _
    $region45: #{_decoder_layer_jit.1} parent=1 // pred_fallthru
      _
    // Predicated region
    $region46: #{_decoder_layer_jit.1} parent=1 // pred_check
      _
    $region47: #{_decoder_layer_jit.1} parent=1 // pred_check_branch
      %76 = sbr.rel (0) target = $region49
    $region48: #{_decoder_layer_jit.1} parent=1 // pred_region
      _
    $region49: #{_decoder_layer_jit.1} parent=1 // pred_fallthru
      _
    // Predicated region
    $region50: #{_decoder_layer_jit.1} parent=1 // pred_check
      _
    $region51: #{_decoder_layer_jit.1} parent=1 // pred_check_branch
      %78 = sbr.rel (0) target = $region53
    $region52: #{_decoder_layer_jit.1} parent=1 // pred_region
      _
    $region53: #{_decoder_layer_jit.1} parent=1 // pred_fallthru
      _
    // Predicated region
    $region54: #{_decoder_layer_jit.1} parent=1 // pred_check
      _
    $region55: #{_decoder_layer_jit.1} parent=1 // pred_check_branch
      %80 = sbr.rel (0) target = $region57
    $region56: #{_decoder_layer_jit.1} parent=1 // pred_region
      _
    $region57: #{_decoder_layer_jit.1} parent=1 // pred_fallthru
      _
    // Predicated region
    $region58: #{_decoder_layer_jit.1} parent=1 // pred_check
      _
    $region59: #{_decoder_layer_jit.1} parent=1 // pred_check_branch
      %82 = sbr.rel (0) target = $region61
    $region60: #{_decoder_layer_jit.1} parent=1 // pred_region
      _
    $region61: #{_decoder_layer_jit.1} parent=1 // pred_fallthru
      _
    // Predicated region
    $region62: #{_decoder_layer_jit.1} parent=1 // pred_check
      _
    $region63: #{_decoder_layer_jit.1} parent=1 // pred_check_branch
      %84 = sbr.rel (0) target = $region65
    $region64: #{_decoder_layer_jit.1} parent=1 // pred_region
      _
    $region65: #{_decoder_layer_jit.1} parent=1 // pred_fallthru
      _
    // Predicated region
    $region66: #{_decoder_layer_jit.1} parent=1 // pred_check
      _
    $region67: #{_decoder_layer_jit.1} parent=1 // pred_check_branch
      %86 = sbr.rel (0) target = $region69
    $region68: #{_decoder_layer_jit.1} parent=1 // pred_region
      _
    $region69: #{_decoder_layer_jit.1} parent=1 // pred_fallthru
      _
    // Predicated region
    $region70: #{_decoder_layer_jit.1} parent=1 // pred_check
      _
    $region71: #{_decoder_layer_jit.1} parent=1 // pred_check_branch
      %88 = sbr.rel (0) target = $region73
    $region72: #{_decoder_layer_jit.1} parent=1 // pred_region
      _
    $region73: #{_decoder_layer_jit.1} parent=1 // pred_fallthru
      _
    // Predicated region
    $region74: #{_decoder_layer_jit.1} parent=1 // pred_check
      _
    $region75: #{_decoder_layer_jit.1} parent=1 // pred_check_branch
      %90 = sbr.rel (0) target = $region77
    $region76: #{_decoder_layer_jit.1} parent=1 // pred_region
      %s92 = ssub.s32 16, 16
      %93 = vsyncadd [#allocation9], %s92
      %s95 = sshll.u32 [#allocation8], 4
      %s96 = int_to_ptr.vmem [resolvable:$true] %s95
      %98 = dma.hbm_to_vmem [thread:$0]  %s18, 16, %s96, [#allocation9]
    $region77: #{_decoder_layer_jit.1} parent=1 // pred_fallthru
      _
    // Predicated region
    $region78: #{_decoder_layer_jit.1} parent=1 // pred_check
      _
    $region79: #{_decoder_layer_jit.1} parent=1 // pred_check_branch
      %100 = sbr.rel (0) target = $region81
    $region80: #{_decoder_layer_jit.1} parent=1 // pred_region
      _
    $region81: #{_decoder_layer_jit.1} parent=1 // pred_fallthru
      _
    // Predicated region
    $region82: #{_decoder_layer_jit.1} parent=1 // pred_check
      _
    $region83: #{_decoder_layer_jit.1} parent=1 // pred_check_branch
      %102 = sbr.rel (0) target = $region85
    $region84: #{_decoder_layer_jit.1} parent=1 // pred_region
      %s104 = ssub.s32 16, 16
      %105 = vsyncadd [#allocation9], %s104
      %s107 = sshll.u32 [#allocation10], 4
      %s108 = int_to_ptr.vmem [resolvable:$true] %s107
      %110 = dma.hbm_to_vmem [thread:$0]  %s20, 16, %s108, [#allocation9]
    $region85: #{_decoder_layer_jit.1} parent=1 // pred_fallthru
      _
    // Predicated region
    $region86: #{_decoder_layer_jit.1} parent=1 // pred_check
      _
    $region87: #{_decoder_layer_jit.1} parent=1 // pred_check_branch
      %112 = sbr.rel (0) target = $region89
    $region88: #{_decoder_layer_jit.1} parent=1 // pred_region
      %113 = dma.done [#allocation4], 16
    $region89: #{_decoder_layer_jit.1} parent=1 // pred_fallthru
      _
    // Predicated region
    $region90: #{_decoder_layer_jit.1} parent=1 // pred_check
      _
    $region91: #{_decoder_layer_jit.1} parent=1 // pred_check_branch
      %115 = sbr.rel (0) target = $region93
    $region92: #{_decoder_layer_jit.1} parent=1 // pred_region
      %116 = dma.done [#allocation6], 16
    $region93: #{_decoder_layer_jit.1} parent=1 // pred_fallthru
      _
    // Predicated region
    $region94: #{_decoder_layer_jit.1} parent=1 // pred_check
      _
    $region95: #{_decoder_layer_jit.1} parent=1 // pred_check_branch
      %118 = sbr.rel (0) target = $region97
    $region96: #{_decoder_layer_jit.1} parent=1 // pred_region
      %119 = dma.done [#allocation6], 16
    $region97: #{_decoder_layer_jit.1} parent=1 // pred_fallthru
      _
    // Predicated region
    $region98: #{_decoder_layer_jit.1} parent=1 // pred_check
      _
    $region99: #{_decoder_layer_jit.1} parent=1 // pred_check_branch
      %121 = sbr.rel (0) target = $region101
    $region100: #{_decoder_layer_jit.1} parent=1 // pred_region
      %122 = dma.done [#allocation9], 16
    $region101: #{_decoder_layer_jit.1} parent=1 // pred_fallthru
      _
    // Predicated region
    $region102: #{_decoder_layer_jit.1} parent=1 // pred_check
      _
    $region103: #{_decoder_layer_jit.1} parent=1 // pred_check_branch
      %124 = sbr.rel (0) target = $region105
    $region104: #{_decoder_layer_jit.1} parent=1 // pred_region
      %125 = dma.done [#allocation9], 16
    $region105: #{_decoder_layer_jit.1} parent=1 // pred_fallthru
      _
    %v126 = vld [vmem:[%s0] sm:$0xff]
    %v127 = vld [vmem:[%s0 + $0x8] sm:$0xff]
    %v128 = vld [vmem:[%s1] sm:$0xff]
    %v129 = vld [vmem:[%s1 + $0x8] sm:$0xff]
    %v130 = vld [vmem:[%s1 + $0x10] sm:$0xff]
    %v131 = vld [vmem:[%s1 + $0x18] sm:$0xff]
    %v132 = vld [vmem:[%s2] sm:$0xff]
    %v133 = vld [vmem:[%s2 + $0x8] sm:$0xff]
    %v134 = vld [vmem:[%s3] sm:$0xff]
    %v135 = vld [vmem:[%s3 + $0x8] sm:$0xff]
    %v136 = vld [vmem:[%s3 + $0x10] sm:$0xff]
    %v137 = vld [vmem:[%s3 + $0x18] sm:$0xff]
    %v138 = vld [vmem:[%s4] sm:$0x1]
    %v139 = vld [vmem:[%s5] sm:$0x1]
    %vm140 = vcmask 261120
    %v141 = vsel %vm140, %v126, 0.0
    %142 = vadd.xlane.f32.xlu0 %v141
    %v143 = vpop.xlane.xlu0 %142
    %v144 = vsel %vm140, %v127, 0.0
    %145 = vadd.xlane.f32.xlu0 %v144
    %v146 = vpop.xlane.xlu0 %145
    %v147 = vrcp.pop 32.0
    %v148 = vmul.f32 %v143, %v147
    %v149 = vmul.f32 %v146, %v147
    %v150 = vsub.f32 %v126, %v148
    %v151 = vsub.f32 %v127, %v149
    %v152 = vmul.f32 %v150, %v150
    %v153 = vmul.f32 %v151, %v151
    %v154 = vsel %vm140, %v152, 0.0
    %155 = vadd.xlane.f32.xlu0 %v154
    %v156 = vpop.xlane.xlu0 %155
    %v157 = vsel %vm140, %v153, 0.0
    %158 = vadd.xlane.f32.xlu0 %v157
    %v159 = vpop.xlane.xlu0 %158
    %v160 = vmul.f32 %v156, %v147
    %v161 = vmul.f32 %v159, %v147
    %v162 = vadd.f32 %v160, 1e-05
    %v163 = vadd.f32 %v161, 1e-05
    %v164 = vrsqrt.pop %v162
    %v165 = vrsqrt.pop %v163
    %v166 = vmul.f32 %v150, %v164
    %v167 = vmul.f32 %v151, %v165
    %v169 = vlaneseq
    %v170 = vshrl.u32 %v169, 7
    %v171 = vsub.s32 0, %v170
    %v172 = vrot.slane %v138, %v171
    %v174 = vmul.f32 %v166, %v172
    %v175 = vmul.f32 %v167, %v172
    %v177 = vlaneseq
    %v178 = vshrl.u32 %v177, 7
    %v179 = vsub.s32 0, %v178
    %v180 = vrot.slane %v139, %v179
    %v182 = vadd.f32 %v174, %v180
    %v183 = vadd.f32 %v175, %v180
    %v184 = vadd.f32 %v182, %v132
    %v185 = vadd.f32 %v183, %v133
    %v186 = vld [vmem:[%s10] sm:$0xff]
    %v187 = vld [vmem:[%s10 + $0x8] sm:$0xff]
    %v188 = vld [vmem:[%s10 + $0x10] sm:$0xff]
    %v189 = vld [vmem:[%s10 + $0x18] sm:$0xff]
    %v191 = vsel %vm140, %v184, 0
    %v194 = vsel %vm140, %v185, 0
    %196 = vmatprep.subr.mxu0 0.0
    %197 = vmatpush1.msra.mxu0 %v186
    %198 = vmatprep.subr.mxu0 0.0
    %199 = vmatpush1.msra.mxu0 %v187
    %200 = vmatprep.subr.mxu0 0.0
    %201 = vmatpush1.msra.mxu0 %v188
    %202 = vmatprep.subr.mxu0 0.0
    %203 = vmatpush1.msra.mxu0 %v189
    %204 = vmatprep.subr.mxu0 0.0
    %205 = vmatpush1.msra.mxu0 0.0
    %206 = vmatprep.subr.mxu0 0.0
    %207 = vmatpush1.msra.mxu0 0.0
    %208 = vmatprep.subr.mxu0 0.0
    %209 = vmatpush1.msra.mxu0 0.0
    %210 = vmatprep.subr.mxu0 0.0
    %211 = vmatpush1.msra.mxu0 0.0
    %212 = vmatprep.subr.mxu0 0.0
    %213 = vmatpush1.msra.mxu0 0.0
    %214 = vmatprep.subr.mxu0 0.0
    %215 = vmatpush1.msra.mxu0 0.0
    %216 = vmatprep.subr.mxu0 0.0
    %217 = vmatpush1.msra.mxu0 0.0
    %218 = vmatprep.subr.mxu0 0.0
    %219 = vmatpush1.msra.mxu0 0.0
    %220 = vmatprep.subr.mxu0 0.0
    %221 = vmatpush1.msra.mxu0 0.0
    %222 = vmatprep.subr.mxu0 0.0
    %223 = vmatpush1.msra.mxu0 0.0
    %224 = vmatprep.subr.mxu0 0.0
    %225 = vmatpush1.msra.mxu0 0.0
    %226 = vmatprep.subr.mxu0 0.0
    %227 = vmatpush1.msra.mxu0 0.0
    %228 = vmatprep.subr.mxu0 0.0
    %229 = vmatpush1.msra.mxu0 0.0
    %230 = vmatprep.subr.mxu0 0.0
    %231 = vmatpush1.msra.mxu0 0.0
    %232 = vmatprep.subr.mxu0 0.0
    %233 = vmatpush1.msra.mxu0 0.0
    %234 = vmatprep.subr.mxu0 0.0
    %235 = vmatpush1.msra.mxu0 0.0
    %236 = vmatprep.subr.mxu0 0.0
    %237 = vmatpush1.msra.mxu0 0.0
    %238 = vmatprep.subr.mxu0 0.0
    %239 = vmatpush1.msra.mxu0 0.0
    %240 = vmatprep.subr.mxu0 0.0
    %241 = vmatpush1.msra.mxu0 0.0
    %242 = vmatprep.subr.mxu0 0.0
    %243 = vmatpush1.msra.mxu0 0.0
    %244 = vmatprep.subr.mxu0 0.0
    %245 = vmatpush1.msra.mxu0 0.0
    %246 = vmatprep.subr.mxu0 0.0
    %247 = vmatpush1.msra.mxu0 0.0
    %248 = vmatprep.subr.mxu0 0.0
    %249 = vmatpush1.msra.mxu0 0.0
    %250 = vmatprep.subr.mxu0 0.0
    %251 = vmatpush1.msra.mxu0 0.0
    %252 = vmatprep.subr.mxu0 0.0
    %253 = vmatpush1.msra.mxu0 0.0
    %254 = vmatprep.subr.mxu0 0.0
    %255 = vmatpush1.msra.mxu0 0.0
    %256 = vmatprep.subr.mxu0 0.0
    %257 = vmatpush1.msra.mxu0 0.0
    %258 = vmatprep.subr.mxu0 0.0
    %259 = vmatpush1.msra.mxu0 0.0
    %260 = vmatprep.mubr.f32.mxu0 0.0
    %261 = vmatmul.mubr.f32.gmra.mrb[0].mxu0 %v191
    %v262 = vpop.f32.mrb[0].mxu0
    %v263 = vadd.f32 0.0, %v262
    %v264 = vpop.f32.mrb[0].mxu0
    %265 = vmatprep.mubr.f32.mxu0 0.0
    %266 = vmatmul.mubr.f32.gmra.mrb[0].mxu0 %v194
    %v267 = vpop.f32.mrb[0].mxu0
    %v268 = vadd.f32 0.0, %v267
    %v269 = vpop.f32.mrb[0].mxu0
    %270 = vdwg.mxu0
    %v271 = vld [vmem:[%s11] sm:$0xff]
    %v272 = vld [vmem:[%s11 + $0x8] sm:$0xff]
    %v273 = vld [vmem:[%s11 + $0x10] sm:$0xff]
    %v274 = vld [vmem:[%s11 + $0x18] sm:$0xff]
    %v276 = vsel %vm140, %v182, 0
    %v279 = vsel %vm140, %v183, 0
    %281 = vmatprep.subr.mxu0 0.0
    %282 = vmatpush1.msra.mxu0 %v271
    %283 = vmatprep.subr.mxu0 0.0
    %284 = vmatpush1.msra.mxu0 %v272
    %285 = vmatprep.subr.mxu0 0.0
    %286 = vmatpush1.msra.mxu0 %v273
    %287 = vmatprep.subr.mxu0 0.0
    %288 = vmatpush1.msra.mxu0 %v274
    %289 = vmatprep.subr.mxu0 0.0
    %290 = vmatpush1.msra.mxu0 0.0
    %291 = vmatprep.subr.mxu0 0.0
    %292 = vmatpush1.msra.mxu0 0.0
    %293 = vmatprep.subr.mxu0 0.0
    %294 = vmatpush1.msra.mxu0 0.0
    %295 = vmatprep.subr.mxu0 0.0
    %296 = vmatpush1.msra.mxu0 0.0
    %297 = vmatprep.subr.mxu0 0.0
    %298 = vmatpush1.msra.mxu0 0.0
    %299 = vmatprep.subr.mxu0 0.0
    %300 = vmatpush1.msra.mxu0 0.0
    %301 = vmatprep.subr.mxu0 0.0
    %302 = vmatpush1.msra.mxu0 0.0
    %303 = vmatprep.subr.mxu0 0.0
    %304 = vmatpush1.msra.mxu0 0.0
    %305 = vmatprep.subr.mxu0 0.0
    %306 = vmatpush1.msra.mxu0 0.0
    %307 = vmatprep.subr.mxu0 0.0
    %308 = vmatpush1.msra.mxu0 0.0
    %309 = vmatprep.subr.mxu0 0.0
    %310 = vmatpush1.msra.mxu0 0.0
    %311 = vmatprep.subr.mxu0 0.0
    %312 = vmatpush1.msra.mxu0 0.0
    %313 = vmatprep.subr.mxu0 0.0
    %314 = vmatpush1.msra.mxu0 0.0
    %315 = vmatprep.subr.mxu0 0.0
    %316 = vmatpush1.msra.mxu0 0.0
    %317 = vmatprep.subr.mxu0 0.0
    %318 = vmatpush1.msra.mxu0 0.0
    %319 = vmatprep.subr.mxu0 0.0
    %320 = vmatpush1.msra.mxu0 0.0
    %321 = vmatprep.subr.mxu0 0.0
    %322 = vmatpush1.msra.mxu0 0.0
    %323 = vmatprep.subr.mxu0 0.0
    %324 = vmatpush1.msra.mxu0 0.0
    %325 = vmatprep.subr.mxu0 0.0
    %326 = vmatpush1.msra.mxu0 0.0
    %327 = vmatprep.subr.mxu0 0.0
    %328 = vmatpush1.msra.mxu0 0.0
    %329 = vmatprep.subr.mxu0 0.0
    %330 = vmatpush1.msra.mxu0 0.0
    %331 = vmatprep.subr.mxu0 0.0
    %332 = vmatpush1.msra.mxu0 0.0
    %333 = vmatprep.subr.mxu0 0.0
    %334 = vmatpush1.msra.mxu0 0.0
    %335 = vmatprep.subr.mxu0 0.0
    %336 = vmatpush1.msra.mxu0 0.0
    %337 = vmatprep.subr.mxu0 0.0
    %338 = vmatpush1.msra.mxu0 0.0
    %339 = vmatprep.subr.mxu0 0.0
    %340 = vmatpush1.msra.mxu0 0.0
    %341 = vmatprep.subr.mxu0 0.0
    %342 = vmatpush1.msra.mxu0 0.0
    %343 = vmatprep.subr.mxu0 0.0
    %344 = vmatpush1.msra.mxu0 0.0
    %345 = vmatprep.mubr.f32.mxu0 0.0
    %346 = vmatmul.mubr.f32.gmra.mrb[0].mxu0 %v276
    %v347 = vpop.f32.mrb[0].mxu0
    %v348 = vadd.f32 0.0, %v347
    %v349 = vpop.f32.mrb[0].mxu0
    %350 = vmatprep.mubr.f32.mxu0 0.0
    %351 = vmatmul.mubr.f32.gmra.mrb[0].mxu0 %v279
    %v352 = vpop.f32.mrb[0].mxu0
    %v353 = vadd.f32 0.0, %v352
    %v354 = vpop.f32.mrb[0].mxu0
    %355 = vdwg.mxu0
    %v356 = vld [vmem:[%s12] sm:$0xff]
    %v357 = vld [vmem:[%s12 + $0x8] sm:$0xff]
    %v358 = vld [vmem:[%s12 + $0x10] sm:$0xff]
    %v359 = vld [vmem:[%s12 + $0x18] sm:$0xff]
    %361 = vrot.lane.b32.xlu0 %v263, 96
    %v362 = vpop.permute.xlu0 %361
    %vm363 = vcmask 64512
    %v364 = vsel %vm363, %v263, 0
    %v366 = vsel %vm363, %v362, 0
    %368 = vmatprep.subr.mxu0 0.0
    %369 = vmatpush1.xpose.msra.mxu0 %v366
    %370 = vmatprep.subr.mxu0 0.0
    %371 = vmatpush1.xpose.msra.mxu0 0.0
    %372 = vmatprep.subr.mxu0 0.0
    %373 = vmatpush1.xpose.msra.mxu0 0.0
    %374 = vmatprep.subr.mxu0 0.0
    %375 = vmatpush1.xpose.msra.mxu0 0.0
    %376 = vmatprep.subr.mxu0 0.0
    %377 = vmatpush1.xpose.msra.mxu0 0.0
    %378 = vmatprep.subr.mxu0 0.0
    %379 = vmatpush1.xpose.msra.mxu0 0.0
    %380 = vmatprep.subr.mxu0 0.0
    %381 = vmatpush1.xpose.msra.mxu0 0.0
    %382 = vmatprep.subr.mxu0 0.0
    %383 = vmatpush1.xpose.msra.mxu0 0.0
    %384 = vmatprep.subr.mxu0 0.0
    %385 = vmatpush1.xpose.msra.mxu0 0.0
    %386 = vmatprep.subr.mxu0 0.0
    %387 = vmatpush1.xpose.msra.mxu0 0.0
    %388 = vmatprep.subr.mxu0 0.0
    %389 = vmatpush1.xpose.msra.mxu0 0.0
    %390 = vmatprep.subr.mxu0 0.0
    %391 = vmatpush1.xpose.msra.mxu0 0.0
    %392 = vmatprep.subr.mxu0 0.0
    %393 = vmatpush1.xpose.msra.mxu0 0.0
    %394 = vmatprep.subr.mxu0 0.0
    %395 = vmatpush1.xpose.msra.mxu0 0.0
    %396 = vmatprep.subr.mxu0 0.0
    %397 = vmatpush1.xpose.msra.mxu0 0.0
    %398 = vmatprep.subr.mxu0 0.0
    %399 = vmatpush1.xpose.msra.mxu0 0.0
    %400 = vmatprep.subr.mxu0 0.0
    %401 = vmatpush1.xpose.msra.mxu0 0.0
    %402 = vmatprep.subr.mxu0 0.0
    %403 = vmatpush1.xpose.msra.mxu0 0.0
    %404 = vmatprep.subr.mxu0 0.0
    %405 = vmatpush1.xpose.msra.mxu0 0.0
    %406 = vmatprep.subr.mxu0 0.0
    %407 = vmatpush1.xpose.msra.mxu0 0.0
    %408 = vmatprep.subr.mxu0 0.0
    %409 = vmatpush1.xpose.msra.mxu0 0.0
    %410 = vmatprep.subr.mxu0 0.0
    %411 = vmatpush1.xpose.msra.mxu0 0.0
    %412 = vmatprep.subr.mxu0 0.0
    %413 = vmatpush1.xpose.msra.mxu0 0.0
    %414 = vmatprep.subr.mxu0 0.0
    %415 = vmatpush1.xpose.msra.mxu0 0.0
    %416 = vmatprep.subr.mxu0 0.0
    %417 = vmatpush1.xpose.msra.mxu0 0.0
    %418 = vmatprep.subr.mxu0 0.0
    %419 = vmatpush1.xpose.msra.mxu0 0.0
    %420 = vmatprep.subr.mxu0 0.0
    %421 = vmatpush1.xpose.msra.mxu0 0.0
    %422 = vmatprep.subr.mxu0 0.0
    %423 = vmatpush1.xpose.msra.mxu0 0.0
    %424 = vmatprep.subr.mxu0 0.0
    %425 = vmatpush1.xpose.msra.mxu0 0.0
    %426 = vmatprep.subr.mxu0 0.0
    %427 = vmatpush1.xpose.msra.mxu0 0.0
    %428 = vmatprep.subr.mxu0 0.0
    %429 = vmatpush1.xpose.msra.mxu0 0.0
    %430 = vmatprep.subr.mxu0 0.0
    %431 = vmatpush1.xpose.msra.mxu0 0.0
    %432 = vmatprep.mubr.f32.mxu0 0.0
    %433 = vmatmul.mubr.f32.gmra.mrb[0].mxu0 %v364
    %v434 = vpop.f32.mrb[0].mxu0
    %v435 = vadd.f32 0.0, %v434
    %v436 = vpop.f32.mrb[0].mxu0
    %437 = vdwg.mxu0
    %v438 = vmul.f32 %v435, 0.35355338
    %v439 = vsel %vm363, %v438, -inf
    %440 = vmax.xlane.f32.xlu0 %v439
    %v441 = vpop.xlane.xlu0 %440
    %v442 = vsub.f32 %v438, %v441
    %v443 = vmul.f32 %v442, 1.442695
    %v444 = vpow.pop %v443
    %v445 = vsel %vm363, %v444, 0.0
    %446 = vadd.xlane.f32.xlu0 %v445
    %v447 = vpop.xlane.xlu0 %446
    %v448 = vrcp.pop %v447
    %v449 = vmul.f32 %v444, %v448
    %v451 = vsel %vm363, %v449, 0
    %453 = vmatprep.subr.mxu0 0.0
    %454 = vmatpush1.msra.mxu0 %v348
    %455 = vmatprep.subr.mxu0 0.0
    %456 = vmatpush1.msra.mxu0 0.0
    %457 = vmatprep.subr.mxu0 0.0
    %458 = vmatpush1.msra.mxu0 0.0
    %459 = vmatprep.subr.mxu0 0.0
    %460 = vmatpush1.msra.mxu0 0.0
    %461 = vmatprep.subr.mxu0 0.0
    %462 = vmatpush1.msra.mxu0 0.0
    %463 = vmatprep.subr.mxu0 0.0
    %464 = vmatpush1.msra.mxu0 0.0
    %465 = vmatprep.subr.mxu0 0.0
    %466 = vmatpush1.msra.mxu0 0.0
    %467 = vmatprep.subr.mxu0 0.0
    %468 = vmatpush1.msra.mxu0 0.0
    %469 = vmatprep.subr.mxu0 0.0
    %470 = vmatpush1.msra.mxu0 0.0
    %471 = vmatprep.subr.mxu0 0.0
    %472 = vmatpush1.msra.mxu0 0.0
    %473 = vmatprep.subr.mxu0 0.0
    %474 = vmatpush1.msra.mxu0 0.0
    %475 = vmatprep.subr.mxu0 0.0
    %476 = vmatpush1.msra.mxu0 0.0
    %477 = vmatprep.subr.mxu0 0.0
    %478 = vmatpush1.msra.mxu0 0.0
    %479 = vmatprep.subr.mxu0 0.0
    %480 = vmatpush1.msra.mxu0 0.0
    %481 = vmatprep.subr.mxu0 0.0
    %482 = vmatpush1.msra.mxu0 0.0
    %483 = vmatprep.subr.mxu0 0.0
    %484 = vmatpush1.msra.mxu0 0.0
    %485 = vmatprep.subr.mxu0 0.0
    %486 = vmatpush1.msra.mxu0 0.0
    %487 = vmatprep.subr.mxu0 0.0
    %488 = vmatpush1.msra.mxu0 0.0
    %489 = vmatprep.subr.mxu0 0.0
    %490 = vmatpush1.msra.mxu0 0.0
    %491 = vmatprep.subr.mxu0 0.0
    %492 = vmatpush1.msra.mxu0 0.0
    %493 = vmatprep.subr.mxu0 0.0
    %494 = vmatpush1.msra.mxu0 0.0
    %495 = vmatprep.subr.mxu0 0.0
    %496 = vmatpush1.msra.mxu0 0.0
    %497 = vmatprep.subr.mxu0 0.0
    %498 = vmatpush1.msra.mxu0 0.0
    %499 = vmatprep.subr.mxu0 0.0
    %500 = vmatpush1.msra.mxu0 0.0
    %501 = vmatprep.subr.mxu0 0.0
    %502 = vmatpush1.msra.mxu0 0.0
    %503 = vmatprep.subr.mxu0 0.0
    %504 = vmatpush1.msra.mxu0 0.0
    %505 = vmatprep.subr.mxu0 0.0
    %506 = vmatpush1.msra.mxu0 0.0
    %507 = vmatprep.subr.mxu0 0.0
    %508 = vmatpush1.msra.mxu0 0.0
    %509 = vmatprep.subr.mxu0 0.0
    %510 = vmatpush1.msra.mxu0 0.0
    %511 = vmatprep.subr.mxu0 0.0
    %512 = vmatpush1.msra.mxu0 0.0
    %513 = vmatprep.subr.mxu0 0.0
    %514 = vmatpush1.msra.mxu0 0.0
    %515 = vmatprep.subr.mxu0 0.0
    %516 = vmatpush1.msra.mxu0 0.0
    %517 = vmatprep.mubr.f32.mxu0 0.0
    %518 = vmatmul.mubr.f32.gmra.mrb[0].mxu0 %v451
    %v519 = vpop.f32.mrb[0].mxu0
    %v520 = vadd.f32 0.0, %v519
    %v521 = vpop.f32.mrb[0].mxu0
    %522 = vdwg.mxu0
    %523 = vrot.lane.b32.xlu0 %v263, 120
    %v524 = vpop.permute.xlu0 %523
    %525 = vrot.lane.b32.xlu0 %v263, 88
    %v526 = vpop.permute.xlu0 %525
    %v527 = vsel %vm363, %v524, 0
    %v529 = vsel %vm363, %v526, 0
    %531 = vmatprep.subr.mxu0 0.0
    %532 = vmatpush1.xpose.msra.mxu0 %v529
    %533 = vmatprep.subr.mxu0 0.0
    %534 = vmatpush1.xpose.msra.mxu0 0.0
    %535 = vmatprep.subr.mxu0 0.0
    %536 = vmatpush1.xpose.msra.mxu0 0.0
    %537 = vmatprep.subr.mxu0 0.0
    %538 = vmatpush1.xpose.msra.mxu0 0.0
    %539 = vmatprep.subr.mxu0 0.0
    %540 = vmatpush1.xpose.msra.mxu0 0.0
    %541 = vmatprep.subr.mxu0 0.0
    %542 = vmatpush1.xpose.msra.mxu0 0.0
    %543 = vmatprep.subr.mxu0 0.0
    %544 = vmatpush1.xpose.msra.mxu0 0.0
    %545 = vmatprep.subr.mxu0 0.0
    %546 = vmatpush1.xpose.msra.mxu0 0.0
    %547 = vmatprep.subr.mxu0 0.0
    %548 = vmatpush1.xpose.msra.mxu0 0.0
    %549 = vmatprep.subr.mxu0 0.0
    %550 = vmatpush1.xpose.msra.mxu0 0.0
    %551 = vmatprep.subr.mxu0 0.0
    %552 = vmatpush1.xpose.msra.mxu0 0.0
    %553 = vmatprep.subr.mxu0 0.0
    %554 = vmatpush1.xpose.msra.mxu0 0.0
    %555 = vmatprep.subr.mxu0 0.0
    %556 = vmatpush1.xpose.msra.mxu0 0.0
    %557 = vmatprep.subr.mxu0 0.0
    %558 = vmatpush1.xpose.msra.mxu0 0.0
    %559 = vmatprep.subr.mxu0 0.0
    %560 = vmatpush1.xpose.msra.mxu0 0.0
    %561 = vmatprep.subr.mxu0 0.0
    %562 = vmatpush1.xpose.msra.mxu0 0.0
    %563 = vmatprep.subr.mxu0 0.0
    %564 = vmatpush1.xpose.msra.mxu0 0.0
    %565 = vmatprep.subr.mxu0 0.0
    %566 = vmatpush1.xpose.msra.mxu0 0.0
    %567 = vmatprep.subr.mxu0 0.0
    %568 = vmatpush1.xpose.msra.mxu0 0.0
    %569 = vmatprep.subr.mxu0 0.0
    %570 = vmatpush1.xpose.msra.mxu0 0.0
    %571 = vmatprep.subr.mxu0 0.0
    %572 = vmatpush1.xpose.msra.mxu0 0.0
    %573 = vmatprep.subr.mxu0 0.0
    %574 = vmatpush1.xpose.msra.mxu0 0.0
    %575 = vmatprep.subr.mxu0 0.0
    %576 = vmatpush1.xpose.msra.mxu0 0.0
    %577 = vmatprep.subr.mxu0 0.0
    %578 = vmatpush1.xpose.msra.mxu0 0.0
    %579 = vmatprep.subr.mxu0 0.0
    %580 = vmatpush1.xpose.msra.mxu0 0.0
    %581 = vmatprep.subr.mxu0 0.0
    %582 = vmatpush1.xpose.msra.mxu0 0.0
    %583 = vmatprep.subr.mxu0 0.0
    %584 = vmatpush1.xpose.msra.mxu0 0.0
    %585 = vmatprep.subr.mxu0 0.0
    %586 = vmatpush1.xpose.msra.mxu0 0.0
    %587 = vmatprep.subr.mxu0 0.0
    %588 = vmatpush1.xpose.msra.mxu0 0.0
    %589 = vmatprep.subr.mxu0 0.0
    %590 = vmatpush1.xpose.msra.mxu0 0.0
    %591 = vmatprep.subr.mxu0 0.0
    %592 = vmatpush1.xpose.msra.mxu0 0.0
    %593 = vmatprep.subr.mxu0 0.0
    %594 = vmatpush1.xpose.msra.mxu0 0.0
    %595 = vmatprep.mubr.f32.mxu0 0.0
    %596 = vmatmul.mubr.f32.gmra.mrb[0].mxu0 %v527
    %v597 = vpop.f32.mrb[0].mxu0
    %v598 = vadd.f32 0.0, %v597
    %v599 = vpop.f32.mrb[0].mxu0
    %600 = vdwg.mxu0
    %v601 = vmul.f32 %v598, 0.35355338
    %v602 = vsel %vm363, %v601, -inf
    %603 = vmax.xlane.f32.xlu0 %v602
    %v604 = vpop.xlane.xlu0 %603
    %v605 = vsub.f32 %v601, %v604
    %v606 = vmul.f32 %v605, 1.442695
    %v607 = vpow.pop %v606
    %v608 = vsel %vm363, %v607, 0.0
    %609 = vadd.xlane.f32.xlu0 %v608
    %v610 = vpop.xlane.xlu0 %609
    %v611 = vrcp.pop %v610
    %v612 = vmul.f32 %v607, %v611
    %614 = vrot.lane.b32.xlu0 %v348, 120
    %v615 = vpop.permute.xlu0 %614
    %v618 = vsel %vm363, %v612, 0
    %620 = vmatprep.subr.mxu0 0.0
    %621 = vmatpush1.msra.mxu0 %v615
    %622 = vmatprep.subr.mxu0 0.0
    %623 = vmatpush1.msra.mxu0 0.0
    %624 = vmatprep.subr.mxu0 0.0
    %625 = vmatpush1.msra.mxu0 0.0
    %626 = vmatprep.subr.mxu0 0.0
    %627 = vmatpush1.msra.mxu0 0.0
    %628 = vmatprep.subr.mxu0 0.0
    %629 = vmatpush1.msra.mxu0 0.0
    %630 = vmatprep.subr.mxu0 0.0
    %631 = vmatpush1.msra.mxu0 0.0
    %632 = vmatprep.subr.mxu0 0.0
    %633 = vmatpush1.msra.mxu0 0.0
    %634 = vmatprep.subr.mxu0 0.0
    %635 = vmatpush1.msra.mxu0 0.0
    %636 = vmatprep.subr.mxu0 0.0
    %637 = vmatpush1.msra.mxu0 0.0
    %638 = vmatprep.subr.mxu0 0.0
    %639 = vmatpush1.msra.mxu0 0.0
    %640 = vmatprep.subr.mxu0 0.0
    %641 = vmatpush1.msra.mxu0 0.0
    %642 = vmatprep.subr.mxu0 0.0
    %643 = vmatpush1.msra.mxu0 0.0
    %644 = vmatprep.subr.mxu0 0.0
    %645 = vmatpush1.msra.mxu0 0.0
    %646 = vmatprep.subr.mxu0 0.0
    %647 = vmatpush1.msra.mxu0 0.0
    %648 = vmatprep.subr.mxu0 0.0
    %649 = vmatpush1.msra.mxu0 0.0
    %650 = vmatprep.subr.mxu0 0.0
    %651 = vmatpush1.msra.mxu0 0.0
    %652 = vmatprep.subr.mxu0 0.0
    %653 = vmatpush1.msra.mxu0 0.0
    %654 = vmatprep.subr.mxu0 0.0
    %655 = vmatpush1.msra.mxu0 0.0
    %656 = vmatprep.subr.mxu0 0.0
    %657 = vmatpush1.msra.mxu0 0.0
    %658 = vmatprep.subr.mxu0 0.0
    %659 = vmatpush1.msra.mxu0 0.0
    %660 = vmatprep.subr.mxu0 0.0
    %661 = vmatpush1.msra.mxu0 0.0
    %662 = vmatprep.subr.mxu0 0.0
    %663 = vmatpush1.msra.mxu0 0.0
    %664 = vmatprep.subr.mxu0 0.0
    %665 = vmatpush1.msra.mxu0 0.0
    %666 = vmatprep.subr.mxu0 0.0
    %667 = vmatpush1.msra.mxu0 0.0
    %668 = vmatprep.subr.mxu0 0.0
    %669 = vmatpush1.msra.mxu0 0.0
    %670 = vmatprep.subr.mxu0 0.0
    %671 = vmatpush1.msra.mxu0 0.0
    %672 = vmatprep.subr.mxu0 0.0
    %673 = vmatpush1.msra.mxu0 0.0
    %674 = vmatprep.subr.mxu0 0.0
    %675 = vmatpush1.msra.mxu0 0.0
    %676 = vmatprep.subr.mxu0 0.0
    %677 = vmatpush1.msra.mxu0 0.0
    %678 = vmatprep.subr.mxu0 0.0
    %679 = vmatpush1.msra.mxu0 0.0
    %680 = vmatprep.subr.mxu0 0.0
    %681 = vmatpush1.msra.mxu0 0.0
    %682 = vmatprep.subr.mxu0 0.0
    %683 = vmatpush1.msra.mxu0 0.0
    %684 = vmatprep.mubr.f32.mxu0 0.0
    %685 = vmatmul.mubr.f32.gmra.mrb[0].mxu0 %v618
    %v686 = vpop.f32.mrb[0].mxu0
    %v687 = vadd.f32 0.0, %v686
    %v688 = vpop.f32.mrb[0].mxu0
    %689 = vdwg.mxu0
    %v691 = vsel %vm363, %v687, 0
    %693 = vmatprep.subr.mxu0 0.0
    %694 = vmatpush1.msra.mxu0 %v357
    %695 = vmatprep.subr.mxu0 0.0
    %696 = vmatpush1.msra.mxu0 0.0
    %697 = vmatprep.subr.mxu0 0.0
    %698 = vmatpush1.msra.mxu0 0.0
    %699 = vmatprep.subr.mxu0 0.0
    %700 = vmatpush1.msra.mxu0 0.0
    %701 = vmatprep.subr.mxu0 0.0
    %702 = vmatpush1.msra.mxu0 0.0
    %703 = vmatprep.subr.mxu0 0.0
    %704 = vmatpush1.msra.mxu0 0.0
    %705 = vmatprep.subr.mxu0 0.0
    %706 = vmatpush1.msra.mxu0 0.0
    %707 = vmatprep.subr.mxu0 0.0
    %708 = vmatpush1.msra.mxu0 0.0
    %709 = vmatprep.subr.mxu0 0.0
    %710 = vmatpush1.msra.mxu0 0.0
    %711 = vmatprep.subr.mxu0 0.0
    %712 = vmatpush1.msra.mxu0 0.0
    %713 = vmatprep.subr.mxu0 0.0
    %714 = vmatpush1.msra.mxu0 0.0
    %715 = vmatprep.subr.mxu0 0.0
    %716 = vmatpush1.msra.mxu0 0.0
    %717 = vmatprep.subr.mxu0 0.0
    %718 = vmatpush1.msra.mxu0 0.0
    %719 = vmatprep.subr.mxu0 0.0
    %720 = vmatpush1.msra.mxu0 0.0
    %721 = vmatprep.subr.mxu0 0.0
    %722 = vmatpush1.msra.mxu0 0.0
    %723 = vmatprep.subr.mxu0 0.0
    %724 = vmatpush1.msra.mxu0 0.0
    %725 = vmatprep.subr.mxu0 0.0
    %726 = vmatpush1.msra.mxu0 0.0
    %727 = vmatprep.subr.mxu0 0.0
    %728 = vmatpush1.msra.mxu0 0.0
    %729 = vmatprep.subr.mxu0 0.0
    %730 = vmatpush1.msra.mxu0 0.0
    %731 = vmatprep.subr.mxu0 0.0
    %732 = vmatpush1.msra.mxu0 0.0
    %733 = vmatprep.subr.mxu0 0.0
    %734 = vmatpush1.msra.mxu0 0.0
    %735 = vmatprep.subr.mxu0 0.0
    %736 = vmatpush1.msra.mxu0 0.0
    %737 = vmatprep.subr.mxu0 0.0
    %738 = vmatpush1.msra.mxu0 0.0
    %739 = vmatprep.subr.mxu0 0.0
    %740 = vmatpush1.msra.mxu0 0.0
    %741 = vmatprep.subr.mxu0 0.0
    %742 = vmatpush1.msra.mxu0 0.0
    %743 = vmatprep.subr.mxu0 0.0
    %744 = vmatpush1.msra.mxu0 0.0
    %745 = vmatprep.subr.mxu0 0.0
    %746 = vmatpush1.msra.mxu0 0.0
    %747 = vmatprep.subr.mxu0 0.0
    %748 = vmatpush1.msra.mxu0 0.0
    %749 = vmatprep.subr.mxu0 0.0
    %750 = vmatpush1.msra.mxu0 0.0
    %751 = vmatprep.subr.mxu0 0.0
    %752 = vmatpush1.msra.mxu0 0.0
    %753 = vmatprep.subr.mxu0 0.0
    %754 = vmatpush1.msra.mxu0 0.0
    %755 = vmatprep.subr.mxu0 0.0
    %756 = vmatpush1.msra.mxu0 0.0
    %757 = vmatprep.mubr.f32.mxu0 0.0
    %758 = vmatmul.mubr.f32.gmra.mrb[0].mxu0 %v691
    %v759 = vpop.f32.mrb[0].mxu0
    %v760 = vadd.f32 0.0, %v759
    %v761 = vpop.f32.mrb[0].mxu0
    %762 = vdwg.mxu0
    %v764 = vsel %vm363, %v520, 0
    %766 = vmatprep.subr.mxu0 0.0
    %767 = vmatpush1.msra.mxu0 %v356
    %768 = vmatprep.subr.mxu0 0.0
    %769 = vmatpush1.msra.mxu0 0.0
    %770 = vmatprep.subr.mxu0 0.0
    %771 = vmatpush1.msra.mxu0 0.0
    %772 = vmatprep.subr.mxu0 0.0
    %773 = vmatpush1.msra.mxu0 0.0
    %774 = vmatprep.subr.mxu0 0.0
    %775 = vmatpush1.msra.mxu0 0.0
    %776 = vmatprep.subr.mxu0 0.0
    %777 = vmatpush1.msra.mxu0 0.0
    %778 = vmatprep.subr.mxu0 0.0
    %779 = vmatpush1.msra.mxu0 0.0
    %780 = vmatprep.subr.mxu0 0.0
    %781 = vmatpush1.msra.mxu0 0.0
    %782 = vmatprep.subr.mxu0 0.0
    %783 = vmatpush1.msra.mxu0 0.0
    %784 = vmatprep.subr.mxu0 0.0
    %785 = vmatpush1.msra.mxu0 0.0
    %786 = vmatprep.subr.mxu0 0.0
    %787 = vmatpush1.msra.mxu0 0.0
    %788 = vmatprep.subr.mxu0 0.0
    %789 = vmatpush1.msra.mxu0 0.0
    %790 = vmatprep.subr.mxu0 0.0
    %791 = vmatpush1.msra.mxu0 0.0
    %792 = vmatprep.subr.mxu0 0.0
    %793 = vmatpush1.msra.mxu0 0.0
    %794 = vmatprep.subr.mxu0 0.0
    %795 = vmatpush1.msra.mxu0 0.0
    %796 = vmatprep.subr.mxu0 0.0
    %797 = vmatpush1.msra.mxu0 0.0
    %798 = vmatprep.subr.mxu0 0.0
    %799 = vmatpush1.msra.mxu0 0.0
    %800 = vmatprep.subr.mxu0 0.0
    %801 = vmatpush1.msra.mxu0 0.0
    %802 = vmatprep.subr.mxu0 0.0
    %803 = vmatpush1.msra.mxu0 0.0
    %804 = vmatprep.subr.mxu0 0.0
    %805 = vmatpush1.msra.mxu0 0.0
    %806 = vmatprep.subr.mxu0 0.0
    %807 = vmatpush1.msra.mxu0 0.0
    %808 = vmatprep.subr.mxu0 0.0
    %809 = vmatpush1.msra.mxu0 0.0
    %810 = vmatprep.subr.mxu0 0.0
    %811 = vmatpush1.msra.mxu0 0.0
    %812 = vmatprep.subr.mxu0 0.0
    %813 = vmatpush1.msra.mxu0 0.0
    %814 = vmatprep.subr.mxu0 0.0
    %815 = vmatpush1.msra.mxu0 0.0
    %816 = vmatprep.subr.mxu0 0.0
    %817 = vmatpush1.msra.mxu0 0.0
    %818 = vmatprep.subr.mxu0 0.0
    %819 = vmatpush1.msra.mxu0 0.0
    %820 = vmatprep.subr.mxu0 0.0
    %821 = vmatpush1.msra.mxu0 0.0
    %822 = vmatprep.subr.mxu0 0.0
    %823 = vmatpush1.msra.mxu0 0.0
    %824 = vmatprep.subr.mxu0 0.0
    %825 = vmatpush1.msra.mxu0 0.0
    %826 = vmatprep.subr.mxu0 0.0
    %827 = vmatpush1.msra.mxu0 0.0
    %828 = vmatprep.subr.mxu0 0.0
    %829 = vmatpush1.msra.mxu0 0.0
    %830 = vmatprep.mubr.f32.mxu0 0.0
    %831 = vmatmul.mubr.f32.gmra.mrb[0].mxu0 %v764
    %v832 = vpop.f32.mrb[0].mxu0
    %v833 = vadd.f32 %v760, %v832
    %v834 = vpop.f32.mrb[0].mxu0
    %835 = vdwg.mxu0
    %836 = vrot.lane.b32.xlu0 %v263, 112
    %v837 = vpop.permute.xlu0 %836
    %838 = vrot.lane.b32.xlu0 %v263, 80
    %v839 = vpop.permute.xlu0 %838
    %v840 = vsel %vm363, %v837, 0
    %v842 = vsel %vm363, %v839, 0
    %844 = vmatprep.subr.mxu0 0.0
    %845 = vmatpush1.xpose.msra.mxu0 %v842
    %846 = vmatprep.subr.mxu0 0.0
    %847 = vmatpush1.xpose.msra.mxu0 0.0
    %848 = vmatprep.subr.mxu0 0.0
    %849 = vmatpush1.xpose.msra.mxu0 0.0
    %850 = vmatprep.subr.mxu0 0.0
    %851 = vmatpush1.xpose.msra.mxu0 0.0
    %852 = vmatprep.subr.mxu0 0.0
    %853 = vmatpush1.xpose.msra.mxu0 0.0
    %854 = vmatprep.subr.mxu0 0.0
    %855 = vmatpush1.xpose.msra.mxu0 0.0
    %856 = vmatprep.subr.mxu0 0.0
    %857 = vmatpush1.xpose.msra.mxu0 0.0
    %858 = vmatprep.subr.mxu0 0.0
    %859 = vmatpush1.xpose.msra.mxu0 0.0
    %860 = vmatprep.subr.mxu0 0.0
    %861 = vmatpush1.xpose.msra.mxu0 0.0
    %862 = vmatprep.subr.mxu0 0.0
    %863 = vmatpush1.xpose.msra.mxu0 0.0
    %864 = vmatprep.subr.mxu0 0.0
    %865 = vmatpush1.xpose.msra.mxu0 0.0
    %866 = vmatprep.subr.mxu0 0.0
    %867 = vmatpush1.xpose.msra.mxu0 0.0
    %868 = vmatprep.subr.mxu0 0.0
    %869 = vmatpush1.xpose.msra.mxu0 0.0
    %870 = vmatprep.subr.mxu0 0.0
    %871 = vmatpush1.xpose.msra.mxu0 0.0
    %872 = vmatprep.subr.mxu0 0.0
    %873 = vmatpush1.xpose.msra.mxu0 0.0
    %874 = vmatprep.subr.mxu0 0.0
    %875 = vmatpush1.xpose.msra.mxu0 0.0
    %876 = vmatprep.subr.mxu0 0.0
    %877 = vmatpush1.xpose.msra.mxu0 0.0
    %878 = vmatprep.subr.mxu0 0.0
    %879 = vmatpush1.xpose.msra.mxu0 0.0
    %880 = vmatprep.subr.mxu0 0.0
    %881 = vmatpush1.xpose.msra.mxu0 0.0
    %882 = vmatprep.subr.mxu0 0.0
    %883 = vmatpush1.xpose.msra.mxu0 0.0
    %884 = vmatprep.subr.mxu0 0.0
    %885 = vmatpush1.xpose.msra.mxu0 0.0
    %886 = vmatprep.subr.mxu0 0.0
    %887 = vmatpush1.xpose.msra.mxu0 0.0
    %888 = vmatprep.subr.mxu0 0.0
    %889 = vmatpush1.xpose.msra.mxu0 0.0
    %890 = vmatprep.subr.mxu0 0.0
    %891 = vmatpush1.xpose.msra.mxu0 0.0
    %892 = vmatprep.subr.mxu0 0.0
    %893 = vmatpush1.xpose.msra.mxu0 0.0
    %894 = vmatprep.subr.mxu0 0.0
    %895 = vmatpush1.xpose.msra.mxu0 0.0
    %896 = vmatprep.subr.mxu0 0.0
    %897 = vmatpush1.xpose.msra.mxu0 0.0
    %898 = vmatprep.subr.mxu0 0.0
    %899 = vmatpush1.xpose.msra.mxu0 0.0
    %900 = vmatprep.subr.mxu0 0.0
    %901 = vmatpush1.xpose.msra.mxu0 0.0
    %902 = vmatprep.subr.mxu0 0.0
    %903 = vmatpush1.xpose.msra.mxu0 0.0
    %904 = vmatprep.subr.mxu0 0.0
    %905 = vmatpush1.xpose.msra.mxu0 0.0
    %906 = vmatprep.subr.mxu0 0.0
    %907 = vmatpush1.xpose.msra.mxu0 0.0
    %908 = vmatprep.mubr.f32.mxu0 0.0
    %909 = vmatmul.mubr.f32.gmra.mrb[0].mxu0 %v840
    %v910 = vpop.f32.mrb[0].mxu0
    %v911 = vadd.f32 0.0, %v910
    %v912 = vpop.f32.mrb[0].mxu0
    %913 = vdwg.mxu0
    %v914 = vmul.f32 %v911, 0.35355338
    %v915 = vsel %vm363, %v914, -inf
    %916 = vmax.xlane.f32.xlu0 %v915
    %v917 = vpop.xlane.xlu0 %916
    %v918 = vsub.f32 %v914, %v917
    %v919 = vmul.f32 %v918, 1.442695
    %v920 = vpow.pop %v919
    %v921 = vsel %vm363, %v920, 0.0
    %922 = vadd.xlane.f32.xlu0 %v921
    %v923 = vpop.xlane.xlu0 %922
    %v924 = vrcp.pop %v923
    %v925 = vmul.f32 %v920, %v924
    %926 = vrot.lane.b32.xlu0 %v348, 112
    %v927 = vpop.permute.xlu0 %926
    %v930 = vsel %vm363, %v925, 0
    %932 = vmatprep.subr.mxu0 0.0
    %933 = vmatpush1.msra.mxu0 %v927
    %934 = vmatprep.subr.mxu0 0.0
    %935 = vmatpush1.msra.mxu0 0.0
    %936 = vmatprep.subr.mxu0 0.0
    %937 = vmatpush1.msra.mxu0 0.0
    %938 = vmatprep.subr.mxu0 0.0
    %939 = vmatpush1.msra.mxu0 0.0
    %940 = vmatprep.subr.mxu0 0.0
    %941 = vmatpush1.msra.mxu0 0.0
    %942 = vmatprep.subr.mxu0 0.0
    %943 = vmatpush1.msra.mxu0 0.0
    %944 = vmatprep.subr.mxu0 0.0
    %945 = vmatpush1.msra.mxu0 0.0
    %946 = vmatprep.subr.mxu0 0.0
    %947 = vmatpush1.msra.mxu0 0.0
    %948 = vmatprep.subr.mxu0 0.0
    %949 = vmatpush1.msra.mxu0 0.0
    %950 = vmatprep.subr.mxu0 0.0
    %951 = vmatpush1.msra.mxu0 0.0
    %952 = vmatprep.subr.mxu0 0.0
    %953 = vmatpush1.msra.mxu0 0.0
    %954 = vmatprep.subr.mxu0 0.0
    %955 = vmatpush1.msra.mxu0 0.0
    %956 = vmatprep.subr.mxu0 0.0
    %957 = vmatpush1.msra.mxu0 0.0
    %958 = vmatprep.subr.mxu0 0.0
    %959 = vmatpush1.msra.mxu0 0.0
    %960 = vmatprep.subr.mxu0 0.0
    %961 = vmatpush1.msra.mxu0 0.0
    %962 = vmatprep.subr.mxu0 0.0
    %963 = vmatpush1.msra.mxu0 0.0
    %964 = vmatprep.subr.mxu0 0.0
    %965 = vmatpush1.msra.mxu0 0.0
    %966 = vmatprep.subr.mxu0 0.0
    %967 = vmatpush1.msra.mxu0 0.0
    %968 = vmatprep.subr.mxu0 0.0
    %969 = vmatpush1.msra.mxu0 0.0
    %970 = vmatprep.subr.mxu0 0.0
    %971 = vmatpush1.msra.mxu0 0.0
    %972 = vmatprep.subr.mxu0 0.0
    %973 = vmatpush1.msra.mxu0 0.0
    %974 = vmatprep.subr.mxu0 0.0
    %975 = vmatpush1.msra.mxu0 0.0
    %976 = vmatprep.subr.mxu0 0.0
    %977 = vmatpush1.msra.mxu0 0.0
    %978 = vmatprep.subr.mxu0 0.0
    %979 = vmatpush1.msra.mxu0 0.0
    %980 = vmatprep.subr.mxu0 0.0
    %981 = vmatpush1.msra.mxu0 0.0
    %982 = vmatprep.subr.mxu0 0.0
    %983 = vmatpush1.msra.mxu0 0.0
    %984 = vmatprep.subr.mxu0 0.0
    %985 = vmatpush1.msra.mxu0 0.0
    %986 = vmatprep.subr.mxu0 0.0
    %987 = vmatpush1.msra.mxu0 0.0
    %988 = vmatprep.subr.mxu0 0.0
    %989 = vmatpush1.msra.mxu0 0.0
    %990 = vmatprep.subr.mxu0 0.0
    %991 = vmatpush1.msra.mxu0 0.0
    %992 = vmatprep.subr.mxu0 0.0
    %993 = vmatpush1.msra.mxu0 0.0
    %994 = vmatprep.subr.mxu0 0.0
    %995 = vmatpush1.msra.mxu0 0.0
    %996 = vmatprep.mubr.f32.mxu0 0.0
    %997 = vmatmul.mubr.f32.gmra.mrb[0].mxu0 %v930
    %v998 = vpop.f32.mrb[0].mxu0
    %v999 = vadd.f32 0.0, %v998
    %v1000 = vpop.f32.mrb[0].mxu0
    %1001 = vdwg.mxu0
    %v1003 = vsel %vm363, %v999, 0
    %1005 = vmatprep.subr.mxu0 0.0
    %1006 = vmatpush1.msra.mxu0 %v358
    %1007 = vmatprep.subr.mxu0 0.0
    %1008 = vmatpush1.msra.mxu0 0.0
    %1009 = vmatprep.subr.mxu0 0.0
    %1010 = vmatpush1.msra.mxu0 0.0
    %1011 = vmatprep.subr.mxu0 0.0
    %1012 = vmatpush1.msra.mxu0 0.0
    %1013 = vmatprep.subr.mxu0 0.0
    %1014 = vmatpush1.msra.mxu0 0.0
    %1015 = vmatprep.subr.mxu0 0.0
    %1016 = vmatpush1.msra.mxu0 0.0
    %1017 = vmatprep.subr.mxu0 0.0
    %1018 = vmatpush1.msra.mxu0 0.0
    %1019 = vmatprep.subr.mxu0 0.0
    %1020 = vmatpush1.msra.mxu0 0.0
    %1021 = vmatprep.subr.mxu0 0.0
    %1022 = vmatpush1.msra.mxu0 0.0
    %1023 = vmatprep.subr.mxu0 0.0
    %1024 = vmatpush1.msra.mxu0 0.0
    %1025 = vmatprep.subr.mxu0 0.0
    %1026 = vmatpush1.msra.mxu0 0.0
    %1027 = vmatprep.subr.mxu0 0.0
    %1028 = vmatpush1.msra.mxu0 0.0
    %1029 = vmatprep.subr.mxu0 0.0
    %1030 = vmatpush1.msra.mxu0 0.0
    %1031 = vmatprep.subr.mxu0 0.0
    %1032 = vmatpush1.msra.mxu0 0.0
    %1033 = vmatprep.subr.mxu0 0.0
    %1034 = vmatpush1.msra.mxu0 0.0
    %1035 = vmatprep.subr.mxu0 0.0
    %1036 = vmatpush1.msra.mxu0 0.0
    %1037 = vmatprep.subr.mxu0 0.0
    %1038 = vmatpush1.msra.mxu0 0.0
    %1039 = vmatprep.subr.mxu0 0.0
    %1040 = vmatpush1.msra.mxu0 0.0
    %1041 = vmatprep.subr.mxu0 0.0
    %1042 = vmatpush1.msra.mxu0 0.0
    %1043 = vmatprep.subr.mxu0 0.0
    %1044 = vmatpush1.msra.mxu0 0.0
    %1045 = vmatprep.subr.mxu0 0.0
    %1046 = vmatpush1.msra.mxu0 0.0
    %1047 = vmatprep.subr.mxu0 0.0
    %1048 = vmatpush1.msra.mxu0 0.0
    %1049 = vmatprep.subr.mxu0 0.0
    %1050 = vmatpush1.msra.mxu0 0.0
    %1051 = vmatprep.subr.mxu0 0.0
    %1052 = vmatpush1.msra.mxu0 0.0
    %1053 = vmatprep.subr.mxu0 0.0
    %1054 = vmatpush1.msra.mxu0 0.0
    %1055 = vmatprep.subr.mxu0 0.0
    %1056 = vmatpush1.msra.mxu0 0.0
    %1057 = vmatprep.subr.mxu0 0.0
    %1058 = vmatpush1.msra.mxu0 0.0
    %1059 = vmatprep.subr.mxu0 0.0
    %1060 = vmatpush1.msra.mxu0 0.0
    %1061 = vmatprep.subr.mxu0 0.0
    %1062 = vmatpush1.msra.mxu0 0.0
    %1063 = vmatprep.subr.mxu0 0.0
    %1064 = vmatpush1.msra.mxu0 0.0
    %1065 = vmatprep.subr.mxu0 0.0
    %1066 = vmatpush1.msra.mxu0 0.0
    %1067 = vmatprep.subr.mxu0 0.0
    %1068 = vmatpush1.msra.mxu0 0.0
    %1069 = vmatprep.mubr.f32.mxu0 0.0
    %1070 = vmatmul.mubr.f32.gmra.mrb[0].mxu0 %v1003
    %v1071 = vpop.f32.mrb[0].mxu0
    %v1072 = vadd.f32 0.0, %v1071
    %v1073 = vpop.f32.mrb[0].mxu0
    %1074 = vdwg.mxu0
    %v1075 = vadd.f32 %v833, %v1072
    %1076 = vrot.lane.b32.xlu0 %v263, 104
    %v1077 = vpop.permute.xlu0 %1076
    %1078 = vrot.lane.b32.xlu0 %v263, 72
    %v1079 = vpop.permute.xlu0 %1078
    %v1080 = vsel %vm363, %v1077, 0
    %v1082 = vsel %vm363, %v1079, 0
    %1084 = vmatprep.subr.mxu0 0.0
    %1085 = vmatpush1.xpose.msra.mxu0 %v1082
    %1086 = vmatprep.subr.mxu0 0.0
    %1087 = vmatpush1.xpose.msra.mxu0 0.0
    %1088 = vmatprep.subr.mxu0 0.0
    %1089 = vmatpush1.xpose.msra.mxu0 0.0
    %1090 = vmatprep.subr.mxu0 0.0
    %1091 = vmatpush1.xpose.msra.mxu0 0.0
    %1092 = vmatprep.subr.mxu0 0.0
    %1093 = vmatpush1.xpose.msra.mxu0 0.0
    %1094 = vmatprep.subr.mxu0 0.0
    %1095 = vmatpush1.xpose.msra.mxu0 0.0
    %1096 = vmatprep.subr.mxu0 0.0
    %1097 = vmatpush1.xpose.msra.mxu0 0.0
    %1098 = vmatprep.subr.mxu0 0.0
    %1099 = vmatpush1.xpose.msra.mxu0 0.0
    %1100 = vmatprep.subr.mxu0 0.0
    %1101 = vmatpush1.xpose.msra.mxu0 0.0
    %1102 = vmatprep.subr.mxu0 0.0
    %1103 = vmatpush1.xpose.msra.mxu0 0.0
    %1104 = vmatprep.subr.mxu0 0.0
    %1105 = vmatpush1.xpose.msra.mxu0 0.0
    %1106 = vmatprep.subr.mxu0 0.0
    %1107 = vmatpush1.xpose.msra.mxu0 0.0
    %1108 = vmatprep.subr.mxu0 0.0
    %1109 = vmatpush1.xpose.msra.mxu0 0.0
    %1110 = vmatprep.subr.mxu0 0.0
    %1111 = vmatpush1.xpose.msra.mxu0 0.0
    %1112 = vmatprep.subr.mxu0 0.0
    %1113 = vmatpush1.xpose.msra.mxu0 0.0
    %1114 = vmatprep.subr.mxu0 0.0
    %1115 = vmatpush1.xpose.msra.mxu0 0.0
    %1116 = vmatprep.subr.mxu0 0.0
    %1117 = vmatpush1.xpose.msra.mxu0 0.0
    %1118 = vmatprep.subr.mxu0 0.0
    %1119 = vmatpush1.xpose.msra.mxu0 0.0
    %1120 = vmatprep.subr.mxu0 0.0
    %1121 = vmatpush1.xpose.msra.mxu0 0.0
    %1122 = vmatprep.subr.mxu0 0.0
    %1123 = vmatpush1.xpose.msra.mxu0 0.0
    %1124 = vmatprep.subr.mxu0 0.0
    %1125 = vmatpush1.xpose.msra.mxu0 0.0
    %1126 = vmatprep.subr.mxu0 0.0
    %1127 = vmatpush1.xpose.msra.mxu0 0.0
    %1128 = vmatprep.subr.mxu0 0.0
    %1129 = vmatpush1.xpose.msra.mxu0 0.0
    %1130 = vmatprep.subr.mxu0 0.0
    %1131 = vmatpush1.xpose.msra.mxu0 0.0
    %1132 = vmatprep.subr.mxu0 0.0
    %1133 = vmatpush1.xpose.msra.mxu0 0.0
    %1134 = vmatprep.subr.mxu0 0.0
    %1135 = vmatpush1.xpose.msra.mxu0 0.0
    %1136 = vmatprep.subr.mxu0 0.0
    %1137 = vmatpush1.xpose.msra.mxu0 0.0
    %1138 = vmatprep.subr.mxu0 0.0
    %1139 = vmatpush1.xpose.msra.mxu0 0.0
    %1140 = vmatprep.subr.mxu0 0.0
    %1141 = vmatpush1.xpose.msra.mxu0 0.0
    %1142 = vmatprep.subr.mxu0 0.0
    %1143 = vmatpush1.xpose.msra.mxu0 0.0
    %1144 = vmatprep.subr.mxu0 0.0
    %1145 = vmatpush1.xpose.msra.mxu0 0.0
    %1146 = vmatprep.subr.mxu0 0.0
    %1147 = vmatpush1.xpose.msra.mxu0 0.0
    %1148 = vmatprep.mubr.f32.mxu0 0.0
    %1149 = vmatmul.mubr.f32.gmra.mrb[0].mxu0 %v1080
    %v1150 = vpop.f32.mrb[0].mxu0
    %v1151 = vadd.f32 0.0, %v1150
    %v1152 = vpop.f32.mrb[0].mxu0
    %1153 = vdwg.mxu0
    %v1154 = vmul.f32 %v1151, 0.35355338
    %v1155 = vsel %vm363, %v1154, -inf
    %1156 = vmax.xlane.f32.xlu0 %v1155
    %v1157 = vpop.xlane.xlu0 %1156
    %v1158 = vsub.f32 %v1154, %v1157
    %v1159 = vmul.f32 %v1158, 1.442695
    %v1160 = vpow.pop %v1159
    %v1161 = vsel %vm363, %v1160, 0.0
    %1162 = vadd.xlane.f32.xlu0 %v1161
    %v1163 = vpop.xlane.xlu0 %1162
    %v1164 = vrcp.pop %v1163
    %v1165 = vmul.f32 %v1160, %v1164
    %1166 = vrot.lane.b32.xlu0 %v348, 104
    %v1167 = vpop.permute.xlu0 %1166
    %v1170 = vsel %vm363, %v1165, 0
    %1172 = vmatprep.subr.mxu0 0.0
    %1173 = vmatpush1.msra.mxu0 %v1167
    %1174 = vmatprep.subr.mxu0 0.0
    %1175 = vmatpush1.msra.mxu0 0.0
    %1176 = vmatprep.subr.mxu0 0.0
    %1177 = vmatpush1.msra.mxu0 0.0
    %1178 = vmatprep.subr.mxu0 0.0
    %1179 = vmatpush1.msra.mxu0 0.0
    %1180 = vmatprep.subr.mxu0 0.0
    %1181 = vmatpush1.msra.mxu0 0.0
    %1182 = vmatprep.subr.mxu0 0.0
    %1183 = vmatpush1.msra.mxu0 0.0
    %1184 = vmatprep.subr.mxu0 0.0
    %1185 = vmatpush1.msra.mxu0 0.0
    %1186 = vmatprep.subr.mxu0 0.0
    %1187 = vmatpush1.msra.mxu0 0.0
    %1188 = vmatprep.subr.mxu0 0.0
    %1189 = vmatpush1.msra.mxu0 0.0
    %1190 = vmatprep.subr.mxu0 0.0
    %1191 = vmatpush1.msra.mxu0 0.0
    %1192 = vmatprep.subr.mxu0 0.0
    %1193 = vmatpush1.msra.mxu0 0.0
    %1194 = vmatprep.subr.mxu0 0.0
    %1195 = vmatpush1.msra.mxu0 0.0
    %1196 = vmatprep.subr.mxu0 0.0
    %1197 = vmatpush1.msra.mxu0 0.0
    %1198 = vmatprep.subr.mxu0 0.0
    %1199 = vmatpush1.msra.mxu0 0.0
    %1200 = vmatprep.subr.mxu0 0.0
    %1201 = vmatpush1.msra.mxu0 0.0
    %1202 = vmatprep.subr.mxu0 0.0
    %1203 = vmatpush1.msra.mxu0 0.0
    %1204 = vmatprep.subr.mxu0 0.0
    %1205 = vmatpush1.msra.mxu0 0.0
    %1206 = vmatprep.subr.mxu0 0.0
    %1207 = vmatpush1.msra.mxu0 0.0
    %1208 = vmatprep.subr.mxu0 0.0
    %1209 = vmatpush1.msra.mxu0 0.0
    %1210 = vmatprep.subr.mxu0 0.0
    %1211 = vmatpush1.msra.mxu0 0.0
    %1212 = vmatprep.subr.mxu0 0.0
    %1213 = vmatpush1.msra.mxu0 0.0
    %1214 = vmatprep.subr.mxu0 0.0
    %1215 = vmatpush1.msra.mxu0 0.0
    %1216 = vmatprep.subr.mxu0 0.0
    %1217 = vmatpush1.msra.mxu0 0.0
    %1218 = vmatprep.subr.mxu0 0.0
    %1219 = vmatpush1.msra.mxu0 0.0
    %1220 = vmatprep.subr.mxu0 0.0
    %1221 = vmatpush1.msra.mxu0 0.0
    %1222 = vmatprep.subr.mxu0 0.0
    %1223 = vmatpush1.msra.mxu0 0.0
    %1224 = vmatprep.subr.mxu0 0.0
    %1225 = vmatpush1.msra.mxu0 0.0
    %1226 = vmatprep.subr.mxu0 0.0
    %1227 = vmatpush1.msra.mxu0 0.0
    %1228 = vmatprep.subr.mxu0 0.0
    %1229 = vmatpush1.msra.mxu0 0.0
    %1230 = vmatprep.subr.mxu0 0.0
    %1231 = vmatpush1.msra.mxu0 0.0
    %1232 = vmatprep.subr.mxu0 0.0
    %1233 = vmatpush1.msra.mxu0 0.0
    %1234 = vmatprep.subr.mxu0 0.0
    %1235 = vmatpush1.msra.mxu0 0.0
    %1236 = vmatprep.mubr.f32.mxu0 0.0
    %1237 = vmatmul.mubr.f32.gmra.mrb[0].mxu0 %v1170
    %v1238 = vpop.f32.mrb[0].mxu0
    %v1239 = vadd.f32 0.0, %v1238
    %v1240 = vpop.f32.mrb[0].mxu0
    %1241 = vdwg.mxu0
    %v1243 = vsel %vm363, %v1239, 0
    %1245 = vmatprep.subr.mxu0 0.0
    %1246 = vmatpush1.msra.mxu0 %v359
    %1247 = vmatprep.subr.mxu0 0.0
    %1248 = vmatpush1.msra.mxu0 0.0
    %1249 = vmatprep.subr.mxu0 0.0
    %1250 = vmatpush1.msra.mxu0 0.0
    %1251 = vmatprep.subr.mxu0 0.0
    %1252 = vmatpush1.msra.mxu0 0.0
    %1253 = vmatprep.subr.mxu0 0.0
    %1254 = vmatpush1.msra.mxu0 0.0
    %1255 = vmatprep.subr.mxu0 0.0
    %1256 = vmatpush1.msra.mxu0 0.0
    %1257 = vmatprep.subr.mxu0 0.0
    %1258 = vmatpush1.msra.mxu0 0.0
    %1259 = vmatprep.subr.mxu0 0.0
    %1260 = vmatpush1.msra.mxu0 0.0
    %1261 = vmatprep.subr.mxu0 0.0
    %1262 = vmatpush1.msra.mxu0 0.0
    %1263 = vmatprep.subr.mxu0 0.0
    %1264 = vmatpush1.msra.mxu0 0.0
    %1265 = vmatprep.subr.mxu0 0.0
    %1266 = vmatpush1.msra.mxu0 0.0
    %1267 = vmatprep.subr.mxu0 0.0
    %1268 = vmatpush1.msra.mxu0 0.0
    %1269 = vmatprep.subr.mxu0 0.0
    %1270 = vmatpush1.msra.mxu0 0.0
    %1271 = vmatprep.subr.mxu0 0.0
    %1272 = vmatpush1.msra.mxu0 0.0
    %1273 = vmatprep.subr.mxu0 0.0
    %1274 = vmatpush1.msra.mxu0 0.0
    %1275 = vmatprep.subr.mxu0 0.0
    %1276 = vmatpush1.msra.mxu0 0.0
    %1277 = vmatprep.subr.mxu0 0.0
    %1278 = vmatpush1.msra.mxu0 0.0
    %1279 = vmatprep.subr.mxu0 0.0
    %1280 = vmatpush1.msra.mxu0 0.0
    %1281 = vmatprep.subr.mxu0 0.0
    %1282 = vmatpush1.msra.mxu0 0.0
    %1283 = vmatprep.subr.mxu0 0.0
    %1284 = vmatpush1.msra.mxu0 0.0
    %1285 = vmatprep.subr.mxu0 0.0
    %1286 = vmatpush1.msra.mxu0 0.0
    %1287 = vmatprep.subr.mxu0 0.0
    %1288 = vmatpush1.msra.mxu0 0.0
    %1289 = vmatprep.subr.mxu0 0.0
    %1290 = vmatpush1.msra.mxu0 0.0
    %1291 = vmatprep.subr.mxu0 0.0
    %1292 = vmatpush1.msra.mxu0 0.0
    %1293 = vmatprep.subr.mxu0 0.0
    %1294 = vmatpush1.msra.mxu0 0.0
    %1295 = vmatprep.subr.mxu0 0.0
    %1296 = vmatpush1.msra.mxu0 0.0
    %1297 = vmatprep.subr.mxu0 0.0
    %1298 = vmatpush1.msra.mxu0 0.0
    %1299 = vmatprep.subr.mxu0 0.0
    %1300 = vmatpush1.msra.mxu0 0.0
    %1301 = vmatprep.subr.mxu0 0.0
    %1302 = vmatpush1.msra.mxu0 0.0
    %1303 = vmatprep.subr.mxu0 0.0
    %1304 = vmatpush1.msra.mxu0 0.0
    %1305 = vmatprep.subr.mxu0 0.0
    %1306 = vmatpush1.msra.mxu0 0.0
    %1307 = vmatprep.subr.mxu0 0.0
    %1308 = vmatpush1.msra.mxu0 0.0
    %1309 = vmatprep.mubr.f32.mxu0 0.0
    %1310 = vmatmul.mubr.f32.gmra.mrb[0].mxu0 %v1243
    %v1311 = vpop.f32.mrb[0].mxu0
    %v1312 = vadd.f32 0.0, %v1311
    %v1313 = vpop.f32.mrb[0].mxu0
    %1314 = vdwg.mxu0
    %v1315 = vadd.f32 %v1075, %v1312
    %1316 = vst.msk [vmem:[#allocation2] sm:$0xff] %vm140, %v1315
    %1318 = vrot.lane.b32.xlu0 %v268, 96
    %v1319 = vpop.permute.xlu0 %1318
    %v1320 = vsel %vm363, %v268, 0
    %v1322 = vsel %vm363, %v1319, 0
    %1324 = vmatprep.subr.mxu0 0.0
    %1325 = vmatpush1.xpose.msra.mxu0 %v1322
    %1326 = vmatprep.subr.mxu0 0.0
    %1327 = vmatpush1.xpose.msra.mxu0 0.0
    %1328 = vmatprep.subr.mxu0 0.0
    %1329 = vmatpush1.xpose.msra.mxu0 0.0
    %1330 = vmatprep.subr.mxu0 0.0
    %1331 = vmatpush1.xpose.msra.mxu0 0.0
    %1332 = vmatprep.subr.mxu0 0.0
    %1333 = vmatpush1.xpose.msra.mxu0 0.0
    %1334 = vmatprep.subr.mxu0 0.0
    %1335 = vmatpush1.xpose.msra.mxu0 0.0
    %1336 = vmatprep.subr.mxu0 0.0
    %1337 = vmatpush1.xpose.msra.mxu0 0.0
    %1338 = vmatprep.subr.mxu0 0.0
    %1339 = vmatpush1.xpose.msra.mxu0 0.0
    %1340 = vmatprep.subr.mxu0 0.0
    %1341 = vmatpush1.xpose.msra.mxu0 0.0
    %1342 = vmatprep.subr.mxu0 0.0
    %1343 = vmatpush1.xpose.msra.mxu0 0.0
    %1344 = vmatprep.subr.mxu0 0.0
    %1345 = vmatpush1.xpose.msra.mxu0 0.0
    %1346 = vmatprep.subr.mxu0 0.0
    %1347 = vmatpush1.xpose.msra.mxu0 0.0
    %1348 = vmatprep.subr.mxu0 0.0
    %1349 = vmatpush1.xpose.msra.mxu0 0.0
    %1350 = vmatprep.subr.mxu0 0.0
    %1351 = vmatpush1.xpose.msra.mxu0 0.0
    %1352 = vmatprep.subr.mxu0 0.0
    %1353 = vmatpush1.xpose.msra.mxu0 0.0
    %1354 = vmatprep.subr.mxu0 0.0
    %1355 = vmatpush1.xpose.msra.mxu0 0.0
    %1356 = vmatprep.subr.mxu0 0.0
    %1357 = vmatpush1.xpose.msra.mxu0 0.0
    %1358 = vmatprep.subr.mxu0 0.0
    %1359 = vmatpush1.xpose.msra.mxu0 0.0
    %1360 = vmatprep.subr.mxu0 0.0
    %1361 = vmatpush1.xpose.msra.mxu0 0.0
    %1362 = vmatprep.subr.mxu0 0.0
    %1363 = vmatpush1.xpose.msra.mxu0 0.0
    %1364 = vmatprep.subr.mxu0 0.0
    %1365 = vmatpush1.xpose.msra.mxu0 0.0
    %1366 = vmatprep.subr.mxu0 0.0
    %1367 = vmatpush1.xpose.msra.mxu0 0.0
    %1368 = vmatprep.subr.mxu0 0.0
    %1369 = vmatpush1.xpose.msra.mxu0 0.0
    %1370 = vmatprep.subr.mxu0 0.0
    %1371 = vmatpush1.xpose.msra.mxu0 0.0
    %1372 = vmatprep.subr.mxu0 0.0
    %1373 = vmatpush1.xpose.msra.mxu0 0.0
    %1374 = vmatprep.subr.mxu0 0.0
    %1375 = vmatpush1.xpose.msra.mxu0 0.0
    %1376 = vmatprep.subr.mxu0 0.0
    %1377 = vmatpush1.xpose.msra.mxu0 0.0
    %1378 = vmatprep.subr.mxu0 0.0
    %1379 = vmatpush1.xpose.msra.mxu0 0.0
    %1380 = vmatprep.subr.mxu0 0.0
    %1381 = vmatpush1.xpose.msra.mxu0 0.0
    %1382 = vmatprep.subr.mxu0 0.0
    %1383 = vmatpush1.xpose.msra.mxu0 0.0
    %1384 = vmatprep.subr.mxu0 0.0
    %1385 = vmatpush1.xpose.msra.mxu0 0.0
    %1386 = vmatprep.subr.mxu0 0.0
    %1387 = vmatpush1.xpose.msra.mxu0 0.0
    %1388 = vmatprep.mubr.f32.mxu0 0.0
    %1389 = vmatmul.mubr.f32.gmra.mrb[0].mxu0 %v1320
    %v1390 = vpop.f32.mrb[0].mxu0
    %v1391 = vadd.f32 0.0, %v1390
    %v1392 = vpop.f32.mrb[0].mxu0
    %1393 = vdwg.mxu0
    %v1394 = vmul.f32 %v1391, 0.35355338
    %v1395 = vsel %vm363, %v1394, -inf
    %1396 = vmax.xlane.f32.xlu0 %v1395
    %v1397 = vpop.xlane.xlu0 %1396
    %v1398 = vsub.f32 %v1394, %v1397
    %v1399 = vmul.f32 %v1398, 1.442695
    %v1400 = vpow.pop %v1399
    %v1401 = vsel %vm363, %v1400, 0.0
    %1402 = vadd.xlane.f32.xlu0 %v1401
    %v1403 = vpop.xlane.xlu0 %1402
    %v1404 = vrcp.pop %v1403
    %v1405 = vmul.f32 %v1400, %v1404
    %v1407 = vsel %vm363, %v1405, 0
    %1409 = vmatprep.subr.mxu0 0.0
    %1410 = vmatpush1.msra.mxu0 %v353
    %1411 = vmatprep.subr.mxu0 0.0
    %1412 = vmatpush1.msra.mxu0 0.0
    %1413 = vmatprep.subr.mxu0 0.0
    %1414 = vmatpush1.msra.mxu0 0.0
    %1415 = vmatprep.subr.mxu0 0.0
    %1416 = vmatpush1.msra.mxu0 0.0
    %1417 = vmatprep.subr.mxu0 0.0
    %1418 = vmatpush1.msra.mxu0 0.0
    %1419 = vmatprep.subr.mxu0 0.0
    %1420 = vmatpush1.msra.mxu0 0.0
    %1421 = vmatprep.subr.mxu0 0.0
    %1422 = vmatpush1.msra.mxu0 0.0
    %1423 = vmatprep.subr.mxu0 0.0
    %1424 = vmatpush1.msra.mxu0 0.0
    %1425 = vmatprep.subr.mxu0 0.0
    %1426 = vmatpush1.msra.mxu0 0.0
    %1427 = vmatprep.subr.mxu0 0.0
    %1428 = vmatpush1.msra.mxu0 0.0
    %1429 = vmatprep.subr.mxu0 0.0
    %1430 = vmatpush1.msra.mxu0 0.0
    %1431 = vmatprep.subr.mxu0 0.0
    %1432 = vmatpush1.msra.mxu0 0.0
    %1433 = vmatprep.subr.mxu0 0.0
    %1434 = vmatpush1.msra.mxu0 0.0
    %1435 = vmatprep.subr.mxu0 0.0
    %1436 = vmatpush1.msra.mxu0 0.0
    %1437 = vmatprep.subr.mxu0 0.0
    %1438 = vmatpush1.msra.mxu0 0.0
    %1439 = vmatprep.subr.mxu0 0.0
    %1440 = vmatpush1.msra.mxu0 0.0
    %1441 = vmatprep.subr.mxu0 0.0
    %1442 = vmatpush1.msra.mxu0 0.0
    %1443 = vmatprep.subr.mxu0 0.0
    %1444 = vmatpush1.msra.mxu0 0.0
    %1445 = vmatprep.subr.mxu0 0.0
    %1446 = vmatpush1.msra.mxu0 0.0
    %1447 = vmatprep.subr.mxu0 0.0
    %1448 = vmatpush1.msra.mxu0 0.0
    %1449 = vmatprep.subr.mxu0 0.0
    %1450 = vmatpush1.msra.mxu0 0.0
    %1451 = vmatprep.subr.mxu0 0.0
    %1452 = vmatpush1.msra.mxu0 0.0
    %1453 = vmatprep.subr.mxu0 0.0
    %1454 = vmatpush1.msra.mxu0 0.0
    %1455 = vmatprep.subr.mxu0 0.0
    %1456 = vmatpush1.msra.mxu0 0.0
    %1457 = vmatprep.subr.mxu0 0.0
    %1458 = vmatpush1.msra.mxu0 0.0
    %1459 = vmatprep.subr.mxu0 0.0
    %1460 = vmatpush1.msra.mxu0 0.0
    %1461 = vmatprep.subr.mxu0 0.0
    %1462 = vmatpush1.msra.mxu0 0.0
    %1463 = vmatprep.subr.mxu0 0.0
    %1464 = vmatpush1.msra.mxu0 0.0
    %1465 = vmatprep.subr.mxu0 0.0
    %1466 = vmatpush1.msra.mxu0 0.0
    %1467 = vmatprep.subr.mxu0 0.0
    %1468 = vmatpush1.msra.mxu0 0.0
    %1469 = vmatprep.subr.mxu0 0.0
    %1470 = vmatpush1.msra.mxu0 0.0
    %1471 = vmatprep.subr.mxu0 0.0
    %1472 = vmatpush1.msra.mxu0 0.0
    %1473 = vmatprep.mubr.f32.mxu0 0.0
    %1474 = vmatmul.mubr.f32.gmra.mrb[0].mxu0 %v1407
    %v1475 = vpop.f32.mrb[0].mxu0
    %v1476 = vadd.f32 0.0, %v1475
    %v1477 = vpop.f32.mrb[0].mxu0
    %1478 = vdwg.mxu0
    %1479 = vrot.lane.b32.xlu0 %v268, 120
    %v1480 = vpop.permute.xlu0 %1479
    %1481 = vrot.lane.b32.xlu0 %v268, 88
    %v1482 = vpop.permute.xlu0 %1481
    %v1483 = vsel %vm363, %v1480, 0
    %v1485 = vsel %vm363, %v1482, 0
    %1487 = vmatprep.subr.mxu0 0.0
    %1488 = vmatpush1.xpose.msra.mxu0 %v1485
    %1489 = vmatprep.subr.mxu0 0.0
    %1490 = vmatpush1.xpose.msra.mxu0 0.0
    %1491 = vmatprep.subr.mxu0 0.0
    %1492 = vmatpush1.xpose.msra.mxu0 0.0
    %1493 = vmatprep.subr.mxu0 0.0
    %1494 = vmatpush1.xpose.msra.mxu0 0.0
    %1495 = vmatprep.subr.mxu0 0.0
    %1496 = vmatpush1.xpose.msra.mxu0 0.0
    %1497 = vmatprep.subr.mxu0 0.0
    %1498 = vmatpush1.xpose.msra.mxu0 0.0
    %1499 = vmatprep.subr.mxu0 0.0
    %1500 = vmatpush1.xpose.msra.mxu0 0.0
    %1501 = vmatprep.subr.mxu0 0.0
    %1502 = vmatpush1.xpose.msra.mxu0 0.0
    %1503 = vmatprep.subr.mxu0 0.0
    %1504 = vmatpush1.xpose.msra.mxu0 0.0
    %1505 = vmatprep.subr.mxu0 0.0
    %1506 = vmatpush1.xpose.msra.mxu0 0.0
    %1507 = vmatprep.subr.mxu0 0.0
    %1508 = vmatpush1.xpose.msra.mxu0 0.0
    %1509 = vmatprep.subr.mxu0 0.0
    %1510 = vmatpush1.xpose.msra.mxu0 0.0
    %1511 = vmatprep.subr.mxu0 0.0
    %1512 = vmatpush1.xpose.msra.mxu0 0.0
    %1513 = vmatprep.subr.mxu0 0.0
    %1514 = vmatpush1.xpose.msra.mxu0 0.0
    %1515 = vmatprep.subr.mxu0 0.0
    %1516 = vmatpush1.xpose.msra.mxu0 0.0
    %1517 = vmatprep.subr.mxu0 0.0
    %1518 = vmatpush1.xpose.msra.mxu0 0.0
    %1519 = vmatprep.subr.mxu0 0.0
    %1520 = vmatpush1.xpose.msra.mxu0 0.0
    %1521 = vmatprep.subr.mxu0 0.0
    %1522 = vmatpush1.xpose.msra.mxu0 0.0
    %1523 = vmatprep.subr.mxu0 0.0
    %1524 = vmatpush1.xpose.msra.mxu0 0.0
    %1525 = vmatprep.subr.mxu0 0.0
    %1526 = vmatpush1.xpose.msra.mxu0 0.0
    %1527 = vmatprep.subr.mxu0 0.0
    %1528 = vmatpush1.xpose.msra.mxu0 0.0
    %1529 = vmatprep.subr.mxu0 0.0
    %1530 = vmatpush1.xpose.msra.mxu0 0.0
    %1531 = vmatprep.subr.mxu0 0.0
    %1532 = vmatpush1.xpose.msra.mxu0 0.0
    %1533 = vmatprep.subr.mxu0 0.0
    %1534 = vmatpush1.xpose.msra.mxu0 0.0
    %1535 = vmatprep.subr.mxu0 0.0
    %1536 = vmatpush1.xpose.msra.mxu0 0.0
    %1537 = vmatprep.subr.mxu0 0.0
    %1538 = vmatpush1.xpose.msra.mxu0 0.0
    %1539 = vmatprep.subr.mxu0 0.0
    %1540 = vmatpush1.xpose.msra.mxu0 0.0
    %1541 = vmatprep.subr.mxu0 0.0
    %1542 = vmatpush1.xpose.msra.mxu0 0.0
    %1543 = vmatprep.subr.mxu0 0.0
    %1544 = vmatpush1.xpose.msra.mxu0 0.0
    %1545 = vmatprep.subr.mxu0 0.0
    %1546 = vmatpush1.xpose.msra.mxu0 0.0
    %1547 = vmatprep.subr.mxu0 0.0
    %1548 = vmatpush1.xpose.msra.mxu0 0.0
    %1549 = vmatprep.subr.mxu0 0.0
    %1550 = vmatpush1.xpose.msra.mxu0 0.0
    %1551 = vmatprep.mubr.f32.mxu0 0.0
    %1552 = vmatmul.mubr.f32.gmra.mrb[0].mxu0 %v1483
    %v1553 = vpop.f32.mrb[0].mxu0
    %v1554 = vadd.f32 0.0, %v1553
    %v1555 = vpop.f32.mrb[0].mxu0
    %1556 = vdwg.mxu0
    %v1557 = vmul.f32 %v1554, 0.35355338
    %v1558 = vsel %vm363, %v1557, -inf
    %1559 = vmax.xlane.f32.xlu0 %v1558
    %v1560 = vpop.xlane.xlu0 %1559
    %v1561 = vsub.f32 %v1557, %v1560
    %v1562 = vmul.f32 %v1561, 1.442695
    %v1563 = vpow.pop %v1562
    %v1564 = vsel %vm363, %v1563, 0.0
    %1565 = vadd.xlane.f32.xlu0 %v1564
    %v1566 = vpop.xlane.xlu0 %1565
    %v1567 = vrcp.pop %v1566
    %v1568 = vmul.f32 %v1563, %v1567
    %1570 = vrot.lane.b32.xlu0 %v353, 120
    %v1571 = vpop.permute.xlu0 %1570
    %v1574 = vsel %vm363, %v1568, 0
    %1576 = vmatprep.subr.mxu0 0.0
    %1577 = vmatpush1.msra.mxu0 %v1571
    %1578 = vmatprep.subr.mxu0 0.0
    %1579 = vmatpush1.msra.mxu0 0.0
    %1580 = vmatprep.subr.mxu0 0.0
    %1581 = vmatpush1.msra.mxu0 0.0
    %1582 = vmatprep.subr.mxu0 0.0
    %1583 = vmatpush1.msra.mxu0 0.0
    %1584 = vmatprep.subr.mxu0 0.0
    %1585 = vmatpush1.msra.mxu0 0.0
    %1586 = vmatprep.subr.mxu0 0.0
    %1587 = vmatpush1.msra.mxu0 0.0
    %1588 = vmatprep.subr.mxu0 0.0
    %1589 = vmatpush1.msra.mxu0 0.0
    %1590 = vmatprep.subr.mxu0 0.0
    %1591 = vmatpush1.msra.mxu0 0.0
    %1592 = vmatprep.subr.mxu0 0.0
    %1593 = vmatpush1.msra.mxu0 0.0
    %1594 = vmatprep.subr.mxu0 0.0
    %1595 = vmatpush1.msra.mxu0 0.0
    %1596 = vmatprep.subr.mxu0 0.0
    %1597 = vmatpush1.msra.mxu0 0.0
    %1598 = vmatprep.subr.mxu0 0.0
    %1599 = vmatpush1.msra.mxu0 0.0
    %1600 = vmatprep.subr.mxu0 0.0
    %1601 = vmatpush1.msra.mxu0 0.0
    %1602 = vmatprep.subr.mxu0 0.0
    %1603 = vmatpush1.msra.mxu0 0.0
    %1604 = vmatprep.subr.mxu0 0.0
    %1605 = vmatpush1.msra.mxu0 0.0
    %1606 = vmatprep.subr.mxu0 0.0
    %1607 = vmatpush1.msra.mxu0 0.0
    %1608 = vmatprep.subr.mxu0 0.0
    %1609 = vmatpush1.msra.mxu0 0.0
    %1610 = vmatprep.subr.mxu0 0.0
    %1611 = vmatpush1.msra.mxu0 0.0
    %1612 = vmatprep.subr.mxu0 0.0
    %1613 = vmatpush1.msra.mxu0 0.0
    %1614 = vmatprep.subr.mxu0 0.0
    %1615 = vmatpush1.msra.mxu0 0.0
    %1616 = vmatprep.subr.mxu0 0.0
    %1617 = vmatpush1.msra.mxu0 0.0
    %1618 = vmatprep.subr.mxu0 0.0
    %1619 = vmatpush1.msra.mxu0 0.0
    %1620 = vmatprep.subr.mxu0 0.0
    %1621 = vmatpush1.msra.mxu0 0.0
    %1622 = vmatprep.subr.mxu0 0.0
    %1623 = vmatpush1.msra.mxu0 0.0
    %1624 = vmatprep.subr.mxu0 0.0
    %1625 = vmatpush1.msra.mxu0 0.0
    %1626 = vmatprep.subr.mxu0 0.0
    %1627 = vmatpush1.msra.mxu0 0.0
    %1628 = vmatprep.subr.mxu0 0.0
    %1629 = vmatpush1.msra.mxu0 0.0
    %1630 = vmatprep.subr.mxu0 0.0
    %1631 = vmatpush1.msra.mxu0 0.0
    %1632 = vmatprep.subr.mxu0 0.0
    %1633 = vmatpush1.msra.mxu0 0.0
    %1634 = vmatprep.subr.mxu0 0.0
    %1635 = vmatpush1.msra.mxu0 0.0
    %1636 = vmatprep.subr.mxu0 0.0
    %1637 = vmatpush1.msra.mxu0 0.0
    %1638 = vmatprep.subr.mxu0 0.0
    %1639 = vmatpush1.msra.mxu0 0.0
    %1640 = vmatprep.mubr.f32.mxu0 0.0
    %1641 = vmatmul.mubr.f32.gmra.mrb[0].mxu0 %v1574
    %v1642 = vpop.f32.mrb[0].mxu0
    %v1643 = vadd.f32 0.0, %v1642
    %v1644 = vpop.f32.mrb[0].mxu0
    %1645 = vdwg.mxu0
    %v1647 = vsel %vm363, %v1643, 0
    %1649 = vmatprep.subr.mxu0 0.0
    %1650 = vmatpush1.msra.mxu0 %v357
    %1651 = vmatprep.subr.mxu0 0.0
    %1652 = vmatpush1.msra.mxu0 0.0
    %1653 = vmatprep.subr.mxu0 0.0
    %1654 = vmatpush1.msra.mxu0 0.0
    %1655 = vmatprep.subr.mxu0 0.0
    %1656 = vmatpush1.msra.mxu0 0.0
    %1657 = vmatprep.subr.mxu0 0.0
    %1658 = vmatpush1.msra.mxu0 0.0
    %1659 = vmatprep.subr.mxu0 0.0
    %1660 = vmatpush1.msra.mxu0 0.0
    %1661 = vmatprep.subr.mxu0 0.0
    %1662 = vmatpush1.msra.mxu0 0.0
    %1663 = vmatprep.subr.mxu0 0.0
    %1664 = vmatpush1.msra.mxu0 0.0
    %1665 = vmatprep.subr.mxu0 0.0
    %1666 = vmatpush1.msra.mxu0 0.0
    %1667 = vmatprep.subr.mxu0 0.0
    %1668 = vmatpush1.msra.mxu0 0.0
    %1669 = vmatprep.subr.mxu0 0.0
    %1670 = vmatpush1.msra.mxu0 0.0
    %1671 = vmatprep.subr.mxu0 0.0
    %1672 = vmatpush1.msra.mxu0 0.0
    %1673 = vmatprep.subr.mxu0 0.0
    %1674 = vmatpush1.msra.mxu0 0.0
    %1675 = vmatprep.subr.mxu0 0.0
    %1676 = vmatpush1.msra.mxu0 0.0
    %1677 = vmatprep.subr.mxu0 0.0
    %1678 = vmatpush1.msra.mxu0 0.0
    %1679 = vmatprep.subr.mxu0 0.0
    %1680 = vmatpush1.msra.mxu0 0.0
    %1681 = vmatprep.subr.mxu0 0.0
    %1682 = vmatpush1.msra.mxu0 0.0
    %1683 = vmatprep.subr.mxu0 0.0
    %1684 = vmatpush1.msra.mxu0 0.0
    %1685 = vmatprep.subr.mxu0 0.0
    %1686 = vmatpush1.msra.mxu0 0.0
    %1687 = vmatprep.subr.mxu0 0.0
    %1688 = vmatpush1.msra.mxu0 0.0
    %1689 = vmatprep.subr.mxu0 0.0
    %1690 = vmatpush1.msra.mxu0 0.0
    %1691 = vmatprep.subr.mxu0 0.0
    %1692 = vmatpush1.msra.mxu0 0.0
    %1693 = vmatprep.subr.mxu0 0.0
    %1694 = vmatpush1.msra.mxu0 0.0
    %1695 = vmatprep.subr.mxu0 0.0
    %1696 = vmatpush1.msra.mxu0 0.0
    %1697 = vmatprep.subr.mxu0 0.0
    %1698 = vmatpush1.msra.mxu0 0.0
    %1699 = vmatprep.subr.mxu0 0.0
    %1700 = vmatpush1.msra.mxu0 0.0
    %1701 = vmatprep.subr.mxu0 0.0
    %1702 = vmatpush1.msra.mxu0 0.0
    %1703 = vmatprep.subr.mxu0 0.0
    %1704 = vmatpush1.msra.mxu0 0.0
    %1705 = vmatprep.subr.mxu0 0.0
    %1706 = vmatpush1.msra.mxu0 0.0
    %1707 = vmatprep.subr.mxu0 0.0
    %1708 = vmatpush1.msra.mxu0 0.0
    %1709 = vmatprep.subr.mxu0 0.0
    %1710 = vmatpush1.msra.mxu0 0.0
    %1711 = vmatprep.subr.mxu0 0.0
    %1712 = vmatpush1.msra.mxu0 0.0
    %1713 = vmatprep.mubr.f32.mxu0 0.0
    %1714 = vmatmul.mubr.f32.gmra.mrb[0].mxu0 %v1647
    %v1715 = vpop.f32.mrb[0].mxu0
    %v1716 = vadd.f32 0.0, %v1715
    %v1717 = vpop.f32.mrb[0].mxu0
    %1718 = vdwg.mxu0
    %v1720 = vsel %vm363, %v1476, 0
    %1722 = vmatprep.subr.mxu0 0.0
    %1723 = vmatpush1.msra.mxu0 %v356
    %1724 = vmatprep.subr.mxu0 0.0
    %1725 = vmatpush1.msra.mxu0 0.0
    %1726 = vmatprep.subr.mxu0 0.0
    %1727 = vmatpush1.msra.mxu0 0.0
    %1728 = vmatprep.subr.mxu0 0.0
    %1729 = vmatpush1.msra.mxu0 0.0
    %1730 = vmatprep.subr.mxu0 0.0
    %1731 = vmatpush1.msra.mxu0 0.0
    %1732 = vmatprep.subr.mxu0 0.0
    %1733 = vmatpush1.msra.mxu0 0.0
    %1734 = vmatprep.subr.mxu0 0.0
    %1735 = vmatpush1.msra.mxu0 0.0
    %1736 = vmatprep.subr.mxu0 0.0
    %1737 = vmatpush1.msra.mxu0 0.0
    %1738 = vmatprep.subr.mxu0 0.0
    %1739 = vmatpush1.msra.mxu0 0.0
    %1740 = vmatprep.subr.mxu0 0.0
    %1741 = vmatpush1.msra.mxu0 0.0
    %1742 = vmatprep.subr.mxu0 0.0
    %1743 = vmatpush1.msra.mxu0 0.0
    %1744 = vmatprep.subr.mxu0 0.0
    %1745 = vmatpush1.msra.mxu0 0.0
    %1746 = vmatprep.subr.mxu0 0.0
    %1747 = vmatpush1.msra.mxu0 0.0
    %1748 = vmatprep.subr.mxu0 0.0
    %1749 = vmatpush1.msra.mxu0 0.0
    %1750 = vmatprep.subr.mxu0 0.0
    %1751 = vmatpush1.msra.mxu0 0.0
    %1752 = vmatprep.subr.mxu0 0.0
    %1753 = vmatpush1.msra.mxu0 0.0
    %1754 = vmatprep.subr.mxu0 0.0
    %1755 = vmatpush1.msra.mxu0 0.0
    %1756 = vmatprep.subr.mxu0 0.0
    %1757 = vmatpush1.msra.mxu0 0.0
    %1758 = vmatprep.subr.mxu0 0.0
    %1759 = vmatpush1.msra.mxu0 0.0
    %1760 = vmatprep.subr.mxu0 0.0
    %1761 = vmatpush1.msra.mxu0 0.0
    %1762 = vmatprep.subr.mxu0 0.0
    %1763 = vmatpush1.msra.mxu0 0.0
    %1764 = vmatprep.subr.mxu0 0.0
    %1765 = vmatpush1.msra.mxu0 0.0
    %1766 = vmatprep.subr.mxu0 0.0
    %1767 = vmatpush1.msra.mxu0 0.0
    %1768 = vmatprep.subr.mxu0 0.0
    %1769 = vmatpush1.msra.mxu0 0.0
    %1770 = vmatprep.subr.mxu0 0.0
    %1771 = vmatpush1.msra.mxu0 0.0
    %1772 = vmatprep.subr.mxu0 0.0
    %1773 = vmatpush1.msra.mxu0 0.0
    %1774 = vmatprep.subr.mxu0 0.0
    %1775 = vmatpush1.msra.mxu0 0.0
    %1776 = vmatprep.subr.mxu0 0.0
    %1777 = vmatpush1.msra.mxu0 0.0
    %1778 = vmatprep.subr.mxu0 0.0
    %1779 = vmatpush1.msra.mxu0 0.0
    %1780 = vmatprep.subr.mxu0 0.0
    %1781 = vmatpush1.msra.mxu0 0.0
    %1782 = vmatprep.subr.mxu0 0.0
    %1783 = vmatpush1.msra.mxu0 0.0
    %1784 = vmatprep.subr.mxu0 0.0
    %1785 = vmatpush1.msra.mxu0 0.0
    %1786 = vmatprep.mubr.f32.mxu0 0.0
    %1787 = vmatmul.mubr.f32.gmra.mrb[0].mxu0 %v1720
    %v1788 = vpop.f32.mrb[0].mxu0
    %v1789 = vadd.f32 %v1716, %v1788
    %v1790 = vpop.f32.mrb[0].mxu0
    %1791 = vdwg.mxu0
    %1792 = vrot.lane.b32.xlu0 %v268, 112
    %v1793 = vpop.permute.xlu0 %1792
    %1794 = vrot.lane.b32.xlu0 %v268, 80
    %v1795 = vpop.permute.xlu0 %1794
    %v1796 = vsel %vm363, %v1793, 0
    %v1798 = vsel %vm363, %v1795, 0
    %1800 = vmatprep.subr.mxu0 0.0
    %1801 = vmatpush1.xpose.msra.mxu0 %v1798
    %1802 = vmatprep.subr.mxu0 0.0
    %1803 = vmatpush1.xpose.msra.mxu0 0.0
    %1804 = vmatprep.subr.mxu0 0.0
    %1805 = vmatpush1.xpose.msra.mxu0 0.0
    %1806 = vmatprep.subr.mxu0 0.0
    %1807 = vmatpush1.xpose.msra.mxu0 0.0
    %1808 = vmatprep.subr.mxu0 0.0
    %1809 = vmatpush1.xpose.msra.mxu0 0.0
    %1810 = vmatprep.subr.mxu0 0.0
    %1811 = vmatpush1.xpose.msra.mxu0 0.0
    %1812 = vmatprep.subr.mxu0 0.0
    %1813 = vmatpush1.xpose.msra.mxu0 0.0
    %1814 = vmatprep.subr.mxu0 0.0
    %1815 = vmatpush1.xpose.msra.mxu0 0.0
    %1816 = vmatprep.subr.mxu0 0.0
    %1817 = vmatpush1.xpose.msra.mxu0 0.0
    %1818 = vmatprep.subr.mxu0 0.0
    %1819 = vmatpush1.xpose.msra.mxu0 0.0
    %1820 = vmatprep.subr.mxu0 0.0
    %1821 = vmatpush1.xpose.msra.mxu0 0.0
    %1822 = vmatprep.subr.mxu0 0.0
    %1823 = vmatpush1.xpose.msra.mxu0 0.0
    %1824 = vmatprep.subr.mxu0 0.0
    %1825 = vmatpush1.xpose.msra.mxu0 0.0
    %1826 = vmatprep.subr.mxu0 0.0
    %1827 = vmatpush1.xpose.msra.mxu0 0.0
    %1828 = vmatprep.subr.mxu0 0.0
    %1829 = vmatpush1.xpose.msra.mxu0 0.0
    %1830 = vmatprep.subr.mxu0 0.0
    %1831 = vmatpush1.xpose.msra.mxu0 0.0
    %1832 = vmatprep.subr.mxu0 0.0
    %1833 = vmatpush1.xpose.msra.mxu0 0.0
    %1834 = vmatprep.subr.mxu0 0.0
    %1835 = vmatpush1.xpose.msra.mxu0 0.0
    %1836 = vmatprep.subr.mxu0 0.0
    %1837 = vmatpush1.xpose.msra.mxu0 0.0
    %1838 = vmatprep.subr.mxu0 0.0
    %1839 = vmatpush1.xpose.msra.mxu0 0.0
    %1840 = vmatprep.subr.mxu0 0.0
    %1841 = vmatpush1.xpose.msra.mxu0 0.0
    %1842 = vmatprep.subr.mxu0 0.0
    %1843 = vmatpush1.xpose.msra.mxu0 0.0
    %1844 = vmatprep.subr.mxu0 0.0
    %1845 = vmatpush1.xpose.msra.mxu0 0.0
    %1846 = vmatprep.subr.mxu0 0.0
    %1847 = vmatpush1.xpose.msra.mxu0 0.0
    %1848 = vmatprep.subr.mxu0 0.0
    %1849 = vmatpush1.xpose.msra.mxu0 0.0
    %1850 = vmatprep.subr.mxu0 0.0
    %1851 = vmatpush1.xpose.msra.mxu0 0.0
    %1852 = vmatprep.subr.mxu0 0.0
    %1853 = vmatpush1.xpose.msra.mxu0 0.0
    %1854 = vmatprep.subr.mxu0 0.0
    %1855 = vmatpush1.xpose.msra.mxu0 0.0
    %1856 = vmatprep.subr.mxu0 0.0
    %1857 = vmatpush1.xpose.msra.mxu0 0.0
    %1858 = vmatprep.subr.mxu0 0.0
    %1859 = vmatpush1.xpose.msra.mxu0 0.0
    %1860 = vmatprep.subr.mxu0 0.0
    %1861 = vmatpush1.xpose.msra.mxu0 0.0
    %1862 = vmatprep.subr.mxu0 0.0
    %1863 = vmatpush1.xpose.msra.mxu0 0.0
    %1864 = vmatprep.mubr.f32.mxu0 0.0
    %1865 = vmatmul.mubr.f32.gmra.mrb[0].mxu0 %v1796
    %v1866 = vpop.f32.mrb[0].mxu0
    %v1867 = vadd.f32 0.0, %v1866
    %v1868 = vpop.f32.mrb[0].mxu0
    %1869 = vdwg.mxu0
    %v1870 = vmul.f32 %v1867, 0.35355338
    %v1871 = vsel %vm363, %v1870, -inf
    %1872 = vmax.xlane.f32.xlu0 %v1871
    %v1873 = vpop.xlane.xlu0 %1872
    %v1874 = vsub.f32 %v1870, %v1873
    %v1875 = vmul.f32 %v1874, 1.442695
    %v1876 = vpow.pop %v1875
    %v1877 = vsel %vm363, %v1876, 0.0
    %1878 = vadd.xlane.f32.xlu0 %v1877
    %v1879 = vpop.xlane.xlu0 %1878
    %v1880 = vrcp.pop %v1879
    %v1881 = vmul.f32 %v1876, %v1880
    %1882 = vrot.lane.b32.xlu0 %v353, 112
    %v1883 = vpop.permute.xlu0 %1882
    %v1886 = vsel %vm363, %v1881, 0
    %1888 = vmatprep.subr.mxu0 0.0
    %1889 = vmatpush1.msra.mxu0 %v1883
    %1890 = vmatprep.subr.mxu0 0.0
    %1891 = vmatpush1.msra.mxu0 0.0
    %1892 = vmatprep.subr.mxu0 0.0
    %1893 = vmatpush1.msra.mxu0 0.0
    %1894 = vmatprep.subr.mxu0 0.0
    %1895 = vmatpush1.msra.mxu0 0.0
    %1896 = vmatprep.subr.mxu0 0.0
    %1897 = vmatpush1.msra.mxu0 0.0
    %1898 = vmatprep.subr.mxu0 0.0
    %1899 = vmatpush1.msra.mxu0 0.0
    %1900 = vmatprep.subr.mxu0 0.0
    %1901 = vmatpush1.msra.mxu0 0.0
    %1902 = vmatprep.subr.mxu0 0.0
    %1903 = vmatpush1.msra.mxu0 0.0
    %1904 = vmatprep.subr.mxu0 0.0
    %1905 = vmatpush1.msra.mxu0 0.0
    %1906 = vmatprep.subr.mxu0 0.0
    %1907 = vmatpush1.msra.mxu0 0.0
    %1908 = vmatprep.subr.mxu0 0.0
    %1909 = vmatpush1.msra.mxu0 0.0
    %1910 = vmatprep.subr.mxu0 0.0
    %1911 = vmatpush1.msra.mxu0 0.0
    %1912 = vmatprep.subr.mxu0 0.0
    %1913 = vmatpush1.msra.mxu0 0.0
    %1914 = vmatprep.subr.mxu0 0.0
    %1915 = vmatpush1.msra.mxu0 0.0
    %1916 = vmatprep.subr.mxu0 0.0
    %1917 = vmatpush1.msra.mxu0 0.0
    %1918 = vmatprep.subr.mxu0 0.0
    %1919 = vmatpush1.msra.mxu0 0.0
    %1920 = vmatprep.subr.mxu0 0.0
    %1921 = vmatpush1.msra.mxu0 0.0
    %1922 = vmatprep.subr.mxu0 0.0
    %1923 = vmatpush1.msra.mxu0 0.0
    %1924 = vmatprep.subr.mxu0 0.0
    %1925 = vmatpush1.msra.mxu0 0.0
    %1926 = vmatprep.subr.mxu0 0.0
    %1927 = vmatpush1.msra.mxu0 0.0
    %1928 = vmatprep.subr.mxu0 0.0
    %1929 = vmatpush1.msra.mxu0 0.0
    %1930 = vmatprep.subr.mxu0 0.0
    %1931 = vmatpush1.msra.mxu0 0.0
    %1932 = vmatprep.subr.mxu0 0.0
    %1933 = vmatpush1.msra.mxu0 0.0
    %1934 = vmatprep.subr.mxu0 0.0
    %1935 = vmatpush1.msra.mxu0 0.0
    %1936 = vmatprep.subr.mxu0 0.0
    %1937 = vmatpush1.msra.mxu0 0.0
    %1938 = vmatprep.subr.mxu0 0.0
    %1939 = vmatpush1.msra.mxu0 0.0
    %1940 = vmatprep.subr.mxu0 0.0
    %1941 = vmatpush1.msra.mxu0 0.0
    %1942 = vmatprep.subr.mxu0 0.0
    %1943 = vmatpush1.msra.mxu0 0.0
    %1944 = vmatprep.subr.mxu0 0.0
    %1945 = vmatpush1.msra.mxu0 0.0
    %1946 = vmatprep.subr.mxu0 0.0
    %1947 = vmatpush1.msra.mxu0 0.0
    %1948 = vmatprep.subr.mxu0 0.0
    %1949 = vmatpush1.msra.mxu0 0.0
    %1950 = vmatprep.subr.mxu0 0.0
    %1951 = vmatpush1.msra.mxu0 0.0
    %1952 = vmatprep.mubr.f32.mxu0 0.0
    %1953 = vmatmul.mubr.f32.gmra.mrb[0].mxu0 %v1886
    %v1954 = vpop.f32.mrb[0].mxu0
    %v1955 = vadd.f32 0.0, %v1954
    %v1956 = vpop.f32.mrb[0].mxu0
    %1957 = vdwg.mxu0
    %v1959 = vsel %vm363, %v1955, 0
    %1961 = vmatprep.subr.mxu0 0.0
    %1962 = vmatpush1.msra.mxu0 %v358
    %1963 = vmatprep.subr.mxu0 0.0
    %1964 = vmatpush1.msra.mxu0 0.0
    %1965 = vmatprep.subr.mxu0 0.0
    %1966 = vmatpush1.msra.mxu0 0.0
    %1967 = vmatprep.subr.mxu0 0.0
    %1968 = vmatpush1.msra.mxu0 0.0
    %1969 = vmatprep.subr.mxu0 0.0
    %1970 = vmatpush1.msra.mxu0 0.0
    %1971 = vmatprep.subr.mxu0 0.0
    %1972 = vmatpush1.msra.mxu0 0.0
    %1973 = vmatprep.subr.mxu0 0.0
    %1974 = vmatpush1.msra.mxu0 0.0
    %1975 = vmatprep.subr.mxu0 0.0
    %1976 = vmatpush1.msra.mxu0 0.0
    %1977 = vmatprep.subr.mxu0 0.0
    %1978 = vmatpush1.msra.mxu0 0.0
    %1979 = vmatprep.subr.mxu0 0.0
    %1980 = vmatpush1.msra.mxu0 0.0
    %1981 = vmatprep.subr.mxu0 0.0
    %1982 = vmatpush1.msra.mxu0 0.0
    %1983 = vmatprep.subr.mxu0 0.0
    %1984 = vmatpush1.msra.mxu0 0.0
    %1985 = vmatprep.subr.mxu0 0.0
    %1986 = vmatpush1.msra.mxu0 0.0
    %1987 = vmatprep.subr.mxu0 0.0
    %1988 = vmatpush1.msra.mxu0 0.0
    %1989 = vmatprep.subr.mxu0 0.0
    %1990 = vmatpush1.msra.mxu0 0.0
    %1991 = vmatprep.subr.mxu0 0.0
    %1992 = vmatpush1.msra.mxu0 0.0
    %1993 = vmatprep.subr.mxu0 0.0
    %1994 = vmatpush1.msra.mxu0 0.0
    %1995 = vmatprep.subr.mxu0 0.0
    %1996 = vmatpush1.msra.mxu0 0.0
    %1997 = vmatprep.subr.mxu0 0.0
    %1998 = vmatpush1.msra.mxu0 0.0
    %1999 = vmatprep.subr.mxu0 0.0
    %2000 = vmatpush1.msra.mxu0 0.0
    %2001 = vmatprep.subr.mxu0 0.0
    %2002 = vmatpush1.msra.mxu0 0.0
    %2003 = vmatprep.subr.mxu0 0.0
    %2004 = vmatpush1.msra.mxu0 0.0
    %2005 = vmatprep.subr.mxu0 0.0
    %2006 = vmatpush1.msra.mxu0 0.0
    %2007 = vmatprep.subr.mxu0 0.0
    %2008 = vmatpush1.msra.mxu0 0.0
    %2009 = vmatprep.subr.mxu0 0.0
    %2010 = vmatpush1.msra.mxu0 0.0
    %2011 = vmatprep.subr.mxu0 0.0
    %2012 = vmatpush1.msra.mxu0 0.0
    %2013 = vmatprep.subr.mxu0 0.0
    %2014 = vmatpush1.msra.mxu0 0.0
    %2015 = vmatprep.subr.mxu0 0.0
    %2016 = vmatpush1.msra.mxu0 0.0
    %2017 = vmatprep.subr.mxu0 0.0
    %2018 = vmatpush1.msra.mxu0 0.0
    %2019 = vmatprep.subr.mxu0 0.0
    %2020 = vmatpush1.msra.mxu0 0.0
    %2021 = vmatprep.subr.mxu0 0.0
    %2022 = vmatpush1.msra.mxu0 0.0
    %2023 = vmatprep.subr.mxu0 0.0
    %2024 = vmatpush1.msra.mxu0 0.0
    %2025 = vmatprep.mubr.f32.mxu0 0.0
    %2026 = vmatmul.mubr.f32.gmra.mrb[0].mxu0 %v1959
    %v2027 = vpop.f32.mrb[0].mxu0
    %v2028 = vadd.f32 0.0, %v2027
    %v2029 = vpop.f32.mrb[0].mxu0
    %2030 = vdwg.mxu0
    %v2031 = vadd.f32 %v1789, %v2028
    %2032 = vrot.lane.b32.xlu0 %v268, 104
    %v2033 = vpop.permute.xlu0 %2032
    %2034 = vrot.lane.b32.xlu0 %v268, 72
    %v2035 = vpop.permute.xlu0 %2034
    %v2036 = vsel %vm363, %v2033, 0
    %v2038 = vsel %vm363, %v2035, 0
    %2040 = vmatprep.subr.mxu0 0.0
    %2041 = vmatpush1.xpose.msra.mxu0 %v2038
    %2042 = vmatprep.subr.mxu0 0.0
    %2043 = vmatpush1.xpose.msra.mxu0 0.0
    %2044 = vmatprep.subr.mxu0 0.0
    %2045 = vmatpush1.xpose.msra.mxu0 0.0
    %2046 = vmatprep.subr.mxu0 0.0
    %2047 = vmatpush1.xpose.msra.mxu0 0.0
    %2048 = vmatprep.subr.mxu0 0.0
    %2049 = vmatpush1.xpose.msra.mxu0 0.0
    %2050 = vmatprep.subr.mxu0 0.0
    %2051 = vmatpush1.xpose.msra.mxu0 0.0
    %2052 = vmatprep.subr.mxu0 0.0
    %2053 = vmatpush1.xpose.msra.mxu0 0.0
    %2054 = vmatprep.subr.mxu0 0.0
    %2055 = vmatpush1.xpose.msra.mxu0 0.0
    %2056 = vmatprep.subr.mxu0 0.0
    %2057 = vmatpush1.xpose.msra.mxu0 0.0
    %2058 = vmatprep.subr.mxu0 0.0
    %2059 = vmatpush1.xpose.msra.mxu0 0.0
    %2060 = vmatprep.subr.mxu0 0.0
    %2061 = vmatpush1.xpose.msra.mxu0 0.0
    %2062 = vmatprep.subr.mxu0 0.0
    %2063 = vmatpush1.xpose.msra.mxu0 0.0
    %2064 = vmatprep.subr.mxu0 0.0
    %2065 = vmatpush1.xpose.msra.mxu0 0.0
    %2066 = vmatprep.subr.mxu0 0.0
    %2067 = vmatpush1.xpose.msra.mxu0 0.0
    %2068 = vmatprep.subr.mxu0 0.0
    %2069 = vmatpush1.xpose.msra.mxu0 0.0
    %2070 = vmatprep.subr.mxu0 0.0
    %2071 = vmatpush1.xpose.msra.mxu0 0.0
    %2072 = vmatprep.subr.mxu0 0.0
    %2073 = vmatpush1.xpose.msra.mxu0 0.0
    %2074 = vmatprep.subr.mxu0 0.0
    %2075 = vmatpush1.xpose.msra.mxu0 0.0
    %2076 = vmatprep.subr.mxu0 0.0
    %2077 = vmatpush1.xpose.msra.mxu0 0.0
    %2078 = vmatprep.subr.mxu0 0.0
    %2079 = vmatpush1.xpose.msra.mxu0 0.0
    %2080 = vmatprep.subr.mxu0 0.0
    %2081 = vmatpush1.xpose.msra.mxu0 0.0
    %2082 = vmatprep.subr.mxu0 0.0
    %2083 = vmatpush1.xpose.msra.mxu0 0.0
    %2084 = vmatprep.subr.mxu0 0.0
    %2085 = vmatpush1.xpose.msra.mxu0 0.0
    %2086 = vmatprep.subr.mxu0 0.0
    %2087 = vmatpush1.xpose.msra.mxu0 0.0
    %2088 = vmatprep.subr.mxu0 0.0
    %2089 = vmatpush1.xpose.msra.mxu0 0.0
    %2090 = vmatprep.subr.mxu0 0.0
    %2091 = vmatpush1.xpose.msra.mxu0 0.0
    %2092 = vmatprep.subr.mxu0 0.0
    %2093 = vmatpush1.xpose.msra.mxu0 0.0
    %2094 = vmatprep.subr.mxu0 0.0
    %2095 = vmatpush1.xpose.msra.mxu0 0.0
    %2096 = vmatprep.subr.mxu0 0.0
    %2097 = vmatpush1.xpose.msra.mxu0 0.0
    %2098 = vmatprep.subr.mxu0 0.0
    %2099 = vmatpush1.xpose.msra.mxu0 0.0
    %2100 = vmatprep.subr.mxu0 0.0
    %2101 = vmatpush1.xpose.msra.mxu0 0.0
    %2102 = vmatprep.subr.mxu0 0.0
    %2103 = vmatpush1.xpose.msra.mxu0 0.0
    %2104 = vmatprep.mubr.f32.mxu0 0.0
    %2105 = vmatmul.mubr.f32.gmra.mrb[0].mxu0 %v2036
    %v2106 = vpop.f32.mrb[0].mxu0
    %v2107 = vadd.f32 0.0, %v2106
    %v2108 = vpop.f32.mrb[0].mxu0
    %2109 = vdwg.mxu0
    %v2110 = vmul.f32 %v2107, 0.35355338
    %v2111 = vsel %vm363, %v2110, -inf
    %2112 = vmax.xlane.f32.xlu0 %v2111
    %v2113 = vpop.xlane.xlu0 %2112
    %v2114 = vsub.f32 %v2110, %v2113
    %v2115 = vmul.f32 %v2114, 1.442695
    %v2116 = vpow.pop %v2115
    %v2117 = vsel %vm363, %v2116, 0.0
    %2118 = vadd.xlane.f32.xlu0 %v2117
    %v2119 = vpop.xlane.xlu0 %2118
    %v2120 = vrcp.pop %v2119
    %v2121 = vmul.f32 %v2116, %v2120
    %2122 = vrot.lane.b32.xlu0 %v353, 104
    %v2123 = vpop.permute.xlu0 %2122
    %v2126 = vsel %vm363, %v2121, 0
    %2128 = vmatprep.subr.mxu0 0.0
    %2129 = vmatpush1.msra.mxu0 %v2123
    %2130 = vmatprep.subr.mxu0 0.0
    %2131 = vmatpush1.msra.mxu0 0.0
    %2132 = vmatprep.subr.mxu0 0.0
    %2133 = vmatpush1.msra.mxu0 0.0
    %2134 = vmatprep.subr.mxu0 0.0
    %2135 = vmatpush1.msra.mxu0 0.0
    %2136 = vmatprep.subr.mxu0 0.0
    %2137 = vmatpush1.msra.mxu0 0.0
    %2138 = vmatprep.subr.mxu0 0.0
    %2139 = vmatpush1.msra.mxu0 0.0
    %2140 = vmatprep.subr.mxu0 0.0
    %2141 = vmatpush1.msra.mxu0 0.0
    %2142 = vmatprep.subr.mxu0 0.0
    %2143 = vmatpush1.msra.mxu0 0.0
    %2144 = vmatprep.subr.mxu0 0.0
    %2145 = vmatpush1.msra.mxu0 0.0
    %2146 = vmatprep.subr.mxu0 0.0
    %2147 = vmatpush1.msra.mxu0 0.0
    %2148 = vmatprep.subr.mxu0 0.0
    %2149 = vmatpush1.msra.mxu0 0.0
    %2150 = vmatprep.subr.mxu0 0.0
    %2151 = vmatpush1.msra.mxu0 0.0
    %2152 = vmatprep.subr.mxu0 0.0
    %2153 = vmatpush1.msra.mxu0 0.0
    %2154 = vmatprep.subr.mxu0 0.0
    %2155 = vmatpush1.msra.mxu0 0.0
    %2156 = vmatprep.subr.mxu0 0.0
    %2157 = vmatpush1.msra.mxu0 0.0
    %2158 = vmatprep.subr.mxu0 0.0
    %2159 = vmatpush1.msra.mxu0 0.0
    %2160 = vmatprep.subr.mxu0 0.0
    %2161 = vmatpush1.msra.mxu0 0.0
    %2162 = vmatprep.subr.mxu0 0.0
    %2163 = vmatpush1.msra.mxu0 0.0
    %2164 = vmatprep.subr.mxu0 0.0
    %2165 = vmatpush1.msra.mxu0 0.0
    %2166 = vmatprep.subr.mxu0 0.0
    %2167 = vmatpush1.msra.mxu0 0.0
    %2168 = vmatprep.subr.mxu0 0.0
    %2169 = vmatpush1.msra.mxu0 0.0
    %2170 = vmatprep.subr.mxu0 0.0
    %2171 = vmatpush1.msra.mxu0 0.0
    %2172 = vmatprep.subr.mxu0 0.0
    %2173 = vmatpush1.msra.mxu0 0.0
    %2174 = vmatprep.subr.mxu0 0.0
    %2175 = vmatpush1.msra.mxu0 0.0
    %2176 = vmatprep.subr.mxu0 0.0
    %2177 = vmatpush1.msra.mxu0 0.0
    %2178 = vmatprep.subr.mxu0 0.0
    %2179 = vmatpush1.msra.mxu0 0.0
    %2180 = vmatprep.subr.mxu0 0.0
    %2181 = vmatpush1.msra.mxu0 0.0
    %2182 = vmatprep.subr.mxu0 0.0
    %2183 = vmatpush1.msra.mxu0 0.0
    %2184 = vmatprep.subr.mxu0 0.0
    %2185 = vmatpush1.msra.mxu0 0.0
    %2186 = vmatprep.subr.mxu0 0.0
    %2187 = vmatpush1.msra.mxu0 0.0
    %2188 = vmatprep.subr.mxu0 0.0
    %2189 = vmatpush1.msra.mxu0 0.0
    %2190 = vmatprep.subr.mxu0 0.0
    %2191 = vmatpush1.msra.mxu0 0.0
    %2192 = vmatprep.mubr.f32.mxu0 0.0
    %2193 = vmatmul.mubr.f32.gmra.mrb[0].mxu0 %v2126
    %v2194 = vpop.f32.mrb[0].mxu0
    %v2195 = vadd.f32 0.0, %v2194
    %v2196 = vpop.f32.mrb[0].mxu0
    %2197 = vdwg.mxu0
    %v2199 = vsel %vm363, %v2195, 0
    %2201 = vmatprep.subr.mxu0 0.0
    %2202 = vmatpush1.msra.mxu0 %v359
    %2203 = vmatprep.subr.mxu0 0.0
    %2204 = vmatpush1.msra.mxu0 0.0
    %2205 = vmatprep.subr.mxu0 0.0
    %2206 = vmatpush1.msra.mxu0 0.0
    %2207 = vmatprep.subr.mxu0 0.0
    %2208 = vmatpush1.msra.mxu0 0.0
    %2209 = vmatprep.subr.mxu0 0.0
    %2210 = vmatpush1.msra.mxu0 0.0
    %2211 = vmatprep.subr.mxu0 0.0
    %2212 = vmatpush1.msra.mxu0 0.0
    %2213 = vmatprep.subr.mxu0 0.0
    %2214 = vmatpush1.msra.mxu0 0.0
    %2215 = vmatprep.subr.mxu0 0.0
    %2216 = vmatpush1.msra.mxu0 0.0
    %2217 = vmatprep.subr.mxu0 0.0
    %2218 = vmatpush1.msra.mxu0 0.0
    %2219 = vmatprep.subr.mxu0 0.0
    %2220 = vmatpush1.msra.mxu0 0.0
    %2221 = vmatprep.subr.mxu0 0.0
    %2222 = vmatpush1.msra.mxu0 0.0
    %2223 = vmatprep.subr.mxu0 0.0
    %2224 = vmatpush1.msra.mxu0 0.0
    %2225 = vmatprep.subr.mxu0 0.0
    %2226 = vmatpush1.msra.mxu0 0.0
    %2227 = vmatprep.subr.mxu0 0.0
    %2228 = vmatpush1.msra.mxu0 0.0
    %2229 = vmatprep.subr.mxu0 0.0
    %2230 = vmatpush1.msra.mxu0 0.0
    %2231 = vmatprep.subr.mxu0 0.0
    %2232 = vmatpush1.msra.mxu0 0.0
    %2233 = vmatprep.subr.mxu0 0.0
    %2234 = vmatpush1.msra.mxu0 0.0
    %2235 = vmatprep.subr.mxu0 0.0
    %2236 = vmatpush1.msra.mxu0 0.0
    %2237 = vmatprep.subr.mxu0 0.0
    %2238 = vmatpush1.msra.mxu0 0.0
    %2239 = vmatprep.subr.mxu0 0.0
    %2240 = vmatpush1.msra.mxu0 0.0
    %2241 = vmatprep.subr.mxu0 0.0
    %2242 = vmatpush1.msra.mxu0 0.0
    %2243 = vmatprep.subr.mxu0 0.0
    %2244 = vmatpush1.msra.mxu0 0.0
    %2245 = vmatprep.subr.mxu0 0.0
    %2246 = vmatpush1.msra.mxu0 0.0
    %2247 = vmatprep.subr.mxu0 0.0
    %2248 = vmatpush1.msra.mxu0 0.0
    %2249 = vmatprep.subr.mxu0 0.0
    %2250 = vmatpush1.msra.mxu0 0.0
    %2251 = vmatprep.subr.mxu0 0.0
    %2252 = vmatpush1.msra.mxu0 0.0
    %2253 = vmatprep.subr.mxu0 0.0
    %2254 = vmatpush1.msra.mxu0 0.0
    %2255 = vmatprep.subr.mxu0 0.0
    %2256 = vmatpush1.msra.mxu0 0.0
    %2257 = vmatprep.subr.mxu0 0.0
    %2258 = vmatpush1.msra.mxu0 0.0
    %2259 = vmatprep.subr.mxu0 0.0
    %2260 = vmatpush1.msra.mxu0 0.0
    %2261 = vmatprep.subr.mxu0 0.0
    %2262 = vmatpush1.msra.mxu0 0.0
    %2263 = vmatprep.subr.mxu0 0.0
    %2264 = vmatpush1.msra.mxu0 0.0
    %2265 = vmatprep.mubr.f32.mxu0 0.0
    %2266 = vmatmul.mubr.f32.gmra.mrb[0].mxu0 %v2199
    %v2267 = vpop.f32.mrb[0].mxu0
    %v2268 = vadd.f32 0.0, %v2267
    %v2269 = vpop.f32.mrb[0].mxu0
    %2270 = vdwg.mxu0
    %v2271 = vadd.f32 %v2031, %v2268
    %2272 = vst.msk [vmem:[#allocation2 + $0x8] sm:$0xff] %vm140, %v2271
    %v2273 = vld [vmem:[#allocation2] sm:$0xff]
    %v2274 = vld [vmem:[#allocation2 + $0x8] sm:$0xff]
    %v2275 = vadd.f32 %v126, %v2273
    %v2276 = vadd.f32 %v127, %v2274
    %v2277 = vld [vmem:[%s6] sm:$0x1]
    %v2278 = vld [vmem:[#allocation3] sm:$0x1]
    %v2279 = vsel %vm140, %v2275, 0.0
    %2280 = vadd.xlane.f32.xlu0 %v2279
    %v2281 = vpop.xlane.xlu0 %2280
    %v2282 = vsel %vm140, %v2276, 0.0
    %2283 = vadd.xlane.f32.xlu0 %v2282
    %v2284 = vpop.xlane.xlu0 %2283
    %v2285 = vmul.f32 %v2281, %v147
    %v2286 = vmul.f32 %v2284, %v147
    %v2287 = vsub.f32 %v2275, %v2285
    %v2288 = vsub.f32 %v2276, %v2286
    %v2289 = vmul.f32 %v2287, %v2287
    %v2290 = vmul.f32 %v2288, %v2288
    %v2291 = vsel %vm140, %v2289, 0.0
    %2292 = vadd.xlane.f32.xlu0 %v2291
    %v2293 = vpop.xlane.xlu0 %2292
    %v2294 = vsel %vm140, %v2290, 0.0
    %2295 = vadd.xlane.f32.xlu0 %v2294
    %v2296 = vpop.xlane.xlu0 %2295
    %v2297 = vmul.f32 %v2293, %v147
    %v2298 = vmul.f32 %v2296, %v147
    %v2299 = vadd.f32 %v2297, 1e-05
    %v2300 = vadd.f32 %v2298, 1e-05
    %v2301 = vrsqrt.pop %v2299
    %v2302 = vrsqrt.pop %v2300
    %v2303 = vmul.f32 %v2287, %v2301
    %v2304 = vmul.f32 %v2288, %v2302
    %v2306 = vlaneseq
    %v2307 = vshrl.u32 %v2306, 7
    %v2308 = vsub.s32 0, %v2307
    %v2309 = vrot.slane %v2277, %v2308
    %v2311 = vmul.f32 %v2303, %v2309
    %v2312 = vmul.f32 %v2304, %v2309
    %v2314 = vlaneseq
    %v2315 = vshrl.u32 %v2314, 7
    %v2316 = vsub.s32 0, %v2315
    %v2317 = vrot.slane %v2278, %v2316
    %v2319 = vadd.f32 %v2311, %v2317
    %v2320 = vadd.f32 %v2312, %v2317
    %v2321 = vadd.f32 %v2319, %v132
    %v2322 = vadd.f32 %v2320, %v133
    %v2323 = vld [vmem:[%s13] sm:$0xff]
    %v2324 = vld [vmem:[%s13 + $0x8] sm:$0xff]
    %v2325 = vld [vmem:[%s13 + $0x10] sm:$0xff]
    %v2326 = vld [vmem:[%s13 + $0x18] sm:$0xff]
    %v2328 = vsel %vm140, %v2321, 0
    %v2331 = vsel %vm140, %v2322, 0
    %2333 = vmatprep.subr.mxu0 0.0
    %2334 = vmatpush1.msra.mxu0 %v2323
    %2335 = vmatprep.subr.mxu0 0.0
    %2336 = vmatpush1.msra.mxu0 %v2324
    %2337 = vmatprep.subr.mxu0 0.0
    %2338 = vmatpush1.msra.mxu0 %v2325
    %2339 = vmatprep.subr.mxu0 0.0
    %2340 = vmatpush1.msra.mxu0 %v2326
    %2341 = vmatprep.subr.mxu0 0.0
    %2342 = vmatpush1.msra.mxu0 0.0
    %2343 = vmatprep.subr.mxu0 0.0
    %2344 = vmatpush1.msra.mxu0 0.0
    %2345 = vmatprep.subr.mxu0 0.0
    %2346 = vmatpush1.msra.mxu0 0.0
    %2347 = vmatprep.subr.mxu0 0.0
    %2348 = vmatpush1.msra.mxu0 0.0
    %2349 = vmatprep.subr.mxu0 0.0
    %2350 = vmatpush1.msra.mxu0 0.0
    %2351 = vmatprep.subr.mxu0 0.0
    %2352 = vmatpush1.msra.mxu0 0.0
    %2353 = vmatprep.subr.mxu0 0.0
    %2354 = vmatpush1.msra.mxu0 0.0
    %2355 = vmatprep.subr.mxu0 0.0
    %2356 = vmatpush1.msra.mxu0 0.0
    %2357 = vmatprep.subr.mxu0 0.0
    %2358 = vmatpush1.msra.mxu0 0.0
    %2359 = vmatprep.subr.mxu0 0.0
    %2360 = vmatpush1.msra.mxu0 0.0
    %2361 = vmatprep.subr.mxu0 0.0
    %2362 = vmatpush1.msra.mxu0 0.0
    %2363 = vmatprep.subr.mxu0 0.0
    %2364 = vmatpush1.msra.mxu0 0.0
    %2365 = vmatprep.subr.mxu0 0.0
    %2366 = vmatpush1.msra.mxu0 0.0
    %2367 = vmatprep.subr.mxu0 0.0
    %2368 = vmatpush1.msra.mxu0 0.0
    %2369 = vmatprep.subr.mxu0 0.0
    %2370 = vmatpush1.msra.mxu0 0.0
    %2371 = vmatprep.subr.mxu0 0.0
    %2372 = vmatpush1.msra.mxu0 0.0
    %2373 = vmatprep.subr.mxu0 0.0
    %2374 = vmatpush1.msra.mxu0 0.0
    %2375 = vmatprep.subr.mxu0 0.0
    %2376 = vmatpush1.msra.mxu0 0.0
    %2377 = vmatprep.subr.mxu0 0.0
    %2378 = vmatpush1.msra.mxu0 0.0
    %2379 = vmatprep.subr.mxu0 0.0
    %2380 = vmatpush1.msra.mxu0 0.0
    %2381 = vmatprep.subr.mxu0 0.0
    %2382 = vmatpush1.msra.mxu0 0.0
    %2383 = vmatprep.subr.mxu0 0.0
    %2384 = vmatpush1.msra.mxu0 0.0
    %2385 = vmatprep.subr.mxu0 0.0
    %2386 = vmatpush1.msra.mxu0 0.0
    %2387 = vmatprep.subr.mxu0 0.0
    %2388 = vmatpush1.msra.mxu0 0.0
    %2389 = vmatprep.subr.mxu0 0.0
    %2390 = vmatpush1.msra.mxu0 0.0
    %2391 = vmatprep.subr.mxu0 0.0
    %2392 = vmatpush1.msra.mxu0 0.0
    %2393 = vmatprep.subr.mxu0 0.0
    %2394 = vmatpush1.msra.mxu0 0.0
    %2395 = vmatprep.subr.mxu0 0.0
    %2396 = vmatpush1.msra.mxu0 0.0
    %2397 = vmatprep.mubr.f32.mxu0 0.0
    %2398 = vmatmul.mubr.f32.gmra.mrb[0].mxu0 %v2328
    %v2399 = vpop.f32.mrb[0].mxu0
    %v2400 = vadd.f32 0.0, %v2399
    %v2401 = vpop.f32.mrb[0].mxu0
    %2402 = vmatprep.mubr.f32.mxu0 0.0
    %2403 = vmatmul.mubr.f32.gmra.mrb[0].mxu0 %v2331
    %v2404 = vpop.f32.mrb[0].mxu0
    %v2405 = vadd.f32 0.0, %v2404
    %v2406 = vpop.f32.mrb[0].mxu0
    %2407 = vdwg.mxu0
    %v2408 = vadd.f32 %v128, %v134
    %v2409 = vadd.f32 %v129, %v135
    %v2410 = vadd.f32 %v130, %v136
    %v2411 = vadd.f32 %v131, %v137
    %v2412 = vld [vmem:[%s14] sm:$0xff]
    %v2413 = vld [vmem:[%s14 + $0x8] sm:$0xff]
    %v2414 = vld [vmem:[%s14 + $0x10] sm:$0xff]
    %v2415 = vld [vmem:[%s14 + $0x18] sm:$0xff]
    %v2417 = vsel %vm140, %v2408, 0
    %v2420 = vsel %vm140, %v2409, 0
    %v2423 = vsel %vm140, %v2410, 0
    %v2426 = vsel %vm140, %v2411, 0
    %2428 = vmatprep.subr.mxu0 0.0
    %2429 = vmatpush1.msra.mxu0 %v2412
    %2430 = vmatprep.subr.mxu0 0.0
    %2431 = vmatpush1.msra.mxu0 %v2413
    %2432 = vmatprep.subr.mxu0 0.0
    %2433 = vmatpush1.msra.mxu0 %v2414
    %2434 = vmatprep.subr.mxu0 0.0
    %2435 = vmatpush1.msra.mxu0 %v2415
    %2436 = vmatprep.subr.mxu0 0.0
    %2437 = vmatpush1.msra.mxu0 0.0
    %2438 = vmatprep.subr.mxu0 0.0
    %2439 = vmatpush1.msra.mxu0 0.0
    %2440 = vmatprep.subr.mxu0 0.0
    %2441 = vmatpush1.msra.mxu0 0.0
    %2442 = vmatprep.subr.mxu0 0.0
    %2443 = vmatpush1.msra.mxu0 0.0
    %2444 = vmatprep.subr.mxu0 0.0
    %2445 = vmatpush1.msra.mxu0 0.0
    %2446 = vmatprep.subr.mxu0 0.0
    %2447 = vmatpush1.msra.mxu0 0.0
    %2448 = vmatprep.subr.mxu0 0.0
    %2449 = vmatpush1.msra.mxu0 0.0
    %2450 = vmatprep.subr.mxu0 0.0
    %2451 = vmatpush1.msra.mxu0 0.0
    %2452 = vmatprep.subr.mxu0 0.0
    %2453 = vmatpush1.msra.mxu0 0.0
    %2454 = vmatprep.subr.mxu0 0.0
    %2455 = vmatpush1.msra.mxu0 0.0
    %2456 = vmatprep.subr.mxu0 0.0
    %2457 = vmatpush1.msra.mxu0 0.0
    %2458 = vmatprep.subr.mxu0 0.0
    %2459 = vmatpush1.msra.mxu0 0.0
    %2460 = vmatprep.subr.mxu0 0.0
    %2461 = vmatpush1.msra.mxu0 0.0
    %2462 = vmatprep.subr.mxu0 0.0
    %2463 = vmatpush1.msra.mxu0 0.0
    %2464 = vmatprep.subr.mxu0 0.0
    %2465 = vmatpush1.msra.mxu0 0.0
    %2466 = vmatprep.subr.mxu0 0.0
    %2467 = vmatpush1.msra.mxu0 0.0
    %2468 = vmatprep.subr.mxu0 0.0
    %2469 = vmatpush1.msra.mxu0 0.0
    %2470 = vmatprep.subr.mxu0 0.0
    %2471 = vmatpush1.msra.mxu0 0.0
    %2472 = vmatprep.subr.mxu0 0.0
    %2473 = vmatpush1.msra.mxu0 0.0
    %2474 = vmatprep.subr.mxu0 0.0
    %2475 = vmatpush1.msra.mxu0 0.0
    %2476 = vmatprep.subr.mxu0 0.0
    %2477 = vmatpush1.msra.mxu0 0.0
    %2478 = vmatprep.subr.mxu0 0.0
    %2479 = vmatpush1.msra.mxu0 0.0
    %2480 = vmatprep.subr.mxu0 0.0
    %2481 = vmatpush1.msra.mxu0 0.0
    %2482 = vmatprep.subr.mxu0 0.0
    %2483 = vmatpush1.msra.mxu0 0.0
    %2484 = vmatprep.subr.mxu0 0.0
    %2485 = vmatpush1.msra.mxu0 0.0
    %2486 = vmatprep.subr.mxu0 0.0
    %2487 = vmatpush1.msra.mxu0 0.0
    %2488 = vmatprep.subr.mxu0 0.0
    %2489 = vmatpush1.msra.mxu0 0.0
    %2490 = vmatprep.subr.mxu0 0.0
    %2491 = vmatpush1.msra.mxu0 0.0
    %2492 = vmatprep.mubr.f32.mxu0 0.0
    %2493 = vmatmul.mubr.f32.gmra.mrb[0].mxu0 %v2417
    %v2494 = vpop.f32.mrb[0].mxu0
    %v2495 = vadd.f32 0.0, %v2494
    %v2496 = vpop.f32.mrb[0].mxu0
    %2497 = vmatprep.mubr.f32.mxu0 0.0
    %2498 = vmatmul.mubr.f32.gmra.mrb[0].mxu0 %v2420
    %v2499 = vpop.f32.mrb[0].mxu0
    %v2500 = vadd.f32 0.0, %v2499
    %v2501 = vpop.f32.mrb[0].mxu0
    %2502 = vmatprep.mubr.f32.mxu0 0.0
    %2503 = vmatmul.mubr.f32.gmra.mrb[0].mxu0 %v2423
    %v2504 = vpop.f32.mrb[0].mxu0
    %v2505 = vadd.f32 0.0, %v2504
    %v2506 = vpop.f32.mrb[0].mxu0
    %2507 = vmatprep.mubr.f32.mxu0 0.0
    %2508 = vmatmul.mubr.f32.gmra.mrb[0].mxu0 %v2426
    %v2509 = vpop.f32.mrb[0].mxu0
    %v2510 = vadd.f32 0.0, %v2509
    %v2511 = vpop.f32.mrb[0].mxu0
    %2512 = vdwg.mxu0
    %v2513 = vld [vmem:[%s15] sm:$0xff]
    %v2514 = vld [vmem:[%s15 + $0x8] sm:$0xff]
    %v2515 = vld [vmem:[%s15 + $0x10] sm:$0xff]
    %v2516 = vld [vmem:[%s15 + $0x18] sm:$0xff]
    %v2518 = vsel %vm140, %v128, 0
    %v2521 = vsel %vm140, %v129, 0
    %v2524 = vsel %vm140, %v130, 0
    %v2527 = vsel %vm140, %v131, 0
    %2529 = vmatprep.subr.mxu0 0.0
    %2530 = vmatpush1.msra.mxu0 %v2513
    %2531 = vmatprep.subr.mxu0 0.0
    %2532 = vmatpush1.msra.mxu0 %v2514
    %2533 = vmatprep.subr.mxu0 0.0
    %2534 = vmatpush1.msra.mxu0 %v2515
    %2535 = vmatprep.subr.mxu0 0.0
    %2536 = vmatpush1.msra.mxu0 %v2516
    %2537 = vmatprep.subr.mxu0 0.0
    %2538 = vmatpush1.msra.mxu0 0.0
    %2539 = vmatprep.subr.mxu0 0.0
    %2540 = vmatpush1.msra.mxu0 0.0
    %2541 = vmatprep.subr.mxu0 0.0
    %2542 = vmatpush1.msra.mxu0 0.0
    %2543 = vmatprep.subr.mxu0 0.0
    %2544 = vmatpush1.msra.mxu0 0.0
    %2545 = vmatprep.subr.mxu0 0.0
    %2546 = vmatpush1.msra.mxu0 0.0
    %2547 = vmatprep.subr.mxu0 0.0
    %2548 = vmatpush1.msra.mxu0 0.0
    %2549 = vmatprep.subr.mxu0 0.0
    %2550 = vmatpush1.msra.mxu0 0.0
    %2551 = vmatprep.subr.mxu0 0.0
    %2552 = vmatpush1.msra.mxu0 0.0
    %2553 = vmatprep.subr.mxu0 0.0
    %2554 = vmatpush1.msra.mxu0 0.0
    %2555 = vmatprep.subr.mxu0 0.0
    %2556 = vmatpush1.msra.mxu0 0.0
    %2557 = vmatprep.subr.mxu0 0.0
    %2558 = vmatpush1.msra.mxu0 0.0
    %2559 = vmatprep.subr.mxu0 0.0
    %2560 = vmatpush1.msra.mxu0 0.0
    %2561 = vmatprep.subr.mxu0 0.0
    %2562 = vmatpush1.msra.mxu0 0.0
    %2563 = vmatprep.subr.mxu0 0.0
    %2564 = vmatpush1.msra.mxu0 0.0
    %2565 = vmatprep.subr.mxu0 0.0
    %2566 = vmatpush1.msra.mxu0 0.0
    %2567 = vmatprep.subr.mxu0 0.0
    %2568 = vmatpush1.msra.mxu0 0.0
    %2569 = vmatprep.subr.mxu0 0.0
    %2570 = vmatpush1.msra.mxu0 0.0
    %2571 = vmatprep.subr.mxu0 0.0
    %2572 = vmatpush1.msra.mxu0 0.0
    %2573 = vmatprep.subr.mxu0 0.0
    %2574 = vmatpush1.msra.mxu0 0.0
    %2575 = vmatprep.subr.mxu0 0.0
    %2576 = vmatpush1.msra.mxu0 0.0
    %2577 = vmatprep.subr.mxu0 0.0
    %2578 = vmatpush1.msra.mxu0 0.0
    %2579 = vmatprep.subr.mxu0 0.0
    %2580 = vmatpush1.msra.mxu0 0.0
    %2581 = vmatprep.subr.mxu0 0.0
    %2582 = vmatpush1.msra.mxu0 0.0
    %2583 = vmatprep.subr.mxu0 0.0
    %2584 = vmatpush1.msra.mxu0 0.0
    %2585 = vmatprep.subr.mxu0 0.0
    %2586 = vmatpush1.msra.mxu0 0.0
    %2587 = vmatprep.subr.mxu0 0.0
    %2588 = vmatpush1.msra.mxu0 0.0
    %2589 = vmatprep.subr.mxu0 0.0
    %2590 = vmatpush1.msra.mxu0 0.0
    %2591 = vmatprep.subr.mxu0 0.0
    %2592 = vmatpush1.msra.mxu0 0.0
    %2593 = vmatprep.mubr.f32.mxu0 0.0
    %2594 = vmatmul.mubr.f32.gmra.mrb[0].mxu0 %v2518
    %v2595 = vpop.f32.mrb[0].mxu0
    %v2596 = vadd.f32 0.0, %v2595
    %v2597 = vpop.f32.mrb[0].mxu0
    %2598 = vmatprep.mubr.f32.mxu0 0.0
    %2599 = vmatmul.mubr.f32.gmra.mrb[0].mxu0 %v2521
    %v2600 = vpop.f32.mrb[0].mxu0
    %v2601 = vadd.f32 0.0, %v2600
    %v2602 = vpop.f32.mrb[0].mxu0
    %2603 = vmatprep.mubr.f32.mxu0 0.0
    %2604 = vmatmul.mubr.f32.gmra.mrb[0].mxu0 %v2524
    %v2605 = vpop.f32.mrb[0].mxu0
    %v2606 = vadd.f32 0.0, %v2605
    %v2607 = vpop.f32.mrb[0].mxu0
    %2608 = vmatprep.mubr.f32.mxu0 0.0
    %2609 = vmatmul.mubr.f32.gmra.mrb[0].mxu0 %v2527
    %v2610 = vpop.f32.mrb[0].mxu0
    %v2611 = vadd.f32 0.0, %v2610
    %v2612 = vpop.f32.mrb[0].mxu0
    %2613 = vdwg.mxu0
    %v2614 = vld [vmem:[%s16] sm:$0xff]
    %v2615 = vld [vmem:[%s16 + $0x8] sm:$0xff]
    %v2616 = vld [vmem:[%s16 + $0x10] sm:$0xff]
    %v2617 = vld [vmem:[%s16 + $0x18] sm:$0xff]
    %v2619 = vsel %vm363, %v2400, 0
    %v2622 = vsel %vm363, %v2495, 0
    %v2625 = vsel %vm363, %v2500, 0
    %2627 = vmatprep.subr.mxu0 0.0
    %2628 = vmatpush1.xpose.msra.mxu0 %v2622
    %2629 = vmatprep.subr.mxu0 0.0
    %2630 = vmatpush1.xpose.msra.mxu0 %v2625
    %2631 = vmatprep.subr.mxu0 0.0
    %2632 = vmatpush1.xpose.msra.mxu0 0.0
    %2633 = vmatprep.subr.mxu0 0.0
    %2634 = vmatpush1.xpose.msra.mxu0 0.0
    %2635 = vmatprep.subr.mxu0 0.0
    %2636 = vmatpush1.xpose.msra.mxu0 0.0
    %2637 = vmatprep.subr.mxu0 0.0
    %2638 = vmatpush1.xpose.msra.mxu0 0.0
    %2639 = vmatprep.subr.mxu0 0.0
    %2640 = vmatpush1.xpose.msra.mxu0 0.0
    %2641 = vmatprep.subr.mxu0 0.0
    %2642 = vmatpush1.xpose.msra.mxu0 0.0
    %2643 = vmatprep.subr.mxu0 0.0
    %2644 = vmatpush1.xpose.msra.mxu0 0.0
    %2645 = vmatprep.subr.mxu0 0.0
    %2646 = vmatpush1.xpose.msra.mxu0 0.0
    %2647 = vmatprep.subr.mxu0 0.0
    %2648 = vmatpush1.xpose.msra.mxu0 0.0
    %2649 = vmatprep.subr.mxu0 0.0
    %2650 = vmatpush1.xpose.msra.mxu0 0.0
    %2651 = vmatprep.subr.mxu0 0.0
    %2652 = vmatpush1.xpose.msra.mxu0 0.0
    %2653 = vmatprep.subr.mxu0 0.0
    %2654 = vmatpush1.xpose.msra.mxu0 0.0
    %2655 = vmatprep.subr.mxu0 0.0
    %2656 = vmatpush1.xpose.msra.mxu0 0.0
    %2657 = vmatprep.subr.mxu0 0.0
    %2658 = vmatpush1.xpose.msra.mxu0 0.0
    %2659 = vmatprep.subr.mxu0 0.0
    %2660 = vmatpush1.xpose.msra.mxu0 0.0
    %2661 = vmatprep.subr.mxu0 0.0
    %2662 = vmatpush1.xpose.msra.mxu0 0.0
    %2663 = vmatprep.subr.mxu0 0.0
    %2664 = vmatpush1.xpose.msra.mxu0 0.0
    %2665 = vmatprep.subr.mxu0 0.0
    %2666 = vmatpush1.xpose.msra.mxu0 0.0
    %2667 = vmatprep.subr.mxu0 0.0
    %2668 = vmatpush1.xpose.msra.mxu0 0.0
    %2669 = vmatprep.subr.mxu0 0.0
    %2670 = vmatpush1.xpose.msra.mxu0 0.0
    %2671 = vmatprep.subr.mxu0 0.0
    %2672 = vmatpush1.xpose.msra.mxu0 0.0
    %2673 = vmatprep.subr.mxu0 0.0
    %2674 = vmatpush1.xpose.msra.mxu0 0.0
    %2675 = vmatprep.subr.mxu0 0.0
    %2676 = vmatpush1.xpose.msra.mxu0 0.0
    %2677 = vmatprep.subr.mxu0 0.0
    %2678 = vmatpush1.xpose.msra.mxu0 0.0
    %2679 = vmatprep.subr.mxu0 0.0
    %2680 = vmatpush1.xpose.msra.mxu0 0.0
    %2681 = vmatprep.subr.mxu0 0.0
    %2682 = vmatpush1.xpose.msra.mxu0 0.0
    %2683 = vmatprep.subr.mxu0 0.0
    %2684 = vmatpush1.xpose.msra.mxu0 0.0
    %2685 = vmatprep.subr.mxu0 0.0
    %2686 = vmatpush1.xpose.msra.mxu0 0.0
    %2687 = vmatprep.subr.mxu0 0.0
    %2688 = vmatpush1.xpose.msra.mxu0 0.0
    %2689 = vmatprep.subr.mxu0 0.0
    %2690 = vmatpush1.xpose.msra.mxu0 0.0
    %2691 = vmatprep.mubr.f32.mxu0 0.0
    %2692 = vmatmul.mubr.f32.gmra.mrb[0].mxu0 %v2619
    %v2693 = vpop.f32.mrb[0].mxu0
    %v2694 = vadd.f32 0.0, %v2693
    %v2695 = vpop.f32.mrb[0].mxu0
    %2696 = vdwg.mxu0
    %v2697 = vmul.f32 %v2694, 0.35355338
    %vm2698 = vcmask 130048
    %v2699 = vsel %vm2698, %v2697, -inf
    %2700 = vmax.xlane.f32.xlu0 %v2699
    %v2701 = vpop.xlane.xlu0 %2700
    %v2702 = vsub.f32 %v2697, %v2701
    %v2703 = vmul.f32 %v2702, 1.442695
    %v2704 = vpow.pop %v2703
    %v2705 = vsel %vm2698, %v2704, 0.0
    %2706 = vadd.xlane.f32.xlu0 %v2705
    %v2707 = vpop.xlane.xlu0 %2706
    %v2708 = vrcp.pop %v2707
    %v2709 = vmul.f32 %v2704, %v2708
    %v2711 = vsel %vm2698, %v2709, 0
    %2713 = vmatprep.subr.mxu0 0.0
    %2714 = vmatpush1.msra.mxu0 %v2596
    %2715 = vmatprep.subr.mxu0 0.0
    %2716 = vmatpush1.msra.mxu0 %v2601
    %2717 = vmatprep.subr.mxu0 0.0
    %2718 = vmatpush1.msra.mxu0 0.0
    %2719 = vmatprep.subr.mxu0 0.0
    %2720 = vmatpush1.msra.mxu0 0.0
    %2721 = vmatprep.subr.mxu0 0.0
    %2722 = vmatpush1.msra.mxu0 0.0
    %2723 = vmatprep.subr.mxu0 0.0
    %2724 = vmatpush1.msra.mxu0 0.0
    %2725 = vmatprep.subr.mxu0 0.0
    %2726 = vmatpush1.msra.mxu0 0.0
    %2727 = vmatprep.subr.mxu0 0.0
    %2728 = vmatpush1.msra.mxu0 0.0
    %2729 = vmatprep.subr.mxu0 0.0
    %2730 = vmatpush1.msra.mxu0 0.0
    %2731 = vmatprep.subr.mxu0 0.0
    %2732 = vmatpush1.msra.mxu0 0.0
    %2733 = vmatprep.subr.mxu0 0.0
    %2734 = vmatpush1.msra.mxu0 0.0
    %2735 = vmatprep.subr.mxu0 0.0
    %2736 = vmatpush1.msra.mxu0 0.0
    %2737 = vmatprep.subr.mxu0 0.0
    %2738 = vmatpush1.msra.mxu0 0.0
    %2739 = vmatprep.subr.mxu0 0.0
    %2740 = vmatpush1.msra.mxu0 0.0
    %2741 = vmatprep.subr.mxu0 0.0
    %2742 = vmatpush1.msra.mxu0 0.0
    %2743 = vmatprep.subr.mxu0 0.0
    %2744 = vmatpush1.msra.mxu0 0.0
    %2745 = vmatprep.subr.mxu0 0.0
    %2746 = vmatpush1.msra.mxu0 0.0
    %2747 = vmatprep.subr.mxu0 0.0
    %2748 = vmatpush1.msra.mxu0 0.0
    %2749 = vmatprep.subr.mxu0 0.0
    %2750 = vmatpush1.msra.mxu0 0.0
    %2751 = vmatprep.subr.mxu0 0.0
    %2752 = vmatpush1.msra.mxu0 0.0
    %2753 = vmatprep.subr.mxu0 0.0
    %2754 = vmatpush1.msra.mxu0 0.0
    %2755 = vmatprep.subr.mxu0 0.0
    %2756 = vmatpush1.msra.mxu0 0.0
    %2757 = vmatprep.subr.mxu0 0.0
    %2758 = vmatpush1.msra.mxu0 0.0
    %2759 = vmatprep.subr.mxu0 0.0
    %2760 = vmatpush1.msra.mxu0 0.0
    %2761 = vmatprep.subr.mxu0 0.0
    %2762 = vmatpush1.msra.mxu0 0.0
    %2763 = vmatprep.subr.mxu0 0.0
    %2764 = vmatpush1.msra.mxu0 0.0
    %2765 = vmatprep.subr.mxu0 0.0
    %2766 = vmatpush1.msra.mxu0 0.0
    %2767 = vmatprep.subr.mxu0 0.0
    %2768 = vmatpush1.msra.mxu0 0.0
    %2769 = vmatprep.subr.mxu0 0.0
    %2770 = vmatpush1.msra.mxu0 0.0
    %2771 = vmatprep.subr.mxu0 0.0
    %2772 = vmatpush1.msra.mxu0 0.0
    %2773 = vmatprep.subr.mxu0 0.0
    %2774 = vmatpush1.msra.mxu0 0.0
    %2775 = vmatprep.subr.mxu0 0.0
    %2776 = vmatpush1.msra.mxu0 0.0
    %2777 = vmatprep.mubr.f32.mxu0 0.0
    %2778 = vmatmul.mubr.f32.gmra.mrb[0].mxu0 %v2711
    %v2779 = vpop.f32.mrb[0].mxu0
    %v2780 = vadd.f32 0.0, %v2779
    %v2781 = vpop.f32.mrb[0].mxu0
    %2782 = vdwg.mxu0
    %2783 = vrot.lane.b32.xlu0 %v2400, 120
    %v2784 = vpop.permute.xlu0 %2783
    %2785 = vrot.lane.b32.xlu0 %v2495, 120
    %v2786 = vpop.permute.xlu0 %2785
    %2787 = vrot.lane.b32.xlu0 %v2500, 120
    %v2788 = vpop.permute.xlu0 %2787
    %v2789 = vsel %vm363, %v2784, 0
    %v2791 = vsel %vm363, %v2786, 0
    %v2793 = vsel %vm363, %v2788, 0
    %2795 = vmatprep.subr.mxu0 0.0
    %2796 = vmatpush1.xpose.msra.mxu0 %v2791
    %2797 = vmatprep.subr.mxu0 0.0
    %2798 = vmatpush1.xpose.msra.mxu0 %v2793
    %2799 = vmatprep.subr.mxu0 0.0
    %2800 = vmatpush1.xpose.msra.mxu0 0.0
    %2801 = vmatprep.subr.mxu0 0.0
    %2802 = vmatpush1.xpose.msra.mxu0 0.0
    %2803 = vmatprep.subr.mxu0 0.0
    %2804 = vmatpush1.xpose.msra.mxu0 0.0
    %2805 = vmatprep.subr.mxu0 0.0
    %2806 = vmatpush1.xpose.msra.mxu0 0.0
    %2807 = vmatprep.subr.mxu0 0.0
    %2808 = vmatpush1.xpose.msra.mxu0 0.0
    %2809 = vmatprep.subr.mxu0 0.0
    %2810 = vmatpush1.xpose.msra.mxu0 0.0
    %2811 = vmatprep.subr.mxu0 0.0
    %2812 = vmatpush1.xpose.msra.mxu0 0.0
    %2813 = vmatprep.subr.mxu0 0.0
    %2814 = vmatpush1.xpose.msra.mxu0 0.0
    %2815 = vmatprep.subr.mxu0 0.0
    %2816 = vmatpush1.xpose.msra.mxu0 0.0
    %2817 = vmatprep.subr.mxu0 0.0
    %2818 = vmatpush1.xpose.msra.mxu0 0.0
    %2819 = vmatprep.subr.mxu0 0.0
    %2820 = vmatpush1.xpose.msra.mxu0 0.0
    %2821 = vmatprep.subr.mxu0 0.0
    %2822 = vmatpush1.xpose.msra.mxu0 0.0
    %2823 = vmatprep.subr.mxu0 0.0
    %2824 = vmatpush1.xpose.msra.mxu0 0.0
    %2825 = vmatprep.subr.mxu0 0.0
    %2826 = vmatpush1.xpose.msra.mxu0 0.0
    %2827 = vmatprep.subr.mxu0 0.0
    %2828 = vmatpush1.xpose.msra.mxu0 0.0
    %2829 = vmatprep.subr.mxu0 0.0
    %2830 = vmatpush1.xpose.msra.mxu0 0.0
    %2831 = vmatprep.subr.mxu0 0.0
    %2832 = vmatpush1.xpose.msra.mxu0 0.0
    %2833 = vmatprep.subr.mxu0 0.0
    %2834 = vmatpush1.xpose.msra.mxu0 0.0
    %2835 = vmatprep.subr.mxu0 0.0
    %2836 = vmatpush1.xpose.msra.mxu0 0.0
    %2837 = vmatprep.subr.mxu0 0.0
    %2838 = vmatpush1.xpose.msra.mxu0 0.0
    %2839 = vmatprep.subr.mxu0 0.0
    %2840 = vmatpush1.xpose.msra.mxu0 0.0
    %2841 = vmatprep.subr.mxu0 0.0
    %2842 = vmatpush1.xpose.msra.mxu0 0.0
    %2843 = vmatprep.subr.mxu0 0.0
    %2844 = vmatpush1.xpose.msra.mxu0 0.0
    %2845 = vmatprep.subr.mxu0 0.0
    %2846 = vmatpush1.xpose.msra.mxu0 0.0
    %2847 = vmatprep.subr.mxu0 0.0
    %2848 = vmatpush1.xpose.msra.mxu0 0.0
    %2849 = vmatprep.subr.mxu0 0.0
    %2850 = vmatpush1.xpose.msra.mxu0 0.0
    %2851 = vmatprep.subr.mxu0 0.0
    %2852 = vmatpush1.xpose.msra.mxu0 0.0
    %2853 = vmatprep.subr.mxu0 0.0
    %2854 = vmatpush1.xpose.msra.mxu0 0.0
    %2855 = vmatprep.subr.mxu0 0.0
    %2856 = vmatpush1.xpose.msra.mxu0 0.0
    %2857 = vmatprep.subr.mxu0 0.0
    %2858 = vmatpush1.xpose.msra.mxu0 0.0
    %2859 = vmatprep.mubr.f32.mxu0 0.0
    %2860 = vmatmul.mubr.f32.gmra.mrb[0].mxu0 %v2789
    %v2861 = vpop.f32.mrb[0].mxu0
    %v2862 = vadd.f32 0.0, %v2861
    %v2863 = vpop.f32.mrb[0].mxu0
    %2864 = vdwg.mxu0
    %v2865 = vmul.f32 %v2862, 0.35355338
    %v2866 = vsel %vm2698, %v2865, -inf
    %2867 = vmax.xlane.f32.xlu0 %v2866
    %v2868 = vpop.xlane.xlu0 %2867
    %v2869 = vsub.f32 %v2865, %v2868
    %v2870 = vmul.f32 %v2869, 1.442695
    %v2871 = vpow.pop %v2870
    %v2872 = vsel %vm2698, %v2871, 0.0
    %2873 = vadd.xlane.f32.xlu0 %v2872
    %v2874 = vpop.xlane.xlu0 %2873
    %v2875 = vrcp.pop %v2874
    %v2876 = vmul.f32 %v2871, %v2875
    %2879 = vrot.lane.b32.xlu0 %v2596, 120
    %v2880 = vpop.permute.xlu0 %2879
    %2881 = vrot.lane.b32.xlu0 %v2601, 120
    %v2882 = vpop.permute.xlu0 %2881
    %v2886 = vsel %vm2698, %v2876, 0
    %2888 = vmatprep.subr.mxu0 0.0
    %2889 = vmatpush1.msra.mxu0 %v2880
    %2890 = vmatprep.subr.mxu0 0.0
    %2891 = vmatpush1.msra.mxu0 %v2882
    %2892 = vmatprep.subr.mxu0 0.0
    %2893 = vmatpush1.msra.mxu0 0.0
    %2894 = vmatprep.subr.mxu0 0.0
    %2895 = vmatpush1.msra.mxu0 0.0
    %2896 = vmatprep.subr.mxu0 0.0
    %2897 = vmatpush1.msra.mxu0 0.0
    %2898 = vmatprep.subr.mxu0 0.0
    %2899 = vmatpush1.msra.mxu0 0.0
    %2900 = vmatprep.subr.mxu0 0.0
    %2901 = vmatpush1.msra.mxu0 0.0
    %2902 = vmatprep.subr.mxu0 0.0
    %2903 = vmatpush1.msra.mxu0 0.0
    %2904 = vmatprep.subr.mxu0 0.0
    %2905 = vmatpush1.msra.mxu0 0.0
    %2906 = vmatprep.subr.mxu0 0.0
    %2907 = vmatpush1.msra.mxu0 0.0
    %2908 = vmatprep.subr.mxu0 0.0
    %2909 = vmatpush1.msra.mxu0 0.0
    %2910 = vmatprep.subr.mxu0 0.0
    %2911 = vmatpush1.msra.mxu0 0.0
    %2912 = vmatprep.subr.mxu0 0.0
    %2913 = vmatpush1.msra.mxu0 0.0
    %2914 = vmatprep.subr.mxu0 0.0
    %2915 = vmatpush1.msra.mxu0 0.0
    %2916 = vmatprep.subr.mxu0 0.0
    %2917 = vmatpush1.msra.mxu0 0.0
    %2918 = vmatprep.subr.mxu0 0.0
    %2919 = vmatpush1.msra.mxu0 0.0
    %2920 = vmatprep.subr.mxu0 0.0
    %2921 = vmatpush1.msra.mxu0 0.0
    %2922 = vmatprep.subr.mxu0 0.0
    %2923 = vmatpush1.msra.mxu0 0.0
    %2924 = vmatprep.subr.mxu0 0.0
    %2925 = vmatpush1.msra.mxu0 0.0
    %2926 = vmatprep.subr.mxu0 0.0
    %2927 = vmatpush1.msra.mxu0 0.0
    %2928 = vmatprep.subr.mxu0 0.0
    %2929 = vmatpush1.msra.mxu0 0.0
    %2930 = vmatprep.subr.mxu0 0.0
    %2931 = vmatpush1.msra.mxu0 0.0
    %2932 = vmatprep.subr.mxu0 0.0
    %2933 = vmatpush1.msra.mxu0 0.0
    %2934 = vmatprep.subr.mxu0 0.0
    %2935 = vmatpush1.msra.mxu0 0.0
    %2936 = vmatprep.subr.mxu0 0.0
    %2937 = vmatpush1.msra.mxu0 0.0
    %2938 = vmatprep.subr.mxu0 0.0
    %2939 = vmatpush1.msra.mxu0 0.0
    %2940 = vmatprep.subr.mxu0 0.0
    %2941 = vmatpush1.msra.mxu0 0.0
    %2942 = vmatprep.subr.mxu0 0.0
    %2943 = vmatpush1.msra.mxu0 0.0
    %2944 = vmatprep.subr.mxu0 0.0
    %2945 = vmatpush1.msra.mxu0 0.0
    %2946 = vmatprep.subr.mxu0 0.0
    %2947 = vmatpush1.msra.mxu0 0.0
    %2948 = vmatprep.subr.mxu0 0.0
    %2949 = vmatpush1.msra.mxu0 0.0
    %2950 = vmatprep.subr.mxu0 0.0
    %2951 = vmatpush1.msra.mxu0 0.0
    %2952 = vmatprep.mubr.f32.mxu0 0.0
    %2953 = vmatmul.mubr.f32.gmra.mrb[0].mxu0 %v2886
    %v2954 = vpop.f32.mrb[0].mxu0
    %v2955 = vadd.f32 0.0, %v2954
    %v2956 = vpop.f32.mrb[0].mxu0
    %2957 = vdwg.mxu0
    %v2959 = vsel %vm363, %v2955, 0
    %2961 = vmatprep.subr.mxu0 0.0
    %2962 = vmatpush1.msra.mxu0 %v2615
    %2963 = vmatprep.subr.mxu0 0.0
    %2964 = vmatpush1.msra.mxu0 0.0
    %2965 = vmatprep.subr.mxu0 0.0
    %2966 = vmatpush1.msra.mxu0 0.0
    %2967 = vmatprep.subr.mxu0 0.0
    %2968 = vmatpush1.msra.mxu0 0.0
    %2969 = vmatprep.subr.mxu0 0.0
    %2970 = vmatpush1.msra.mxu0 0.0
    %2971 = vmatprep.subr.mxu0 0.0
    %2972 = vmatpush1.msra.mxu0 0.0
    %2973 = vmatprep.subr.mxu0 0.0
    %2974 = vmatpush1.msra.mxu0 0.0
    %2975 = vmatprep.subr.mxu0 0.0
    %2976 = vmatpush1.msra.mxu0 0.0
    %2977 = vmatprep.subr.mxu0 0.0
    %2978 = vmatpush1.msra.mxu0 0.0
    %2979 = vmatprep.subr.mxu0 0.0
    %2980 = vmatpush1.msra.mxu0 0.0
    %2981 = vmatprep.subr.mxu0 0.0
    %2982 = vmatpush1.msra.mxu0 0.0
    %2983 = vmatprep.subr.mxu0 0.0
    %2984 = vmatpush1.msra.mxu0 0.0
    %2985 = vmatprep.subr.mxu0 0.0
    %2986 = vmatpush1.msra.mxu0 0.0
    %2987 = vmatprep.subr.mxu0 0.0
    %2988 = vmatpush1.msra.mxu0 0.0
    %2989 = vmatprep.subr.mxu0 0.0
    %2990 = vmatpush1.msra.mxu0 0.0
    %2991 = vmatprep.subr.mxu0 0.0
    %2992 = vmatpush1.msra.mxu0 0.0
    %2993 = vmatprep.subr.mxu0 0.0
    %2994 = vmatpush1.msra.mxu0 0.0
    %2995 = vmatprep.subr.mxu0 0.0
    %2996 = vmatpush1.msra.mxu0 0.0
    %2997 = vmatprep.subr.mxu0 0.0
    %2998 = vmatpush1.msra.mxu0 0.0
    %2999 = vmatprep.subr.mxu0 0.0
    %3000 = vmatpush1.msra.mxu0 0.0
    %3001 = vmatprep.subr.mxu0 0.0
    %3002 = vmatpush1.msra.mxu0 0.0
    %3003 = vmatprep.subr.mxu0 0.0
    %3004 = vmatpush1.msra.mxu0 0.0
    %3005 = vmatprep.subr.mxu0 0.0
    %3006 = vmatpush1.msra.mxu0 0.0
    %3007 = vmatprep.subr.mxu0 0.0
    %3008 = vmatpush1.msra.mxu0 0.0
    %3009 = vmatprep.subr.mxu0 0.0
    %3010 = vmatpush1.msra.mxu0 0.0
    %3011 = vmatprep.subr.mxu0 0.0
    %3012 = vmatpush1.msra.mxu0 0.0
    %3013 = vmatprep.subr.mxu0 0.0
    %3014 = vmatpush1.msra.mxu0 0.0
    %3015 = vmatprep.subr.mxu0 0.0
    %3016 = vmatpush1.msra.mxu0 0.0
    %3017 = vmatprep.subr.mxu0 0.0
    %3018 = vmatpush1.msra.mxu0 0.0
    %3019 = vmatprep.subr.mxu0 0.0
    %3020 = vmatpush1.msra.mxu0 0.0
    %3021 = vmatprep.subr.mxu0 0.0
    %3022 = vmatpush1.msra.mxu0 0.0
    %3023 = vmatprep.subr.mxu0 0.0
    %3024 = vmatpush1.msra.mxu0 0.0
    %3025 = vmatprep.mubr.f32.mxu0 0.0
    %3026 = vmatmul.mubr.f32.gmra.mrb[0].mxu0 %v2959
    %v3027 = vpop.f32.mrb[0].mxu0
    %v3028 = vadd.f32 0.0, %v3027
    %v3029 = vpop.f32.mrb[0].mxu0
    %3030 = vdwg.mxu0
    %v3032 = vsel %vm363, %v2780, 0
    %3034 = vmatprep.subr.mxu0 0.0
    %3035 = vmatpush1.msra.mxu0 %v2614
    %3036 = vmatprep.subr.mxu0 0.0
    %3037 = vmatpush1.msra.mxu0 0.0
    %3038 = vmatprep.subr.mxu0 0.0
    %3039 = vmatpush1.msra.mxu0 0.0
    %3040 = vmatprep.subr.mxu0 0.0
    %3041 = vmatpush1.msra.mxu0 0.0
    %3042 = vmatprep.subr.mxu0 0.0
    %3043 = vmatpush1.msra.mxu0 0.0
    %3044 = vmatprep.subr.mxu0 0.0
    %3045 = vmatpush1.msra.mxu0 0.0
    %3046 = vmatprep.subr.mxu0 0.0
    %3047 = vmatpush1.msra.mxu0 0.0
    %3048 = vmatprep.subr.mxu0 0.0
    %3049 = vmatpush1.msra.mxu0 0.0
    %3050 = vmatprep.subr.mxu0 0.0
    %3051 = vmatpush1.msra.mxu0 0.0
    %3052 = vmatprep.subr.mxu0 0.0
    %3053 = vmatpush1.msra.mxu0 0.0
    %3054 = vmatprep.subr.mxu0 0.0
    %3055 = vmatpush1.msra.mxu0 0.0
    %3056 = vmatprep.subr.mxu0 0.0
    %3057 = vmatpush1.msra.mxu0 0.0
    %3058 = vmatprep.subr.mxu0 0.0
    %3059 = vmatpush1.msra.mxu0 0.0
    %3060 = vmatprep.subr.mxu0 0.0
    %3061 = vmatpush1.msra.mxu0 0.0
    %3062 = vmatprep.subr.mxu0 0.0
    %3063 = vmatpush1.msra.mxu0 0.0
    %3064 = vmatprep.subr.mxu0 0.0
    %3065 = vmatpush1.msra.mxu0 0.0
    %3066 = vmatprep.subr.mxu0 0.0
    %3067 = vmatpush1.msra.mxu0 0.0
    %3068 = vmatprep.subr.mxu0 0.0
    %3069 = vmatpush1.msra.mxu0 0.0
    %3070 = vmatprep.subr.mxu0 0.0
    %3071 = vmatpush1.msra.mxu0 0.0
    %3072 = vmatprep.subr.mxu0 0.0
    %3073 = vmatpush1.msra.mxu0 0.0
    %3074 = vmatprep.subr.mxu0 0.0
    %3075 = vmatpush1.msra.mxu0 0.0
    %3076 = vmatprep.subr.mxu0 0.0
    %3077 = vmatpush1.msra.mxu0 0.0
    %3078 = vmatprep.subr.mxu0 0.0
    %3079 = vmatpush1.msra.mxu0 0.0
    %3080 = vmatprep.subr.mxu0 0.0
    %3081 = vmatpush1.msra.mxu0 0.0
    %3082 = vmatprep.subr.mxu0 0.0
    %3083 = vmatpush1.msra.mxu0 0.0
    %3084 = vmatprep.subr.mxu0 0.0
    %3085 = vmatpush1.msra.mxu0 0.0
    %3086 = vmatprep.subr.mxu0 0.0
    %3087 = vmatpush1.msra.mxu0 0.0
    %3088 = vmatprep.subr.mxu0 0.0
    %3089 = vmatpush1.msra.mxu0 0.0
    %3090 = vmatprep.subr.mxu0 0.0
    %3091 = vmatpush1.msra.mxu0 0.0
    %3092 = vmatprep.subr.mxu0 0.0
    %3093 = vmatpush1.msra.mxu0 0.0
    %3094 = vmatprep.subr.mxu0 0.0
    %3095 = vmatpush1.msra.mxu0 0.0
    %3096 = vmatprep.subr.mxu0 0.0
    %3097 = vmatpush1.msra.mxu0 0.0
    %3098 = vmatprep.mubr.f32.mxu0 0.0
    %3099 = vmatmul.mubr.f32.gmra.mrb[0].mxu0 %v3032
    %v3100 = vpop.f32.mrb[0].mxu0
    %v3101 = vadd.f32 %v3028, %v3100
    %v3102 = vpop.f32.mrb[0].mxu0
    %3103 = vdwg.mxu0
    %3104 = vrot.lane.b32.xlu0 %v2400, 112
    %v3105 = vpop.permute.xlu0 %3104
    %3106 = vrot.lane.b32.xlu0 %v2495, 112
    %v3107 = vpop.permute.xlu0 %3106
    %3108 = vrot.lane.b32.xlu0 %v2500, 112
    %v3109 = vpop.permute.xlu0 %3108
    %v3110 = vsel %vm363, %v3105, 0
    %v3112 = vsel %vm363, %v3107, 0
    %v3114 = vsel %vm363, %v3109, 0
    %3116 = vmatprep.subr.mxu0 0.0
    %3117 = vmatpush1.xpose.msra.mxu0 %v3112
    %3118 = vmatprep.subr.mxu0 0.0
    %3119 = vmatpush1.xpose.msra.mxu0 %v3114
    %3120 = vmatprep.subr.mxu0 0.0
    %3121 = vmatpush1.xpose.msra.mxu0 0.0
    %3122 = vmatprep.subr.mxu0 0.0
    %3123 = vmatpush1.xpose.msra.mxu0 0.0
    %3124 = vmatprep.subr.mxu0 0.0
    %3125 = vmatpush1.xpose.msra.mxu0 0.0
    %3126 = vmatprep.subr.mxu0 0.0
    %3127 = vmatpush1.xpose.msra.mxu0 0.0
    %3128 = vmatprep.subr.mxu0 0.0
    %3129 = vmatpush1.xpose.msra.mxu0 0.0
    %3130 = vmatprep.subr.mxu0 0.0
    %3131 = vmatpush1.xpose.msra.mxu0 0.0
    %3132 = vmatprep.subr.mxu0 0.0
    %3133 = vmatpush1.xpose.msra.mxu0 0.0
    %3134 = vmatprep.subr.mxu0 0.0
    %3135 = vmatpush1.xpose.msra.mxu0 0.0
    %3136 = vmatprep.subr.mxu0 0.0
    %3137 = vmatpush1.xpose.msra.mxu0 0.0
    %3138 = vmatprep.subr.mxu0 0.0
    %3139 = vmatpush1.xpose.msra.mxu0 0.0
    %3140 = vmatprep.subr.mxu0 0.0
    %3141 = vmatpush1.xpose.msra.mxu0 0.0
    %3142 = vmatprep.subr.mxu0 0.0
    %3143 = vmatpush1.xpose.msra.mxu0 0.0
    %3144 = vmatprep.subr.mxu0 0.0
    %3145 = vmatpush1.xpose.msra.mxu0 0.0
    %3146 = vmatprep.subr.mxu0 0.0
    %3147 = vmatpush1.xpose.msra.mxu0 0.0
    %3148 = vmatprep.subr.mxu0 0.0
    %3149 = vmatpush1.xpose.msra.mxu0 0.0
    %3150 = vmatprep.subr.mxu0 0.0
    %3151 = vmatpush1.xpose.msra.mxu0 0.0
    %3152 = vmatprep.subr.mxu0 0.0
    %3153 = vmatpush1.xpose.msra.mxu0 0.0
    %3154 = vmatprep.subr.mxu0 0.0
    %3155 = vmatpush1.xpose.msra.mxu0 0.0
    %3156 = vmatprep.subr.mxu0 0.0
    %3157 = vmatpush1.xpose.msra.mxu0 0.0
    %3158 = vmatprep.subr.mxu0 0.0
    %3159 = vmatpush1.xpose.msra.mxu0 0.0
    %3160 = vmatprep.subr.mxu0 0.0
    %3161 = vmatpush1.xpose.msra.mxu0 0.0
    %3162 = vmatprep.subr.mxu0 0.0
    %3163 = vmatpush1.xpose.msra.mxu0 0.0
    %3164 = vmatprep.subr.mxu0 0.0
    %3165 = vmatpush1.xpose.msra.mxu0 0.0
    %3166 = vmatprep.subr.mxu0 0.0
    %3167 = vmatpush1.xpose.msra.mxu0 0.0
    %3168 = vmatprep.subr.mxu0 0.0
    %3169 = vmatpush1.xpose.msra.mxu0 0.0
    %3170 = vmatprep.subr.mxu0 0.0
    %3171 = vmatpush1.xpose.msra.mxu0 0.0
    %3172 = vmatprep.subr.mxu0 0.0
    %3173 = vmatpush1.xpose.msra.mxu0 0.0
    %3174 = vmatprep.subr.mxu0 0.0
    %3175 = vmatpush1.xpose.msra.mxu0 0.0
    %3176 = vmatprep.subr.mxu0 0.0
    %3177 = vmatpush1.xpose.msra.mxu0 0.0
    %3178 = vmatprep.subr.mxu0 0.0
    %3179 = vmatpush1.xpose.msra.mxu0 0.0
    %3180 = vmatprep.mubr.f32.mxu0 0.0
    %3181 = vmatmul.mubr.f32.gmra.mrb[0].mxu0 %v3110
    %v3182 = vpop.f32.mrb[0].mxu0
    %v3183 = vadd.f32 0.0, %v3182
    %v3184 = vpop.f32.mrb[0].mxu0
    %3185 = vdwg.mxu0
    %v3186 = vmul.f32 %v3183, 0.35355338
    %v3187 = vsel %vm2698, %v3186, -inf
    %3188 = vmax.xlane.f32.xlu0 %v3187
    %v3189 = vpop.xlane.xlu0 %3188
    %v3190 = vsub.f32 %v3186, %v3189
    %v3191 = vmul.f32 %v3190, 1.442695
    %v3192 = vpow.pop %v3191
    %v3193 = vsel %vm2698, %v3192, 0.0
    %3194 = vadd.xlane.f32.xlu0 %v3193
    %v3195 = vpop.xlane.xlu0 %3194
    %v3196 = vrcp.pop %v3195
    %v3197 = vmul.f32 %v3192, %v3196
    %3198 = vrot.lane.b32.xlu0 %v2596, 112
    %v3199 = vpop.permute.xlu0 %3198
    %3200 = vrot.lane.b32.xlu0 %v2601, 112
    %v3201 = vpop.permute.xlu0 %3200
    %v3205 = vsel %vm2698, %v3197, 0
    %3207 = vmatprep.subr.mxu0 0.0
    %3208 = vmatpush1.msra.mxu0 %v3199
    %3209 = vmatprep.subr.mxu0 0.0
    %3210 = vmatpush1.msra.mxu0 %v3201
    %3211 = vmatprep.subr.mxu0 0.0
    %3212 = vmatpush1.msra.mxu0 0.0
    %3213 = vmatprep.subr.mxu0 0.0
    %3214 = vmatpush1.msra.mxu0 0.0
    %3215 = vmatprep.subr.mxu0 0.0
    %3216 = vmatpush1.msra.mxu0 0.0
    %3217 = vmatprep.subr.mxu0 0.0
    %3218 = vmatpush1.msra.mxu0 0.0
    %3219 = vmatprep.subr.mxu0 0.0
    %3220 = vmatpush1.msra.mxu0 0.0
    %3221 = vmatprep.subr.mxu0 0.0
    %3222 = vmatpush1.msra.mxu0 0.0
    %3223 = vmatprep.subr.mxu0 0.0
    %3224 = vmatpush1.msra.mxu0 0.0
    %3225 = vmatprep.subr.mxu0 0.0
    %3226 = vmatpush1.msra.mxu0 0.0
    %3227 = vmatprep.subr.mxu0 0.0
    %3228 = vmatpush1.msra.mxu0 0.0
    %3229 = vmatprep.subr.mxu0 0.0
    %3230 = vmatpush1.msra.mxu0 0.0
    %3231 = vmatprep.subr.mxu0 0.0
    %3232 = vmatpush1.msra.mxu0 0.0
    %3233 = vmatprep.subr.mxu0 0.0
    %3234 = vmatpush1.msra.mxu0 0.0
    %3235 = vmatprep.subr.mxu0 0.0
    %3236 = vmatpush1.msra.mxu0 0.0
    %3237 = vmatprep.subr.mxu0 0.0
    %3238 = vmatpush1.msra.mxu0 0.0
    %3239 = vmatprep.subr.mxu0 0.0
    %3240 = vmatpush1.msra.mxu0 0.0
    %3241 = vmatprep.subr.mxu0 0.0
    %3242 = vmatpush1.msra.mxu0 0.0
    %3243 = vmatprep.subr.mxu0 0.0
    %3244 = vmatpush1.msra.mxu0 0.0
    %3245 = vmatprep.subr.mxu0 0.0
    %3246 = vmatpush1.msra.mxu0 0.0
    %3247 = vmatprep.subr.mxu0 0.0
    %3248 = vmatpush1.msra.mxu0 0.0
    %3249 = vmatprep.subr.mxu0 0.0
    %3250 = vmatpush1.msra.mxu0 0.0
    %3251 = vmatprep.subr.mxu0 0.0
    %3252 = vmatpush1.msra.mxu0 0.0
    %3253 = vmatprep.subr.mxu0 0.0
    %3254 = vmatpush1.msra.mxu0 0.0
    %3255 = vmatprep.subr.mxu0 0.0
    %3256 = vmatpush1.msra.mxu0 0.0
    %3257 = vmatprep.subr.mxu0 0.0
    %3258 = vmatpush1.msra.mxu0 0.0
    %3259 = vmatprep.subr.mxu0 0.0
    %3260 = vmatpush1.msra.mxu0 0.0
    %3261 = vmatprep.subr.mxu0 0.0
    %3262 = vmatpush1.msra.mxu0 0.0
    %3263 = vmatprep.subr.mxu0 0.0
    %3264 = vmatpush1.msra.mxu0 0.0
    %3265 = vmatprep.subr.mxu0 0.0
    %3266 = vmatpush1.msra.mxu0 0.0
    %3267 = vmatprep.subr.mxu0 0.0
    %3268 = vmatpush1.msra.mxu0 0.0
    %3269 = vmatprep.subr.mxu0 0.0
    %3270 = vmatpush1.msra.mxu0 0.0
    %3271 = vmatprep.mubr.f32.mxu0 0.0
    %3272 = vmatmul.mubr.f32.gmra.mrb[0].mxu0 %v3205
    %v3273 = vpop.f32.mrb[0].mxu0
    %v3274 = vadd.f32 0.0, %v3273
    %v3275 = vpop.f32.mrb[0].mxu0
    %3276 = vdwg.mxu0
    %v3278 = vsel %vm363, %v3274, 0
    %3280 = vmatprep.subr.mxu0 0.0
    %3281 = vmatpush1.msra.mxu0 %v2616
    %3282 = vmatprep.subr.mxu0 0.0
    %3283 = vmatpush1.msra.mxu0 0.0
    %3284 = vmatprep.subr.mxu0 0.0
    %3285 = vmatpush1.msra.mxu0 0.0
    %3286 = vmatprep.subr.mxu0 0.0
    %3287 = vmatpush1.msra.mxu0 0.0
    %3288 = vmatprep.subr.mxu0 0.0
    %3289 = vmatpush1.msra.mxu0 0.0
    %3290 = vmatprep.subr.mxu0 0.0
    %3291 = vmatpush1.msra.mxu0 0.0
    %3292 = vmatprep.subr.mxu0 0.0
    %3293 = vmatpush1.msra.mxu0 0.0
    %3294 = vmatprep.subr.mxu0 0.0
    %3295 = vmatpush1.msra.mxu0 0.0
    %3296 = vmatprep.subr.mxu0 0.0
    %3297 = vmatpush1.msra.mxu0 0.0
    %3298 = vmatprep.subr.mxu0 0.0
    %3299 = vmatpush1.msra.mxu0 0.0
    %3300 = vmatprep.subr.mxu0 0.0
    %3301 = vmatpush1.msra.mxu0 0.0
    %3302 = vmatprep.subr.mxu0 0.0
    %3303 = vmatpush1.msra.mxu0 0.0
    %3304 = vmatprep.subr.mxu0 0.0
    %3305 = vmatpush1.msra.mxu0 0.0
    %3306 = vmatprep.subr.mxu0 0.0
    %3307 = vmatpush1.msra.mxu0 0.0
    %3308 = vmatprep.subr.mxu0 0.0
    %3309 = vmatpush1.msra.mxu0 0.0
    %3310 = vmatprep.subr.mxu0 0.0
    %3311 = vmatpush1.msra.mxu0 0.0
    %3312 = vmatprep.subr.mxu0 0.0
    %3313 = vmatpush1.msra.mxu0 0.0
    %3314 = vmatprep.subr.mxu0 0.0
    %3315 = vmatpush1.msra.mxu0 0.0
    %3316 = vmatprep.subr.mxu0 0.0
    %3317 = vmatpush1.msra.mxu0 0.0
    %3318 = vmatprep.subr.mxu0 0.0
    %3319 = vmatpush1.msra.mxu0 0.0
    %3320 = vmatprep.subr.mxu0 0.0
    %3321 = vmatpush1.msra.mxu0 0.0
    %3322 = vmatprep.subr.mxu0 0.0
    %3323 = vmatpush1.msra.mxu0 0.0
    %3324 = vmatprep.subr.mxu0 0.0
    %3325 = vmatpush1.msra.mxu0 0.0
    %3326 = vmatprep.subr.mxu0 0.0
    %3327 = vmatpush1.msra.mxu0 0.0
    %3328 = vmatprep.subr.mxu0 0.0
    %3329 = vmatpush1.msra.mxu0 0.0
    %3330 = vmatprep.subr.mxu0 0.0
    %3331 = vmatpush1.msra.mxu0 0.0
    %3332 = vmatprep.subr.mxu0 0.0
    %3333 = vmatpush1.msra.mxu0 0.0
    %3334 = vmatprep.subr.mxu0 0.0
    %3335 = vmatpush1.msra.mxu0 0.0
    %3336 = vmatprep.subr.mxu0 0.0
    %3337 = vmatpush1.msra.mxu0 0.0
    %3338 = vmatprep.subr.mxu0 0.0
    %3339 = vmatpush1.msra.mxu0 0.0
    %3340 = vmatprep.subr.mxu0 0.0
    %3341 = vmatpush1.msra.mxu0 0.0
    %3342 = vmatprep.subr.mxu0 0.0
    %3343 = vmatpush1.msra.mxu0 0.0
    %3344 = vmatprep.mubr.f32.mxu0 0.0
    %3345 = vmatmul.mubr.f32.gmra.mrb[0].mxu0 %v3278
    %v3346 = vpop.f32.mrb[0].mxu0
    %v3347 = vadd.f32 0.0, %v3346
    %v3348 = vpop.f32.mrb[0].mxu0
    %3349 = vdwg.mxu0
    %v3350 = vadd.f32 %v3101, %v3347
    %3351 = vrot.lane.b32.xlu0 %v2400, 104
    %v3352 = vpop.permute.xlu0 %3351
    %3353 = vrot.lane.b32.xlu0 %v2495, 104
    %v3354 = vpop.permute.xlu0 %3353
    %3355 = vrot.lane.b32.xlu0 %v2500, 104
    %v3356 = vpop.permute.xlu0 %3355
    %v3357 = vsel %vm363, %v3352, 0
    %v3359 = vsel %vm363, %v3354, 0
    %v3361 = vsel %vm363, %v3356, 0
    %3363 = vmatprep.subr.mxu0 0.0
    %3364 = vmatpush1.xpose.msra.mxu0 %v3359
    %3365 = vmatprep.subr.mxu0 0.0
    %3366 = vmatpush1.xpose.msra.mxu0 %v3361
    %3367 = vmatprep.subr.mxu0 0.0
    %3368 = vmatpush1.xpose.msra.mxu0 0.0
    %3369 = vmatprep.subr.mxu0 0.0
    %3370 = vmatpush1.xpose.msra.mxu0 0.0
    %3371 = vmatprep.subr.mxu0 0.0
    %3372 = vmatpush1.xpose.msra.mxu0 0.0
    %3373 = vmatprep.subr.mxu0 0.0
    %3374 = vmatpush1.xpose.msra.mxu0 0.0
    %3375 = vmatprep.subr.mxu0 0.0
    %3376 = vmatpush1.xpose.msra.mxu0 0.0
    %3377 = vmatprep.subr.mxu0 0.0
    %3378 = vmatpush1.xpose.msra.mxu0 0.0
    %3379 = vmatprep.subr.mxu0 0.0
    %3380 = vmatpush1.xpose.msra.mxu0 0.0
    %3381 = vmatprep.subr.mxu0 0.0
    %3382 = vmatpush1.xpose.msra.mxu0 0.0
    %3383 = vmatprep.subr.mxu0 0.0
    %3384 = vmatpush1.xpose.msra.mxu0 0.0
    %3385 = vmatprep.subr.mxu0 0.0
    %3386 = vmatpush1.xpose.msra.mxu0 0.0
    %3387 = vmatprep.subr.mxu0 0.0
    %3388 = vmatpush1.xpose.msra.mxu0 0.0
    %3389 = vmatprep.subr.mxu0 0.0
    %3390 = vmatpush1.xpose.msra.mxu0 0.0
    %3391 = vmatprep.subr.mxu0 0.0
    %3392 = vmatpush1.xpose.msra.mxu0 0.0
    %3393 = vmatprep.subr.mxu0 0.0
    %3394 = vmatpush1.xpose.msra.mxu0 0.0
    %3395 = vmatprep.subr.mxu0 0.0
    %3396 = vmatpush1.xpose.msra.mxu0 0.0
    %3397 = vmatprep.subr.mxu0 0.0
    %3398 = vmatpush1.xpose.msra.mxu0 0.0
    %3399 = vmatprep.subr.mxu0 0.0
    %3400 = vmatpush1.xpose.msra.mxu0 0.0
    %3401 = vmatprep.subr.mxu0 0.0
    %3402 = vmatpush1.xpose.msra.mxu0 0.0
    %3403 = vmatprep.subr.mxu0 0.0
    %3404 = vmatpush1.xpose.msra.mxu0 0.0
    %3405 = vmatprep.subr.mxu0 0.0
    %3406 = vmatpush1.xpose.msra.mxu0 0.0
    %3407 = vmatprep.subr.mxu0 0.0
    %3408 = vmatpush1.xpose.msra.mxu0 0.0
    %3409 = vmatprep.subr.mxu0 0.0
    %3410 = vmatpush1.xpose.msra.mxu0 0.0
    %3411 = vmatprep.subr.mxu0 0.0
    %3412 = vmatpush1.xpose.msra.mxu0 0.0
    %3413 = vmatprep.subr.mxu0 0.0
    %3414 = vmatpush1.xpose.msra.mxu0 0.0
    %3415 = vmatprep.subr.mxu0 0.0
    %3416 = vmatpush1.xpose.msra.mxu0 0.0
    %3417 = vmatprep.subr.mxu0 0.0
    %3418 = vmatpush1.xpose.msra.mxu0 0.0
    %3419 = vmatprep.subr.mxu0 0.0
    %3420 = vmatpush1.xpose.msra.mxu0 0.0
    %3421 = vmatprep.subr.mxu0 0.0
    %3422 = vmatpush1.xpose.msra.mxu0 0.0
    %3423 = vmatprep.subr.mxu0 0.0
    %3424 = vmatpush1.xpose.msra.mxu0 0.0
    %3425 = vmatprep.subr.mxu0 0.0
    %3426 = vmatpush1.xpose.msra.mxu0 0.0
    %3427 = vmatprep.mubr.f32.mxu0 0.0
    %3428 = vmatmul.mubr.f32.gmra.mrb[0].mxu0 %v3357
    %v3429 = vpop.f32.mrb[0].mxu0
    %v3430 = vadd.f32 0.0, %v3429
    %v3431 = vpop.f32.mrb[0].mxu0
    %3432 = vdwg.mxu0
    %v3433 = vmul.f32 %v3430, 0.35355338
    %v3434 = vsel %vm2698, %v3433, -inf
    %3435 = vmax.xlane.f32.xlu0 %v3434
    %v3436 = vpop.xlane.xlu0 %3435
    %v3437 = vsub.f32 %v3433, %v3436
    %v3438 = vmul.f32 %v3437, 1.442695
    %v3439 = vpow.pop %v3438
    %v3440 = vsel %vm2698, %v3439, 0.0
    %3441 = vadd.xlane.f32.xlu0 %v3440
    %v3442 = vpop.xlane.xlu0 %3441
    %v3443 = vrcp.pop %v3442
    %v3444 = vmul.f32 %v3439, %v3443
    %3445 = vrot.lane.b32.xlu0 %v2596, 104
    %v3446 = vpop.permute.xlu0 %3445
    %3447 = vrot.lane.b32.xlu0 %v2601, 104
    %v3448 = vpop.permute.xlu0 %3447
    %v3452 = vsel %vm2698, %v3444, 0
    %3454 = vmatprep.subr.mxu0 0.0
    %3455 = vmatpush1.msra.mxu0 %v3446
    %3456 = vmatprep.subr.mxu0 0.0
    %3457 = vmatpush1.msra.mxu0 %v3448
    %3458 = vmatprep.subr.mxu0 0.0
    %3459 = vmatpush1.msra.mxu0 0.0
    %3460 = vmatprep.subr.mxu0 0.0
    %3461 = vmatpush1.msra.mxu0 0.0
    %3462 = vmatprep.subr.mxu0 0.0
    %3463 = vmatpush1.msra.mxu0 0.0
    %3464 = vmatprep.subr.mxu0 0.0
    %3465 = vmatpush1.msra.mxu0 0.0
    %3466 = vmatprep.subr.mxu0 0.0
    %3467 = vmatpush1.msra.mxu0 0.0
    %3468 = vmatprep.subr.mxu0 0.0
    %3469 = vmatpush1.msra.mxu0 0.0
    %3470 = vmatprep.subr.mxu0 0.0
    %3471 = vmatpush1.msra.mxu0 0.0
    %3472 = vmatprep.subr.mxu0 0.0
    %3473 = vmatpush1.msra.mxu0 0.0
    %3474 = vmatprep.subr.mxu0 0.0
    %3475 = vmatpush1.msra.mxu0 0.0
    %3476 = vmatprep.subr.mxu0 0.0
    %3477 = vmatpush1.msra.mxu0 0.0
    %3478 = vmatprep.subr.mxu0 0.0
    %3479 = vmatpush1.msra.mxu0 0.0
    %3480 = vmatprep.subr.mxu0 0.0
    %3481 = vmatpush1.msra.mxu0 0.0
    %3482 = vmatprep.subr.mxu0 0.0
    %3483 = vmatpush1.msra.mxu0 0.0
    %3484 = vmatprep.subr.mxu0 0.0
    %3485 = vmatpush1.msra.mxu0 0.0
    %3486 = vmatprep.subr.mxu0 0.0
    %3487 = vmatpush1.msra.mxu0 0.0
    %3488 = vmatprep.subr.mxu0 0.0
    %3489 = vmatpush1.msra.mxu0 0.0
    %3490 = vmatprep.subr.mxu0 0.0
    %3491 = vmatpush1.msra.mxu0 0.0
    %3492 = vmatprep.subr.mxu0 0.0
    %3493 = vmatpush1.msra.mxu0 0.0
    %3494 = vmatprep.subr.mxu0 0.0
    %3495 = vmatpush1.msra.mxu0 0.0
    %3496 = vmatprep.subr.mxu0 0.0
    %3497 = vmatpush1.msra.mxu0 0.0
    %3498 = vmatprep.subr.mxu0 0.0
    %3499 = vmatpush1.msra.mxu0 0.0
    %3500 = vmatprep.subr.mxu0 0.0
    %3501 = vmatpush1.msra.mxu0 0.0
    %3502 = vmatprep.subr.mxu0 0.0
    %3503 = vmatpush1.msra.mxu0 0.0
    %3504 = vmatprep.subr.mxu0 0.0
    %3505 = vmatpush1.msra.mxu0 0.0
    %3506 = vmatprep.subr.mxu0 0.0
    %3507 = vmatpush1.msra.mxu0 0.0
    %3508 = vmatprep.subr.mxu0 0.0
    %3509 = vmatpush1.msra.mxu0 0.0
    %3510 = vmatprep.subr.mxu0 0.0
    %3511 = vmatpush1.msra.mxu0 0.0
    %3512 = vmatprep.subr.mxu0 0.0
    %3513 = vmatpush1.msra.mxu0 0.0
    %3514 = vmatprep.subr.mxu0 0.0
    %3515 = vmatpush1.msra.mxu0 0.0
    %3516 = vmatprep.subr.mxu0 0.0
    %3517 = vmatpush1.msra.mxu0 0.0
    %3518 = vmatprep.mubr.f32.mxu0 0.0
    %3519 = vmatmul.mubr.f32.gmra.mrb[0].mxu0 %v3452
    %v3520 = vpop.f32.mrb[0].mxu0
    %v3521 = vadd.f32 0.0, %v3520
    %v3522 = vpop.f32.mrb[0].mxu0
    %3523 = vdwg.mxu0
    %v3525 = vsel %vm363, %v3521, 0
    %3527 = vmatprep.subr.mxu0 0.0
    %3528 = vmatpush1.msra.mxu0 %v2617
    %3529 = vmatprep.subr.mxu0 0.0
    %3530 = vmatpush1.msra.mxu0 0.0
    %3531 = vmatprep.subr.mxu0 0.0
    %3532 = vmatpush1.msra.mxu0 0.0
    %3533 = vmatprep.subr.mxu0 0.0
    %3534 = vmatpush1.msra.mxu0 0.0
    %3535 = vmatprep.subr.mxu0 0.0
    %3536 = vmatpush1.msra.mxu0 0.0
    %3537 = vmatprep.subr.mxu0 0.0
    %3538 = vmatpush1.msra.mxu0 0.0
    %3539 = vmatprep.subr.mxu0 0.0
    %3540 = vmatpush1.msra.mxu0 0.0
    %3541 = vmatprep.subr.mxu0 0.0
    %3542 = vmatpush1.msra.mxu0 0.0
    %3543 = vmatprep.subr.mxu0 0.0
    %3544 = vmatpush1.msra.mxu0 0.0
    %3545 = vmatprep.subr.mxu0 0.0
    %3546 = vmatpush1.msra.mxu0 0.0
    %3547 = vmatprep.subr.mxu0 0.0
    %3548 = vmatpush1.msra.mxu0 0.0
    %3549 = vmatprep.subr.mxu0 0.0
    %3550 = vmatpush1.msra.mxu0 0.0
    %3551 = vmatprep.subr.mxu0 0.0
    %3552 = vmatpush1.msra.mxu0 0.0
    %3553 = vmatprep.subr.mxu0 0.0
    %3554 = vmatpush1.msra.mxu0 0.0
    %3555 = vmatprep.subr.mxu0 0.0
    %3556 = vmatpush1.msra.mxu0 0.0
    %3557 = vmatprep.subr.mxu0 0.0
    %3558 = vmatpush1.msra.mxu0 0.0
    %3559 = vmatprep.subr.mxu0 0.0
    %3560 = vmatpush1.msra.mxu0 0.0
    %3561 = vmatprep.subr.mxu0 0.0
    %3562 = vmatpush1.msra.mxu0 0.0
    %3563 = vmatprep.subr.mxu0 0.0
    %3564 = vmatpush1.msra.mxu0 0.0
    %3565 = vmatprep.subr.mxu0 0.0
    %3566 = vmatpush1.msra.mxu0 0.0
    %3567 = vmatprep.subr.mxu0 0.0
    %3568 = vmatpush1.msra.mxu0 0.0
    %3569 = vmatprep.subr.mxu0 0.0
    %3570 = vmatpush1.msra.mxu0 0.0
    %3571 = vmatprep.subr.mxu0 0.0
    %3572 = vmatpush1.msra.mxu0 0.0
    %3573 = vmatprep.subr.mxu0 0.0
    %3574 = vmatpush1.msra.mxu0 0.0
    %3575 = vmatprep.subr.mxu0 0.0
    %3576 = vmatpush1.msra.mxu0 0.0
    %3577 = vmatprep.subr.mxu0 0.0
    %3578 = vmatpush1.msra.mxu0 0.0
    %3579 = vmatprep.subr.mxu0 0.0
    %3580 = vmatpush1.msra.mxu0 0.0
    %3581 = vmatprep.subr.mxu0 0.0
    %3582 = vmatpush1.msra.mxu0 0.0
    %3583 = vmatprep.subr.mxu0 0.0
    %3584 = vmatpush1.msra.mxu0 0.0
    %3585 = vmatprep.subr.mxu0 0.0
    %3586 = vmatpush1.msra.mxu0 0.0
    %3587 = vmatprep.subr.mxu0 0.0
    %3588 = vmatpush1.msra.mxu0 0.0
    %3589 = vmatprep.subr.mxu0 0.0
    %3590 = vmatpush1.msra.mxu0 0.0
    %3591 = vmatprep.mubr.f32.mxu0 0.0
    %3592 = vmatmul.mubr.f32.gmra.mrb[0].mxu0 %v3525
    %v3593 = vpop.f32.mrb[0].mxu0
    %v3594 = vadd.f32 0.0, %v3593
    %v3595 = vpop.f32.mrb[0].mxu0
    %3596 = vdwg.mxu0
    %v3597 = vadd.f32 %v3350, %v3594
    %3598 = vst.msk [vmem:[#allocation2] sm:$0xff] %vm140, %v3597
    %v3600 = vsel %vm363, %v2405, 0
    %v3603 = vsel %vm363, %v2505, 0
    %v3606 = vsel %vm363, %v2510, 0
    %3608 = vmatprep.subr.mxu0 0.0
    %3609 = vmatpush1.xpose.msra.mxu0 %v3603
    %3610 = vmatprep.subr.mxu0 0.0
    %3611 = vmatpush1.xpose.msra.mxu0 %v3606
    %3612 = vmatprep.subr.mxu0 0.0
    %3613 = vmatpush1.xpose.msra.mxu0 0.0
    %3614 = vmatprep.subr.mxu0 0.0
    %3615 = vmatpush1.xpose.msra.mxu0 0.0
    %3616 = vmatprep.subr.mxu0 0.0
    %3617 = vmatpush1.xpose.msra.mxu0 0.0
    %3618 = vmatprep.subr.mxu0 0.0
    %3619 = vmatpush1.xpose.msra.mxu0 0.0
    %3620 = vmatprep.subr.mxu0 0.0
    %3621 = vmatpush1.xpose.msra.mxu0 0.0
    %3622 = vmatprep.subr.mxu0 0.0
    %3623 = vmatpush1.xpose.msra.mxu0 0.0
    %3624 = vmatprep.subr.mxu0 0.0
    %3625 = vmatpush1.xpose.msra.mxu0 0.0
    %3626 = vmatprep.subr.mxu0 0.0
    %3627 = vmatpush1.xpose.msra.mxu0 0.0
    %3628 = vmatprep.subr.mxu0 0.0
    %3629 = vmatpush1.xpose.msra.mxu0 0.0
    %3630 = vmatprep.subr.mxu0 0.0
    %3631 = vmatpush1.xpose.msra.mxu0 0.0
    %3632 = vmatprep.subr.mxu0 0.0
    %3633 = vmatpush1.xpose.msra.mxu0 0.0
    %3634 = vmatprep.subr.mxu0 0.0
    %3635 = vmatpush1.xpose.msra.mxu0 0.0
    %3636 = vmatprep.subr.mxu0 0.0
    %3637 = vmatpush1.xpose.msra.mxu0 0.0
    %3638 = vmatprep.subr.mxu0 0.0
    %3639 = vmatpush1.xpose.msra.mxu0 0.0
    %3640 = vmatprep.subr.mxu0 0.0
    %3641 = vmatpush1.xpose.msra.mxu0 0.0
    %3642 = vmatprep.subr.mxu0 0.0
    %3643 = vmatpush1.xpose.msra.mxu0 0.0
    %3644 = vmatprep.subr.mxu0 0.0
    %3645 = vmatpush1.xpose.msra.mxu0 0.0
    %3646 = vmatprep.subr.mxu0 0.0
    %3647 = vmatpush1.xpose.msra.mxu0 0.0
    %3648 = vmatprep.subr.mxu0 0.0
    %3649 = vmatpush1.xpose.msra.mxu0 0.0
    %3650 = vmatprep.subr.mxu0 0.0
    %3651 = vmatpush1.xpose.msra.mxu0 0.0
    %3652 = vmatprep.subr.mxu0 0.0
    %3653 = vmatpush1.xpose.msra.mxu0 0.0
    %3654 = vmatprep.subr.mxu0 0.0
    %3655 = vmatpush1.xpose.msra.mxu0 0.0
    %3656 = vmatprep.subr.mxu0 0.0
    %3657 = vmatpush1.xpose.msra.mxu0 0.0
    %3658 = vmatprep.subr.mxu0 0.0
    %3659 = vmatpush1.xpose.msra.mxu0 0.0
    %3660 = vmatprep.subr.mxu0 0.0
    %3661 = vmatpush1.xpose.msra.mxu0 0.0
    %3662 = vmatprep.subr.mxu0 0.0
    %3663 = vmatpush1.xpose.msra.mxu0 0.0
    %3664 = vmatprep.subr.mxu0 0.0
    %3665 = vmatpush1.xpose.msra.mxu0 0.0
    %3666 = vmatprep.subr.mxu0 0.0
    %3667 = vmatpush1.xpose.msra.mxu0 0.0
    %3668 = vmatprep.subr.mxu0 0.0
    %3669 = vmatpush1.xpose.msra.mxu0 0.0
    %3670 = vmatprep.subr.mxu0 0.0
    %3671 = vmatpush1.xpose.msra.mxu0 0.0
    %3672 = vmatprep.mubr.f32.mxu0 0.0
    %3673 = vmatmul.mubr.f32.gmra.mrb[0].mxu0 %v3600
    %v3674 = vpop.f32.mrb[0].mxu0
    %v3675 = vadd.f32 0.0, %v3674
    %v3676 = vpop.f32.mrb[0].mxu0
    %3677 = vdwg.mxu0
    %v3678 = vmul.f32 %v3675, 0.35355338
    %v3679 = vsel %vm2698, %v3678, -inf
    %3680 = vmax.xlane.f32.xlu0 %v3679
    %v3681 = vpop.xlane.xlu0 %3680
    %v3682 = vsub.f32 %v3678, %v3681
    %v3683 = vmul.f32 %v3682, 1.442695
    %v3684 = vpow.pop %v3683
    %v3685 = vsel %vm2698, %v3684, 0.0
    %3686 = vadd.xlane.f32.xlu0 %v3685
    %v3687 = vpop.xlane.xlu0 %3686
    %v3688 = vrcp.pop %v3687
    %v3689 = vmul.f32 %v3684, %v3688
    %v3691 = vsel %vm2698, %v3689, 0
    %3693 = vmatprep.subr.mxu0 0.0
    %3694 = vmatpush1.msra.mxu0 %v2606
    %3695 = vmatprep.subr.mxu0 0.0
    %3696 = vmatpush1.msra.mxu0 %v2611
    %3697 = vmatprep.subr.mxu0 0.0
    %3698 = vmatpush1.msra.mxu0 0.0
    %3699 = vmatprep.subr.mxu0 0.0
    %3700 = vmatpush1.msra.mxu0 0.0
    %3701 = vmatprep.subr.mxu0 0.0
    %3702 = vmatpush1.msra.mxu0 0.0
    %3703 = vmatprep.subr.mxu0 0.0
    %3704 = vmatpush1.msra.mxu0 0.0
    %3705 = vmatprep.subr.mxu0 0.0
    %3706 = vmatpush1.msra.mxu0 0.0
    %3707 = vmatprep.subr.mxu0 0.0
    %3708 = vmatpush1.msra.mxu0 0.0
    %3709 = vmatprep.subr.mxu0 0.0
    %3710 = vmatpush1.msra.mxu0 0.0
    %3711 = vmatprep.subr.mxu0 0.0
    %3712 = vmatpush1.msra.mxu0 0.0
    %3713 = vmatprep.subr.mxu0 0.0
    %3714 = vmatpush1.msra.mxu0 0.0
    %3715 = vmatprep.subr.mxu0 0.0
    %3716 = vmatpush1.msra.mxu0 0.0
    %3717 = vmatprep.subr.mxu0 0.0
    %3718 = vmatpush1.msra.mxu0 0.0
    %3719 = vmatprep.subr.mxu0 0.0
    %3720 = vmatpush1.msra.mxu0 0.0
    %3721 = vmatprep.subr.mxu0 0.0
    %3722 = vmatpush1.msra.mxu0 0.0
    %3723 = vmatprep.subr.mxu0 0.0
    %3724 = vmatpush1.msra.mxu0 0.0
    %3725 = vmatprep.subr.mxu0 0.0
    %3726 = vmatpush1.msra.mxu0 0.0
    %3727 = vmatprep.subr.mxu0 0.0
    %3728 = vmatpush1.msra.mxu0 0.0
    %3729 = vmatprep.subr.mxu0 0.0
    %3730 = vmatpush1.msra.mxu0 0.0
    %3731 = vmatprep.subr.mxu0 0.0
    %3732 = vmatpush1.msra.mxu0 0.0
    %3733 = vmatprep.subr.mxu0 0.0
    %3734 = vmatpush1.msra.mxu0 0.0
    %3735 = vmatprep.subr.mxu0 0.0
    %3736 = vmatpush1.msra.mxu0 0.0
    %3737 = vmatprep.subr.mxu0 0.0
    %3738 = vmatpush1.msra.mxu0 0.0
    %3739 = vmatprep.subr.mxu0 0.0
    %3740 = vmatpush1.msra.mxu0 0.0
    %3741 = vmatprep.subr.mxu0 0.0
    %3742 = vmatpush1.msra.mxu0 0.0
    %3743 = vmatprep.subr.mxu0 0.0
    %3744 = vmatpush1.msra.mxu0 0.0
    %3745 = vmatprep.subr.mxu0 0.0
    %3746 = vmatpush1.msra.mxu0 0.0
    %3747 = vmatprep.subr.mxu0 0.0
    %3748 = vmatpush1.msra.mxu0 0.0
    %3749 = vmatprep.subr.mxu0 0.0
    %3750 = vmatpush1.msra.mxu0 0.0
    %3751 = vmatprep.subr.mxu0 0.0
    %3752 = vmatpush1.msra.mxu0 0.0
    %3753 = vmatprep.subr.mxu0 0.0
    %3754 = vmatpush1.msra.mxu0 0.0
    %3755 = vmatprep.subr.mxu0 0.0
    %3756 = vmatpush1.msra.mxu0 0.0
    %3757 = vmatprep.mubr.f32.mxu0 0.0
    %3758 = vmatmul.mubr.f32.gmra.mrb[0].mxu0 %v3691
    %v3759 = vpop.f32.mrb[0].mxu0
    %v3760 = vadd.f32 0.0, %v3759
    %v3761 = vpop.f32.mrb[0].mxu0
    %3762 = vdwg.mxu0
    %3763 = vrot.lane.b32.xlu0 %v2405, 120
    %v3764 = vpop.permute.xlu0 %3763
    %3765 = vrot.lane.b32.xlu0 %v2505, 120
    %v3766 = vpop.permute.xlu0 %3765
    %3767 = vrot.lane.b32.xlu0 %v2510, 120
    %v3768 = vpop.permute.xlu0 %3767
    %v3769 = vsel %vm363, %v3764, 0
    %v3771 = vsel %vm363, %v3766, 0
    %v3773 = vsel %vm363, %v3768, 0
    %3775 = vmatprep.subr.mxu0 0.0
    %3776 = vmatpush1.xpose.msra.mxu0 %v3771
    %3777 = vmatprep.subr.mxu0 0.0
    %3778 = vmatpush1.xpose.msra.mxu0 %v3773
    %3779 = vmatprep.subr.mxu0 0.0
    %3780 = vmatpush1.xpose.msra.mxu0 0.0
    %3781 = vmatprep.subr.mxu0 0.0
    %3782 = vmatpush1.xpose.msra.mxu0 0.0
    %3783 = vmatprep.subr.mxu0 0.0
    %3784 = vmatpush1.xpose.msra.mxu0 0.0
    %3785 = vmatprep.subr.mxu0 0.0
    %3786 = vmatpush1.xpose.msra.mxu0 0.0
    %3787 = vmatprep.subr.mxu0 0.0
    %3788 = vmatpush1.xpose.msra.mxu0 0.0
    %3789 = vmatprep.subr.mxu0 0.0
    %3790 = vmatpush1.xpose.msra.mxu0 0.0
    %3791 = vmatprep.subr.mxu0 0.0
    %3792 = vmatpush1.xpose.msra.mxu0 0.0
    %3793 = vmatprep.subr.mxu0 0.0
    %3794 = vmatpush1.xpose.msra.mxu0 0.0
    %3795 = vmatprep.subr.mxu0 0.0
    %3796 = vmatpush1.xpose.msra.mxu0 0.0
    %3797 = vmatprep.subr.mxu0 0.0
    %3798 = vmatpush1.xpose.msra.mxu0 0.0
    %3799 = vmatprep.subr.mxu0 0.0
    %3800 = vmatpush1.xpose.msra.mxu0 0.0
    %3801 = vmatprep.subr.mxu0 0.0
    %3802 = vmatpush1.xpose.msra.mxu0 0.0
    %3803 = vmatprep.subr.mxu0 0.0
    %3804 = vmatpush1.xpose.msra.mxu0 0.0
    %3805 = vmatprep.subr.mxu0 0.0
    %3806 = vmatpush1.xpose.msra.mxu0 0.0
    %3807 = vmatprep.subr.mxu0 0.0
    %3808 = vmatpush1.xpose.msra.mxu0 0.0
    %3809 = vmatprep.subr.mxu0 0.0
    %3810 = vmatpush1.xpose.msra.mxu0 0.0
    %3811 = vmatprep.subr.mxu0 0.0
    %3812 = vmatpush1.xpose.msra.mxu0 0.0
    %3813 = vmatprep.subr.mxu0 0.0
    %3814 = vmatpush1.xpose.msra.mxu0 0.0
    %3815 = vmatprep.subr.mxu0 0.0
    %3816 = vmatpush1.xpose.msra.mxu0 0.0
    %3817 = vmatprep.subr.mxu0 0.0
    %3818 = vmatpush1.xpose.msra.mxu0 0.0
    %3819 = vmatprep.subr.mxu0 0.0
    %3820 = vmatpush1.xpose.msra.mxu0 0.0
    %3821 = vmatprep.subr.mxu0 0.0
    %3822 = vmatpush1.xpose.msra.mxu0 0.0
    %3823 = vmatprep.subr.mxu0 0.0
    %3824 = vmatpush1.xpose.msra.mxu0 0.0
    %3825 = vmatprep.subr.mxu0 0.0
    %3826 = vmatpush1.xpose.msra.mxu0 0.0
    %3827 = vmatprep.subr.mxu0 0.0
    %3828 = vmatpush1.xpose.msra.mxu0 0.0
    %3829 = vmatprep.subr.mxu0 0.0
    %3830 = vmatpush1.xpose.msra.mxu0 0.0
    %3831 = vmatprep.subr.mxu0 0.0
    %3832 = vmatpush1.xpose.msra.mxu0 0.0
    %3833 = vmatprep.subr.mxu0 0.0
    %3834 = vmatpush1.xpose.msra.mxu0 0.0
    %3835 = vmatprep.subr.mxu0 0.0
    %3836 = vmatpush1.xpose.msra.mxu0 0.0
    %3837 = vmatprep.subr.mxu0 0.0
    %3838 = vmatpush1.xpose.msra.mxu0 0.0
    %3839 = vmatprep.mubr.f32.mxu0 0.0
    %3840 = vmatmul.mubr.f32.gmra.mrb[0].mxu0 %v3769
    %v3841 = vpop.f32.mrb[0].mxu0
    %v3842 = vadd.f32 0.0, %v3841
    %v3843 = vpop.f32.mrb[0].mxu0
    %3844 = vdwg.mxu0
    %v3845 = vmul.f32 %v3842, 0.35355338
    %v3846 = vsel %vm2698, %v3845, -inf
    %3847 = vmax.xlane.f32.xlu0 %v3846
    %v3848 = vpop.xlane.xlu0 %3847
    %v3849 = vsub.f32 %v3845, %v3848
    %v3850 = vmul.f32 %v3849, 1.442695
    %v3851 = vpow.pop %v3850
    %v3852 = vsel %vm2698, %v3851, 0.0
    %3853 = vadd.xlane.f32.xlu0 %v3852
    %v3854 = vpop.xlane.xlu0 %3853
    %v3855 = vrcp.pop %v3854
    %v3856 = vmul.f32 %v3851, %v3855
    %3859 = vrot.lane.b32.xlu0 %v2606, 120
    %v3860 = vpop.permute.xlu0 %3859
    %3861 = vrot.lane.b32.xlu0 %v2611, 120
    %v3862 = vpop.permute.xlu0 %3861
    %v3866 = vsel %vm2698, %v3856, 0
    %3868 = vmatprep.subr.mxu0 0.0
    %3869 = vmatpush1.msra.mxu0 %v3860
    %3870 = vmatprep.subr.mxu0 0.0
    %3871 = vmatpush1.msra.mxu0 %v3862
    %3872 = vmatprep.subr.mxu0 0.0
    %3873 = vmatpush1.msra.mxu0 0.0
    %3874 = vmatprep.subr.mxu0 0.0
    %3875 = vmatpush1.msra.mxu0 0.0
    %3876 = vmatprep.subr.mxu0 0.0
    %3877 = vmatpush1.msra.mxu0 0.0
    %3878 = vmatprep.subr.mxu0 0.0
    %3879 = vmatpush1.msra.mxu0 0.0
    %3880 = vmatprep.subr.mxu0 0.0
    %3881 = vmatpush1.msra.mxu0 0.0
    %3882 = vmatprep.subr.mxu0 0.0
    %3883 = vmatpush1.msra.mxu0 0.0
    %3884 = vmatprep.subr.mxu0 0.0
    %3885 = vmatpush1.msra.mxu0 0.0
    %3886 = vmatprep.subr.mxu0 0.0
    %3887 = vmatpush1.msra.mxu0 0.0
    %3888 = vmatprep.subr.mxu0 0.0
    %3889 = vmatpush1.msra.mxu0 0.0
    %3890 = vmatprep.subr.mxu0 0.0
    %3891 = vmatpush1.msra.mxu0 0.0
    %3892 = vmatprep.subr.mxu0 0.0
    %3893 = vmatpush1.msra.mxu0 0.0
    %3894 = vmatprep.subr.mxu0 0.0
    %3895 = vmatpush1.msra.mxu0 0.0
    %3896 = vmatprep.subr.mxu0 0.0
    %3897 = vmatpush1.msra.mxu0 0.0
    %3898 = vmatprep.subr.mxu0 0.0
    %3899 = vmatpush1.msra.mxu0 0.0
    %3900 = vmatprep.subr.mxu0 0.0
    %3901 = vmatpush1.msra.mxu0 0.0
    %3902 = vmatprep.subr.mxu0 0.0
    %3903 = vmatpush1.msra.mxu0 0.0
    %3904 = vmatprep.subr.mxu0 0.0
    %3905 = vmatpush1.msra.mxu0 0.0
    %3906 = vmatprep.subr.mxu0 0.0
    %3907 = vmatpush1.msra.mxu0 0.0
    %3908 = vmatprep.subr.mxu0 0.0
    %3909 = vmatpush1.msra.mxu0 0.0
    %3910 = vmatprep.subr.mxu0 0.0
    %3911 = vmatpush1.msra.mxu0 0.0
    %3912 = vmatprep.subr.mxu0 0.0
    %3913 = vmatpush1.msra.mxu0 0.0
    %3914 = vmatprep.subr.mxu0 0.0
    %3915 = vmatpush1.msra.mxu0 0.0
    %3916 = vmatprep.subr.mxu0 0.0
    %3917 = vmatpush1.msra.mxu0 0.0
    %3918 = vmatprep.subr.mxu0 0.0
    %3919 = vmatpush1.msra.mxu0 0.0
    %3920 = vmatprep.subr.mxu0 0.0
    %3921 = vmatpush1.msra.mxu0 0.0
    %3922 = vmatprep.subr.mxu0 0.0
    %3923 = vmatpush1.msra.mxu0 0.0
    %3924 = vmatprep.subr.mxu0 0.0
    %3925 = vmatpush1.msra.mxu0 0.0
    %3926 = vmatprep.subr.mxu0 0.0
    %3927 = vmatpush1.msra.mxu0 0.0
    %3928 = vmatprep.subr.mxu0 0.0
    %3929 = vmatpush1.msra.mxu0 0.0
    %3930 = vmatprep.subr.mxu0 0.0
    %3931 = vmatpush1.msra.mxu0 0.0
    %3932 = vmatprep.mubr.f32.mxu0 0.0
    %3933 = vmatmul.mubr.f32.gmra.mrb[0].mxu0 %v3866
    %v3934 = vpop.f32.mrb[0].mxu0
    %v3935 = vadd.f32 0.0, %v3934
    %v3936 = vpop.f32.mrb[0].mxu0
    %3937 = vdwg.mxu0
    %v3939 = vsel %vm363, %v3935, 0
    %3941 = vmatprep.subr.mxu0 0.0
    %3942 = vmatpush1.msra.mxu0 %v2615
    %3943 = vmatprep.subr.mxu0 0.0
    %3944 = vmatpush1.msra.mxu0 0.0
    %3945 = vmatprep.subr.mxu0 0.0
    %3946 = vmatpush1.msra.mxu0 0.0
    %3947 = vmatprep.subr.mxu0 0.0
    %3948 = vmatpush1.msra.mxu0 0.0
    %3949 = vmatprep.subr.mxu0 0.0
    %3950 = vmatpush1.msra.mxu0 0.0
    %3951 = vmatprep.subr.mxu0 0.0
    %3952 = vmatpush1.msra.mxu0 0.0
    %3953 = vmatprep.subr.mxu0 0.0
    %3954 = vmatpush1.msra.mxu0 0.0
    %3955 = vmatprep.subr.mxu0 0.0
    %3956 = vmatpush1.msra.mxu0 0.0
    %3957 = vmatprep.subr.mxu0 0.0
    %3958 = vmatpush1.msra.mxu0 0.0
    %3959 = vmatprep.subr.mxu0 0.0
    %3960 = vmatpush1.msra.mxu0 0.0
    %3961 = vmatprep.subr.mxu0 0.0
    %3962 = vmatpush1.msra.mxu0 0.0
    %3963 = vmatprep.subr.mxu0 0.0
    %3964 = vmatpush1.msra.mxu0 0.0
    %3965 = vmatprep.subr.mxu0 0.0
    %3966 = vmatpush1.msra.mxu0 0.0
    %3967 = vmatprep.subr.mxu0 0.0
    %3968 = vmatpush1.msra.mxu0 0.0
    %3969 = vmatprep.subr.mxu0 0.0
    %3970 = vmatpush1.msra.mxu0 0.0
    %3971 = vmatprep.subr.mxu0 0.0
    %3972 = vmatpush1.msra.mxu0 0.0
    %3973 = vmatprep.subr.mxu0 0.0
    %3974 = vmatpush1.msra.mxu0 0.0
    %3975 = vmatprep.subr.mxu0 0.0
    %3976 = vmatpush1.msra.mxu0 0.0
    %3977 = vmatprep.subr.mxu0 0.0
    %3978 = vmatpush1.msra.mxu0 0.0
    %3979 = vmatprep.subr.mxu0 0.0
    %3980 = vmatpush1.msra.mxu0 0.0
    %3981 = vmatprep.subr.mxu0 0.0
    %3982 = vmatpush1.msra.mxu0 0.0
    %3983 = vmatprep.subr.mxu0 0.0
    %3984 = vmatpush1.msra.mxu0 0.0
    %3985 = vmatprep.subr.mxu0 0.0
    %3986 = vmatpush1.msra.mxu0 0.0
    %3987 = vmatprep.subr.mxu0 0.0
    %3988 = vmatpush1.msra.mxu0 0.0
    %3989 = vmatprep.subr.mxu0 0.0
    %3990 = vmatpush1.msra.mxu0 0.0
    %3991 = vmatprep.subr.mxu0 0.0
    %3992 = vmatpush1.msra.mxu0 0.0
    %3993 = vmatprep.subr.mxu0 0.0
    %3994 = vmatpush1.msra.mxu0 0.0
    %3995 = vmatprep.subr.mxu0 0.0
    %3996 = vmatpush1.msra.mxu0 0.0
    %3997 = vmatprep.subr.mxu0 0.0
    %3998 = vmatpush1.msra.mxu0 0.0
    %3999 = vmatprep.subr.mxu0 0.0
    %4000 = vmatpush1.msra.mxu0 0.0
    %4001 = vmatprep.subr.mxu0 0.0
    %4002 = vmatpush1.msra.mxu0 0.0
    %4003 = vmatprep.subr.mxu0 0.0
    %4004 = vmatpush1.msra.mxu0 0.0
    %4005 = vmatprep.mubr.f32.mxu0 0.0
    %4006 = vmatmul.mubr.f32.gmra.mrb[0].mxu0 %v3939
    %v4007 = vpop.f32.mrb[0].mxu0
    %v4008 = vadd.f32 0.0, %v4007
    %v4009 = vpop.f32.mrb[0].mxu0
    %4010 = vdwg.mxu0
    %v4012 = vsel %vm363, %v3760, 0
    %4014 = vmatprep.subr.mxu0 0.0
    %4015 = vmatpush1.msra.mxu0 %v2614
    %4016 = vmatprep.subr.mxu0 0.0
    %4017 = vmatpush1.msra.mxu0 0.0
    %4018 = vmatprep.subr.mxu0 0.0
    %4019 = vmatpush1.msra.mxu0 0.0
    %4020 = vmatprep.subr.mxu0 0.0
    %4021 = vmatpush1.msra.mxu0 0.0
    %4022 = vmatprep.subr.mxu0 0.0
    %4023 = vmatpush1.msra.mxu0 0.0
    %4024 = vmatprep.subr.mxu0 0.0
    %4025 = vmatpush1.msra.mxu0 0.0
    %4026 = vmatprep.subr.mxu0 0.0
    %4027 = vmatpush1.msra.mxu0 0.0
    %4028 = vmatprep.subr.mxu0 0.0
    %4029 = vmatpush1.msra.mxu0 0.0
    %4030 = vmatprep.subr.mxu0 0.0
    %4031 = vmatpush1.msra.mxu0 0.0
    %4032 = vmatprep.subr.mxu0 0.0
    %4033 = vmatpush1.msra.mxu0 0.0
    %4034 = vmatprep.subr.mxu0 0.0
    %4035 = vmatpush1.msra.mxu0 0.0
    %4036 = vmatprep.subr.mxu0 0.0
    %4037 = vmatpush1.msra.mxu0 0.0
    %4038 = vmatprep.subr.mxu0 0.0
    %4039 = vmatpush1.msra.mxu0 0.0
    %4040 = vmatprep.subr.mxu0 0.0
    %4041 = vmatpush1.msra.mxu0 0.0
    %4042 = vmatprep.subr.mxu0 0.0
    %4043 = vmatpush1.msra.mxu0 0.0
    %4044 = vmatprep.subr.mxu0 0.0
    %4045 = vmatpush1.msra.mxu0 0.0
    %4046 = vmatprep.subr.mxu0 0.0
    %4047 = vmatpush1.msra.mxu0 0.0
    %4048 = vmatprep.subr.mxu0 0.0
    %4049 = vmatpush1.msra.mxu0 0.0
    %4050 = vmatprep.subr.mxu0 0.0
    %4051 = vmatpush1.msra.mxu0 0.0
    %4052 = vmatprep.subr.mxu0 0.0
    %4053 = vmatpush1.msra.mxu0 0.0
    %4054 = vmatprep.subr.mxu0 0.0
    %4055 = vmatpush1.msra.mxu0 0.0
    %4056 = vmatprep.subr.mxu0 0.0
    %4057 = vmatpush1.msra.mxu0 0.0
    %4058 = vmatprep.subr.mxu0 0.0
    %4059 = vmatpush1.msra.mxu0 0.0
    %4060 = vmatprep.subr.mxu0 0.0
    %4061 = vmatpush1.msra.mxu0 0.0
    %4062 = vmatprep.subr.mxu0 0.0
    %4063 = vmatpush1.msra.mxu0 0.0
    %4064 = vmatprep.subr.mxu0 0.0
    %4065 = vmatpush1.msra.mxu0 0.0
    %4066 = vmatprep.subr.mxu0 0.0
    %4067 = vmatpush1.msra.mxu0 0.0
    %4068 = vmatprep.subr.mxu0 0.0
    %4069 = vmatpush1.msra.mxu0 0.0
    %4070 = vmatprep.subr.mxu0 0.0
    %4071 = vmatpush1.msra.mxu0 0.0
    %4072 = vmatprep.subr.mxu0 0.0
    %4073 = vmatpush1.msra.mxu0 0.0
    %4074 = vmatprep.subr.mxu0 0.0
    %4075 = vmatpush1.msra.mxu0 0.0
    %4076 = vmatprep.subr.mxu0 0.0
    %4077 = vmatpush1.msra.mxu0 0.0
    %4078 = vmatprep.mubr.f32.mxu0 0.0
    %4079 = vmatmul.mubr.f32.gmra.mrb[0].mxu0 %v4012
    %v4080 = vpop.f32.mrb[0].mxu0
    %v4081 = vadd.f32 %v4008, %v4080
    %v4082 = vpop.f32.mrb[0].mxu0
    %4083 = vdwg.mxu0
    %4084 = vrot.lane.b32.xlu0 %v2405, 112
    %v4085 = vpop.permute.xlu0 %4084
    %4086 = vrot.lane.b32.xlu0 %v2505, 112
    %v4087 = vpop.permute.xlu0 %4086
    %4088 = vrot.lane.b32.xlu0 %v2510, 112
    %v4089 = vpop.permute.xlu0 %4088
    %v4090 = vsel %vm363, %v4085, 0
    %v4092 = vsel %vm363, %v4087, 0
    %v4094 = vsel %vm363, %v4089, 0
    %4096 = vmatprep.subr.mxu0 0.0
    %4097 = vmatpush1.xpose.msra.mxu0 %v4092
    %4098 = vmatprep.subr.mxu0 0.0
    %4099 = vmatpush1.xpose.msra.mxu0 %v4094
    %4100 = vmatprep.subr.mxu0 0.0
    %4101 = vmatpush1.xpose.msra.mxu0 0.0
    %4102 = vmatprep.subr.mxu0 0.0
    %4103 = vmatpush1.xpose.msra.mxu0 0.0
    %4104 = vmatprep.subr.mxu0 0.0
    %4105 = vmatpush1.xpose.msra.mxu0 0.0
    %4106 = vmatprep.subr.mxu0 0.0
    %4107 = vmatpush1.xpose.msra.mxu0 0.0
    %4108 = vmatprep.subr.mxu0 0.0
    %4109 = vmatpush1.xpose.msra.mxu0 0.0
    %4110 = vmatprep.subr.mxu0 0.0
    %4111 = vmatpush1.xpose.msra.mxu0 0.0
    %4112 = vmatprep.subr.mxu0 0.0
    %4113 = vmatpush1.xpose.msra.mxu0 0.0
    %4114 = vmatprep.subr.mxu0 0.0
    %4115 = vmatpush1.xpose.msra.mxu0 0.0
    %4116 = vmatprep.subr.mxu0 0.0
    %4117 = vmatpush1.xpose.msra.mxu0 0.0
    %4118 = vmatprep.subr.mxu0 0.0
    %4119 = vmatpush1.xpose.msra.mxu0 0.0
    %4120 = vmatprep.subr.mxu0 0.0
    %4121 = vmatpush1.xpose.msra.mxu0 0.0
    %4122 = vmatprep.subr.mxu0 0.0
    %4123 = vmatpush1.xpose.msra.mxu0 0.0
    %4124 = vmatprep.subr.mxu0 0.0
    %4125 = vmatpush1.xpose.msra.mxu0 0.0
    %4126 = vmatprep.subr.mxu0 0.0
    %4127 = vmatpush1.xpose.msra.mxu0 0.0
    %4128 = vmatprep.subr.mxu0 0.0
    %4129 = vmatpush1.xpose.msra.mxu0 0.0
    %4130 = vmatprep.subr.mxu0 0.0
    %4131 = vmatpush1.xpose.msra.mxu0 0.0
    %4132 = vmatprep.subr.mxu0 0.0
    %4133 = vmatpush1.xpose.msra.mxu0 0.0
    %4134 = vmatprep.subr.mxu0 0.0
    %4135 = vmatpush1.xpose.msra.mxu0 0.0
    %4136 = vmatprep.subr.mxu0 0.0
    %4137 = vmatpush1.xpose.msra.mxu0 0.0
    %4138 = vmatprep.subr.mxu0 0.0
    %4139 = vmatpush1.xpose.msra.mxu0 0.0
    %4140 = vmatprep.subr.mxu0 0.0
    %4141 = vmatpush1.xpose.msra.mxu0 0.0
    %4142 = vmatprep.subr.mxu0 0.0
    %4143 = vmatpush1.xpose.msra.mxu0 0.0
    %4144 = vmatprep.subr.mxu0 0.0
    %4145 = vmatpush1.xpose.msra.mxu0 0.0
    %4146 = vmatprep.subr.mxu0 0.0
    %4147 = vmatpush1.xpose.msra.mxu0 0.0
    %4148 = vmatprep.subr.mxu0 0.0
    %4149 = vmatpush1.xpose.msra.mxu0 0.0
    %4150 = vmatprep.subr.mxu0 0.0
    %4151 = vmatpush1.xpose.msra.mxu0 0.0
    %4152 = vmatprep.subr.mxu0 0.0
    %4153 = vmatpush1.xpose.msra.mxu0 0.0
    %4154 = vmatprep.subr.mxu0 0.0
    %4155 = vmatpush1.xpose.msra.mxu0 0.0
    %4156 = vmatprep.subr.mxu0 0.0
    %4157 = vmatpush1.xpose.msra.mxu0 0.0
    %4158 = vmatprep.subr.mxu0 0.0
    %4159 = vmatpush1.xpose.msra.mxu0 0.0
    %4160 = vmatprep.mubr.f32.mxu0 0.0
    %4161 = vmatmul.mubr.f32.gmra.mrb[0].mxu0 %v4090
    %v4162 = vpop.f32.mrb[0].mxu0
    %v4163 = vadd.f32 0.0, %v4162
    %v4164 = vpop.f32.mrb[0].mxu0
    %4165 = vdwg.mxu0
    %v4166 = vmul.f32 %v4163, 0.35355338
    %v4167 = vsel %vm2698, %v4166, -inf
    %4168 = vmax.xlane.f32.xlu0 %v4167
    %v4169 = vpop.xlane.xlu0 %4168
    %v4170 = vsub.f32 %v4166, %v4169
    %v4171 = vmul.f32 %v4170, 1.442695
    %v4172 = vpow.pop %v4171
    %v4173 = vsel %vm2698, %v4172, 0.0
    %4174 = vadd.xlane.f32.xlu0 %v4173
    %v4175 = vpop.xlane.xlu0 %4174
    %v4176 = vrcp.pop %v4175
    %v4177 = vmul.f32 %v4172, %v4176
    %4178 = vrot.lane.b32.xlu0 %v2606, 112
    %v4179 = vpop.permute.xlu0 %4178
    %4180 = vrot.lane.b32.xlu0 %v2611, 112
    %v4181 = vpop.permute.xlu0 %4180
    %v4185 = vsel %vm2698, %v4177, 0
    %4187 = vmatprep.subr.mxu0 0.0
    %4188 = vmatpush1.msra.mxu0 %v4179
    %4189 = vmatprep.subr.mxu0 0.0
    %4190 = vmatpush1.msra.mxu0 %v4181
    %4191 = vmatprep.subr.mxu0 0.0
    %4192 = vmatpush1.msra.mxu0 0.0
    %4193 = vmatprep.subr.mxu0 0.0
    %4194 = vmatpush1.msra.mxu0 0.0
    %4195 = vmatprep.subr.mxu0 0.0
    %4196 = vmatpush1.msra.mxu0 0.0
    %4197 = vmatprep.subr.mxu0 0.0
    %4198 = vmatpush1.msra.mxu0 0.0
    %4199 = vmatprep.subr.mxu0 0.0
    %4200 = vmatpush1.msra.mxu0 0.0
    %4201 = vmatprep.subr.mxu0 0.0
    %4202 = vmatpush1.msra.mxu0 0.0
    %4203 = vmatprep.subr.mxu0 0.0
    %4204 = vmatpush1.msra.mxu0 0.0
    %4205 = vmatprep.subr.mxu0 0.0
    %4206 = vmatpush1.msra.mxu0 0.0
    %4207 = vmatprep.subr.mxu0 0.0
    %4208 = vmatpush1.msra.mxu0 0.0
    %4209 = vmatprep.subr.mxu0 0.0
    %4210 = vmatpush1.msra.mxu0 0.0
    %4211 = vmatprep.subr.mxu0 0.0
    %4212 = vmatpush1.msra.mxu0 0.0
    %4213 = vmatprep.subr.mxu0 0.0
    %4214 = vmatpush1.msra.mxu0 0.0
    %4215 = vmatprep.subr.mxu0 0.0
    %4216 = vmatpush1.msra.mxu0 0.0
    %4217 = vmatprep.subr.mxu0 0.0
    %4218 = vmatpush1.msra.mxu0 0.0
    %4219 = vmatprep.subr.mxu0 0.0
    %4220 = vmatpush1.msra.mxu0 0.0
    %4221 = vmatprep.subr.mxu0 0.0
    %4222 = vmatpush1.msra.mxu0 0.0
    %4223 = vmatprep.subr.mxu0 0.0
    %4224 = vmatpush1.msra.mxu0 0.0
    %4225 = vmatprep.subr.mxu0 0.0
    %4226 = vmatpush1.msra.mxu0 0.0
    %4227 = vmatprep.subr.mxu0 0.0
    %4228 = vmatpush1.msra.mxu0 0.0
    %4229 = vmatprep.subr.mxu0 0.0
    %4230 = vmatpush1.msra.mxu0 0.0
    %4231 = vmatprep.subr.mxu0 0.0
    %4232 = vmatpush1.msra.mxu0 0.0
    %4233 = vmatprep.subr.mxu0 0.0
    %4234 = vmatpush1.msra.mxu0 0.0
    %4235 = vmatprep.subr.mxu0 0.0
    %4236 = vmatpush1.msra.mxu0 0.0
    %4237 = vmatprep.subr.mxu0 0.0
    %4238 = vmatpush1.msra.mxu0 0.0
    %4239 = vmatprep.subr.mxu0 0.0
    %4240 = vmatpush1.msra.mxu0 0.0
    %4241 = vmatprep.subr.mxu0 0.0
    %4242 = vmatpush1.msra.mxu0 0.0
    %4243 = vmatprep.subr.mxu0 0.0
    %4244 = vmatpush1.msra.mxu0 0.0
    %4245 = vmatprep.subr.mxu0 0.0
    %4246 = vmatpush1.msra.mxu0 0.0
    %4247 = vmatprep.subr.mxu0 0.0
    %4248 = vmatpush1.msra.mxu0 0.0
    %4249 = vmatprep.subr.mxu0 0.0
    %4250 = vmatpush1.msra.mxu0 0.0
    %4251 = vmatprep.mubr.f32.mxu0 0.0
    %4252 = vmatmul.mubr.f32.gmra.mrb[0].mxu0 %v4185
    %v4253 = vpop.f32.mrb[0].mxu0
    %v4254 = vadd.f32 0.0, %v4253
    %v4255 = vpop.f32.mrb[0].mxu0
    %4256 = vdwg.mxu0
    %v4258 = vsel %vm363, %v4254, 0
    %4260 = vmatprep.subr.mxu0 0.0
    %4261 = vmatpush1.msra.mxu0 %v2616
    %4262 = vmatprep.subr.mxu0 0.0
    %4263 = vmatpush1.msra.mxu0 0.0
    %4264 = vmatprep.subr.mxu0 0.0
    %4265 = vmatpush1.msra.mxu0 0.0
    %4266 = vmatprep.subr.mxu0 0.0
    %4267 = vmatpush1.msra.mxu0 0.0
    %4268 = vmatprep.subr.mxu0 0.0
    %4269 = vmatpush1.msra.mxu0 0.0
    %4270 = vmatprep.subr.mxu0 0.0
    %4271 = vmatpush1.msra.mxu0 0.0
    %4272 = vmatprep.subr.mxu0 0.0
    %4273 = vmatpush1.msra.mxu0 0.0
    %4274 = vmatprep.subr.mxu0 0.0
    %4275 = vmatpush1.msra.mxu0 0.0
    %4276 = vmatprep.subr.mxu0 0.0
    %4277 = vmatpush1.msra.mxu0 0.0
    %4278 = vmatprep.subr.mxu0 0.0
    %4279 = vmatpush1.msra.mxu0 0.0
    %4280 = vmatprep.subr.mxu0 0.0
    %4281 = vmatpush1.msra.mxu0 0.0
    %4282 = vmatprep.subr.mxu0 0.0
    %4283 = vmatpush1.msra.mxu0 0.0
    %4284 = vmatprep.subr.mxu0 0.0
    %4285 = vmatpush1.msra.mxu0 0.0
    %4286 = vmatprep.subr.mxu0 0.0
    %4287 = vmatpush1.msra.mxu0 0.0
    %4288 = vmatprep.subr.mxu0 0.0
    %4289 = vmatpush1.msra.mxu0 0.0
    %4290 = vmatprep.subr.mxu0 0.0
    %4291 = vmatpush1.msra.mxu0 0.0
    %4292 = vmatprep.subr.mxu0 0.0
    %4293 = vmatpush1.msra.mxu0 0.0
    %4294 = vmatprep.subr.mxu0 0.0
    %4295 = vmatpush1.msra.mxu0 0.0
    %4296 = vmatprep.subr.mxu0 0.0
    %4297 = vmatpush1.msra.mxu0 0.0
    %4298 = vmatprep.subr.mxu0 0.0
    %4299 = vmatpush1.msra.mxu0 0.0
    %4300 = vmatprep.subr.mxu0 0.0
    %4301 = vmatpush1.msra.mxu0 0.0
    %4302 = vmatprep.subr.mxu0 0.0
    %4303 = vmatpush1.msra.mxu0 0.0
    %4304 = vmatprep.subr.mxu0 0.0
    %4305 = vmatpush1.msra.mxu0 0.0
    %4306 = vmatprep.subr.mxu0 0.0
    %4307 = vmatpush1.msra.mxu0 0.0
    %4308 = vmatprep.subr.mxu0 0.0
    %4309 = vmatpush1.msra.mxu0 0.0
    %4310 = vmatprep.subr.mxu0 0.0
    %4311 = vmatpush1.msra.mxu0 0.0
    %4312 = vmatprep.subr.mxu0 0.0
    %4313 = vmatpush1.msra.mxu0 0.0
    %4314 = vmatprep.subr.mxu0 0.0
    %4315 = vmatpush1.msra.mxu0 0.0
    %4316 = vmatprep.subr.mxu0 0.0
    %4317 = vmatpush1.msra.mxu0 0.0
    %4318 = vmatprep.subr.mxu0 0.0
    %4319 = vmatpush1.msra.mxu0 0.0
    %4320 = vmatprep.subr.mxu0 0.0
    %4321 = vmatpush1.msra.mxu0 0.0
    %4322 = vmatprep.subr.mxu0 0.0
    %4323 = vmatpush1.msra.mxu0 0.0
    %4324 = vmatprep.mubr.f32.mxu0 0.0
    %4325 = vmatmul.mubr.f32.gmra.mrb[0].mxu0 %v4258
    %v4326 = vpop.f32.mrb[0].mxu0
    %v4327 = vadd.f32 0.0, %v4326
    %v4328 = vpop.f32.mrb[0].mxu0
    %4329 = vdwg.mxu0
    %v4330 = vadd.f32 %v4081, %v4327
    %4331 = vrot.lane.b32.xlu0 %v2405, 104
    %v4332 = vpop.permute.xlu0 %4331
    %4333 = vrot.lane.b32.xlu0 %v2505, 104
    %v4334 = vpop.permute.xlu0 %4333
    %4335 = vrot.lane.b32.xlu0 %v2510, 104
    %v4336 = vpop.permute.xlu0 %4335
    %v4337 = vsel %vm363, %v4332, 0
    %v4339 = vsel %vm363, %v4334, 0
    %v4341 = vsel %vm363, %v4336, 0
    %4343 = vmatprep.subr.mxu0 0.0
    %4344 = vmatpush1.xpose.msra.mxu0 %v4339
    %4345 = vmatprep.subr.mxu0 0.0
    %4346 = vmatpush1.xpose.msra.mxu0 %v4341
    %4347 = vmatprep.subr.mxu0 0.0
    %4348 = vmatpush1.xpose.msra.mxu0 0.0
    %4349 = vmatprep.subr.mxu0 0.0
    %4350 = vmatpush1.xpose.msra.mxu0 0.0
    %4351 = vmatprep.subr.mxu0 0.0
    %4352 = vmatpush1.xpose.msra.mxu0 0.0
    %4353 = vmatprep.subr.mxu0 0.0
    %4354 = vmatpush1.xpose.msra.mxu0 0.0
    %4355 = vmatprep.subr.mxu0 0.0
    %4356 = vmatpush1.xpose.msra.mxu0 0.0
    %4357 = vmatprep.subr.mxu0 0.0
    %4358 = vmatpush1.xpose.msra.mxu0 0.0
    %4359 = vmatprep.subr.mxu0 0.0
    %4360 = vmatpush1.xpose.msra.mxu0 0.0
    %4361 = vmatprep.subr.mxu0 0.0
    %4362 = vmatpush1.xpose.msra.mxu0 0.0
    %4363 = vmatprep.subr.mxu0 0.0
    %4364 = vmatpush1.xpose.msra.mxu0 0.0
    %4365 = vmatprep.subr.mxu0 0.0
    %4366 = vmatpush1.xpose.msra.mxu0 0.0
    %4367 = vmatprep.subr.mxu0 0.0
    %4368 = vmatpush1.xpose.msra.mxu0 0.0
    %4369 = vmatprep.subr.mxu0 0.0
    %4370 = vmatpush1.xpose.msra.mxu0 0.0
    %4371 = vmatprep.subr.mxu0 0.0
    %4372 = vmatpush1.xpose.msra.mxu0 0.0
    %4373 = vmatprep.subr.mxu0 0.0
    %4374 = vmatpush1.xpose.msra.mxu0 0.0
    %4375 = vmatprep.subr.mxu0 0.0
    %4376 = vmatpush1.xpose.msra.mxu0 0.0
    %4377 = vmatprep.subr.mxu0 0.0
    %4378 = vmatpush1.xpose.msra.mxu0 0.0
    %4379 = vmatprep.subr.mxu0 0.0
    %4380 = vmatpush1.xpose.msra.mxu0 0.0
    %4381 = vmatprep.subr.mxu0 0.0
    %4382 = vmatpush1.xpose.msra.mxu0 0.0
    %4383 = vmatprep.subr.mxu0 0.0
    %4384 = vmatpush1.xpose.msra.mxu0 0.0
    %4385 = vmatprep.subr.mxu0 0.0
    %4386 = vmatpush1.xpose.msra.mxu0 0.0
    %4387 = vmatprep.subr.mxu0 0.0
    %4388 = vmatpush1.xpose.msra.mxu0 0.0
    %4389 = vmatprep.subr.mxu0 0.0
    %4390 = vmatpush1.xpose.msra.mxu0 0.0
    %4391 = vmatprep.subr.mxu0 0.0
    %4392 = vmatpush1.xpose.msra.mxu0 0.0
    %4393 = vmatprep.subr.mxu0 0.0
    %4394 = vmatpush1.xpose.msra.mxu0 0.0
    %4395 = vmatprep.subr.mxu0 0.0
    %4396 = vmatpush1.xpose.msra.mxu0 0.0
    %4397 = vmatprep.subr.mxu0 0.0
    %4398 = vmatpush1.xpose.msra.mxu0 0.0
    %4399 = vmatprep.subr.mxu0 0.0
    %4400 = vmatpush1.xpose.msra.mxu0 0.0
    %4401 = vmatprep.subr.mxu0 0.0
    %4402 = vmatpush1.xpose.msra.mxu0 0.0
    %4403 = vmatprep.subr.mxu0 0.0
    %4404 = vmatpush1.xpose.msra.mxu0 0.0
    %4405 = vmatprep.subr.mxu0 0.0
    %4406 = vmatpush1.xpose.msra.mxu0 0.0
    %4407 = vmatprep.mubr.f32.mxu0 0.0
    %4408 = vmatmul.mubr.f32.gmra.mrb[0].mxu0 %v4337
    %v4409 = vpop.f32.mrb[0].mxu0
    %v4410 = vadd.f32 0.0, %v4409
    %v4411 = vpop.f32.mrb[0].mxu0
    %4412 = vdwg.mxu0
    %v4413 = vmul.f32 %v4410, 0.35355338
    %v4414 = vsel %vm2698, %v4413, -inf
    %4415 = vmax.xlane.f32.xlu0 %v4414
    %v4416 = vpop.xlane.xlu0 %4415
    %v4417 = vsub.f32 %v4413, %v4416
    %v4418 = vmul.f32 %v4417, 1.442695
    %v4419 = vpow.pop %v4418
    %v4420 = vsel %vm2698, %v4419, 0.0
    %4421 = vadd.xlane.f32.xlu0 %v4420
    %v4422 = vpop.xlane.xlu0 %4421
    %v4423 = vrcp.pop %v4422
    %v4424 = vmul.f32 %v4419, %v4423
    %4425 = vrot.lane.b32.xlu0 %v2606, 104
    %v4426 = vpop.permute.xlu0 %4425
    %4427 = vrot.lane.b32.xlu0 %v2611, 104
    %v4428 = vpop.permute.xlu0 %4427
    %v4432 = vsel %vm2698, %v4424, 0
    %4434 = vmatprep.subr.mxu0 0.0
    %4435 = vmatpush1.msra.mxu0 %v4426
    %4436 = vmatprep.subr.mxu0 0.0
    %4437 = vmatpush1.msra.mxu0 %v4428
    %4438 = vmatprep.subr.mxu0 0.0
    %4439 = vmatpush1.msra.mxu0 0.0
    %4440 = vmatprep.subr.mxu0 0.0
    %4441 = vmatpush1.msra.mxu0 0.0
    %4442 = vmatprep.subr.mxu0 0.0
    %4443 = vmatpush1.msra.mxu0 0.0
    %4444 = vmatprep.subr.mxu0 0.0
    %4445 = vmatpush1.msra.mxu0 0.0
    %4446 = vmatprep.subr.mxu0 0.0
    %4447 = vmatpush1.msra.mxu0 0.0
    %4448 = vmatprep.subr.mxu0 0.0
    %4449 = vmatpush1.msra.mxu0 0.0
    %4450 = vmatprep.subr.mxu0 0.0
    %4451 = vmatpush1.msra.mxu0 0.0
    %4452 = vmatprep.subr.mxu0 0.0
    %4453 = vmatpush1.msra.mxu0 0.0
    %4454 = vmatprep.subr.mxu0 0.0
    %4455 = vmatpush1.msra.mxu0 0.0
    %4456 = vmatprep.subr.mxu0 0.0
    %4457 = vmatpush1.msra.mxu0 0.0
    %4458 = vmatprep.subr.mxu0 0.0
    %4459 = vmatpush1.msra.mxu0 0.0
    %4460 = vmatprep.subr.mxu0 0.0
    %4461 = vmatpush1.msra.mxu0 0.0
    %4462 = vmatprep.subr.mxu0 0.0
    %4463 = vmatpush1.msra.mxu0 0.0
    %4464 = vmatprep.subr.mxu0 0.0
    %4465 = vmatpush1.msra.mxu0 0.0
    %4466 = vmatprep.subr.mxu0 0.0
    %4467 = vmatpush1.msra.mxu0 0.0
    %4468 = vmatprep.subr.mxu0 0.0
    %4469 = vmatpush1.msra.mxu0 0.0
    %4470 = vmatprep.subr.mxu0 0.0
    %4471 = vmatpush1.msra.mxu0 0.0
    %4472 = vmatprep.subr.mxu0 0.0
    %4473 = vmatpush1.msra.mxu0 0.0
    %4474 = vmatprep.subr.mxu0 0.0
    %4475 = vmatpush1.msra.mxu0 0.0
    %4476 = vmatprep.subr.mxu0 0.0
    %4477 = vmatpush1.msra.mxu0 0.0
    %4478 = vmatprep.subr.mxu0 0.0
    %4479 = vmatpush1.msra.mxu0 0.0
    %4480 = vmatprep.subr.mxu0 0.0
    %4481 = vmatpush1.msra.mxu0 0.0
    %4482 = vmatprep.subr.mxu0 0.0
    %4483 = vmatpush1.msra.mxu0 0.0
    %4484 = vmatprep.subr.mxu0 0.0
    %4485 = vmatpush1.msra.mxu0 0.0
    %4486 = vmatprep.subr.mxu0 0.0
    %4487 = vmatpush1.msra.mxu0 0.0
    %4488 = vmatprep.subr.mxu0 0.0
    %4489 = vmatpush1.msra.mxu0 0.0
    %4490 = vmatprep.subr.mxu0 0.0
    %4491 = vmatpush1.msra.mxu0 0.0
    %4492 = vmatprep.subr.mxu0 0.0
    %4493 = vmatpush1.msra.mxu0 0.0
    %4494 = vmatprep.subr.mxu0 0.0
    %4495 = vmatpush1.msra.mxu0 0.0
    %4496 = vmatprep.subr.mxu0 0.0
    %4497 = vmatpush1.msra.mxu0 0.0
    %4498 = vmatprep.mubr.f32.mxu0 0.0
    %4499 = vmatmul.mubr.f32.gmra.mrb[0].mxu0 %v4432
    %v4500 = vpop.f32.mrb[0].mxu0
    %v4501 = vadd.f32 0.0, %v4500
    %v4502 = vpop.f32.mrb[0].mxu0
    %4503 = vdwg.mxu0
    %v4505 = vsel %vm363, %v4501, 0
    %4507 = vmatprep.subr.mxu0 0.0
    %4508 = vmatpush1.msra.mxu0 %v2617
    %4509 = vmatprep.subr.mxu0 0.0
    %4510 = vmatpush1.msra.mxu0 0.0
    %4511 = vmatprep.subr.mxu0 0.0
    %4512 = vmatpush1.msra.mxu0 0.0
    %4513 = vmatprep.subr.mxu0 0.0
    %4514 = vmatpush1.msra.mxu0 0.0
    %4515 = vmatprep.subr.mxu0 0.0
    %4516 = vmatpush1.msra.mxu0 0.0
    %4517 = vmatprep.subr.mxu0 0.0
    %4518 = vmatpush1.msra.mxu0 0.0
    %4519 = vmatprep.subr.mxu0 0.0
    %4520 = vmatpush1.msra.mxu0 0.0
    %4521 = vmatprep.subr.mxu0 0.0
    %4522 = vmatpush1.msra.mxu0 0.0
    %4523 = vmatprep.subr.mxu0 0.0
    %4524 = vmatpush1.msra.mxu0 0.0
    %4525 = vmatprep.subr.mxu0 0.0
    %4526 = vmatpush1.msra.mxu0 0.0
    %4527 = vmatprep.subr.mxu0 0.0
    %4528 = vmatpush1.msra.mxu0 0.0
    %4529 = vmatprep.subr.mxu0 0.0
    %4530 = vmatpush1.msra.mxu0 0.0
    %4531 = vmatprep.subr.mxu0 0.0
    %4532 = vmatpush1.msra.mxu0 0.0
    %4533 = vmatprep.subr.mxu0 0.0
    %4534 = vmatpush1.msra.mxu0 0.0
    %4535 = vmatprep.subr.mxu0 0.0
    %4536 = vmatpush1.msra.mxu0 0.0
    %4537 = vmatprep.subr.mxu0 0.0
    %4538 = vmatpush1.msra.mxu0 0.0
    %4539 = vmatprep.subr.mxu0 0.0
    %4540 = vmatpush1.msra.mxu0 0.0
    %4541 = vmatprep.subr.mxu0 0.0
    %4542 = vmatpush1.msra.mxu0 0.0
    %4543 = vmatprep.subr.mxu0 0.0
    %4544 = vmatpush1.msra.mxu0 0.0
    %4545 = vmatprep.subr.mxu0 0.0
    %4546 = vmatpush1.msra.mxu0 0.0
    %4547 = vmatprep.subr.mxu0 0.0
    %4548 = vmatpush1.msra.mxu0 0.0
    %4549 = vmatprep.subr.mxu0 0.0
    %4550 = vmatpush1.msra.mxu0 0.0
    %4551 = vmatprep.subr.mxu0 0.0
    %4552 = vmatpush1.msra.mxu0 0.0
    %4553 = vmatprep.subr.mxu0 0.0
    %4554 = vmatpush1.msra.mxu0 0.0
    %4555 = vmatprep.subr.mxu0 0.0
    %4556 = vmatpush1.msra.mxu0 0.0
    %4557 = vmatprep.subr.mxu0 0.0
    %4558 = vmatpush1.msra.mxu0 0.0
    %4559 = vmatprep.subr.mxu0 0.0
    %4560 = vmatpush1.msra.mxu0 0.0
    %4561 = vmatprep.subr.mxu0 0.0
    %4562 = vmatpush1.msra.mxu0 0.0
    %4563 = vmatprep.subr.mxu0 0.0
    %4564 = vmatpush1.msra.mxu0 0.0
    %4565 = vmatprep.subr.mxu0 0.0
    %4566 = vmatpush1.msra.mxu0 0.0
    %4567 = vmatprep.subr.mxu0 0.0
    %4568 = vmatpush1.msra.mxu0 0.0
    %4569 = vmatprep.subr.mxu0 0.0
    %4570 = vmatpush1.msra.mxu0 0.0
    %4571 = vmatprep.mubr.f32.mxu0 0.0
    %4572 = vmatmul.mubr.f32.gmra.mrb[0].mxu0 %v4505
    %v4573 = vpop.f32.mrb[0].mxu0
    %v4574 = vadd.f32 0.0, %v4573
    %v4575 = vpop.f32.mrb[0].mxu0
    %4576 = vdwg.mxu0
    %v4577 = vadd.f32 %v4330, %v4574
    %4578 = vst.msk [vmem:[#allocation2 + $0x8] sm:$0xff] %vm140, %v4577
    %v4579 = vld [vmem:[#allocation2] sm:$0xff]
    %v4580 = vld [vmem:[#allocation2 + $0x8] sm:$0xff]
    %v4581 = vadd.f32 %v2275, %v4579
    %v4582 = vadd.f32 %v2276, %v4580
    %v4583 = vld [vmem:[#allocation5] sm:$0x1]
    %v4584 = vld [vmem:[#allocation7] sm:$0x1]
    %v4585 = vsel %vm140, %v4581, 0.0
    %4586 = vadd.xlane.f32.xlu0 %v4585
    %v4587 = vpop.xlane.xlu0 %4586
    %v4588 = vsel %vm140, %v4582, 0.0
    %4589 = vadd.xlane.f32.xlu0 %v4588
    %v4590 = vpop.xlane.xlu0 %4589
    %v4591 = vmul.f32 %v4587, %v147
    %v4592 = vmul.f32 %v4590, %v147
    %v4593 = vsub.f32 %v4581, %v4591
    %v4594 = vsub.f32 %v4582, %v4592
    %v4595 = vmul.f32 %v4593, %v4593
    %v4596 = vmul.f32 %v4594, %v4594
    %v4597 = vsel %vm140, %v4595, 0.0
    %4598 = vadd.xlane.f32.xlu0 %v4597
    %v4599 = vpop.xlane.xlu0 %4598
    %v4600 = vsel %vm140, %v4596, 0.0
    %4601 = vadd.xlane.f32.xlu0 %v4600
    %v4602 = vpop.xlane.xlu0 %4601
    %v4603 = vmul.f32 %v4599, %v147
    %v4604 = vmul.f32 %v4602, %v147
    %v4605 = vadd.f32 %v4603, 1e-05
    %v4606 = vadd.f32 %v4604, 1e-05
    %v4607 = vrsqrt.pop %v4605
    %v4608 = vrsqrt.pop %v4606
    %v4609 = vmul.f32 %v4593, %v4607
    %v4610 = vmul.f32 %v4594, %v4608
    %v4612 = vlaneseq
    %v4613 = vshrl.u32 %v4612, 7
    %v4614 = vsub.s32 0, %v4613
    %v4615 = vrot.slane %v4583, %v4614
    %v4617 = vmul.f32 %v4609, %v4615
    %v4618 = vmul.f32 %v4610, %v4615
    %v4620 = vlaneseq
    %v4621 = vshrl.u32 %v4620, 7
    %v4622 = vsub.s32 0, %v4621
    %v4623 = vrot.slane %v4584, %v4622
    %v4625 = vadd.f32 %v4617, %v4623
    %v4626 = vadd.f32 %v4618, %v4623
    %v4627 = vld [vmem:[%s17] sm:$0xff]
    %v4628 = vld [vmem:[%s17 + $0x8] sm:$0xff]
    %v4629 = vld [vmem:[%s17 + $0x10] sm:$0xff]
    %v4630 = vld [vmem:[%s17 + $0x18] sm:$0xff]
    %v4631 = vld [vmem:[#allocation8] sm:$0x1]
    %v4633 = vlaneseq
    %v4634 = vshrl.u32 %v4633, 7
    %v4635 = vsub.s32 0, %v4634
    %v4636 = vrot.slane %v4631, %v4635
    %v4639 = vsel %vm140, %v4625, 0
    %v4642 = vsel %vm140, %v4626, 0
    %4644 = vmatprep.subr.mxu0 0.0
    %4645 = vmatpush1.msra.mxu0 %v4627
    %4646 = vmatprep.subr.mxu0 0.0
    %4647 = vmatpush1.msra.mxu0 %v4628
    %4648 = vmatprep.subr.mxu0 0.0
    %4649 = vmatpush1.msra.mxu0 %v4629
    %4650 = vmatprep.subr.mxu0 0.0
    %4651 = vmatpush1.msra.mxu0 %v4630
    %4652 = vmatprep.subr.mxu0 0.0
    %4653 = vmatpush1.msra.mxu0 0.0
    %4654 = vmatprep.subr.mxu0 0.0
    %4655 = vmatpush1.msra.mxu0 0.0
    %4656 = vmatprep.subr.mxu0 0.0
    %4657 = vmatpush1.msra.mxu0 0.0
    %4658 = vmatprep.subr.mxu0 0.0
    %4659 = vmatpush1.msra.mxu0 0.0
    %4660 = vmatprep.subr.mxu0 0.0
    %4661 = vmatpush1.msra.mxu0 0.0
    %4662 = vmatprep.subr.mxu0 0.0
    %4663 = vmatpush1.msra.mxu0 0.0
    %4664 = vmatprep.subr.mxu0 0.0
    %4665 = vmatpush1.msra.mxu0 0.0
    %4666 = vmatprep.subr.mxu0 0.0
    %4667 = vmatpush1.msra.mxu0 0.0
    %4668 = vmatprep.subr.mxu0 0.0
    %4669 = vmatpush1.msra.mxu0 0.0
    %4670 = vmatprep.subr.mxu0 0.0
    %4671 = vmatpush1.msra.mxu0 0.0
    %4672 = vmatprep.subr.mxu0 0.0
    %4673 = vmatpush1.msra.mxu0 0.0
    %4674 = vmatprep.subr.mxu0 0.0
    %4675 = vmatpush1.msra.mxu0 0.0
    %4676 = vmatprep.subr.mxu0 0.0
    %4677 = vmatpush1.msra.mxu0 0.0
    %4678 = vmatprep.subr.mxu0 0.0
    %4679 = vmatpush1.msra.mxu0 0.0
    %4680 = vmatprep.subr.mxu0 0.0
    %4681 = vmatpush1.msra.mxu0 0.0
    %4682 = vmatprep.subr.mxu0 0.0
    %4683 = vmatpush1.msra.mxu0 0.0
    %4684 = vmatprep.subr.mxu0 0.0
    %4685 = vmatpush1.msra.mxu0 0.0
    %4686 = vmatprep.subr.mxu0 0.0
    %4687 = vmatpush1.msra.mxu0 0.0
    %4688 = vmatprep.subr.mxu0 0.0
    %4689 = vmatpush1.msra.mxu0 0.0
    %4690 = vmatprep.subr.mxu0 0.0
    %4691 = vmatpush1.msra.mxu0 0.0
    %4692 = vmatprep.subr.mxu0 0.0
    %4693 = vmatpush1.msra.mxu0 0.0
    %4694 = vmatprep.subr.mxu0 0.0
    %4695 = vmatpush1.msra.mxu0 0.0
    %4696 = vmatprep.subr.mxu0 0.0
    %4697 = vmatpush1.msra.mxu0 0.0
    %4698 = vmatprep.subr.mxu0 0.0
    %4699 = vmatpush1.msra.mxu0 0.0
    %4700 = vmatprep.subr.mxu0 0.0
    %4701 = vmatpush1.msra.mxu0 0.0
    %4702 = vmatprep.subr.mxu0 0.0
    %4703 = vmatpush1.msra.mxu0 0.0
    %4704 = vmatprep.subr.mxu0 0.0
    %4705 = vmatpush1.msra.mxu0 0.0
    %4706 = vmatprep.subr.mxu0 0.0
    %4707 = vmatpush1.msra.mxu0 0.0
    %4708 = vmatprep.mubr.f32.mxu0 0.0
    %4709 = vmatmul.mubr.f32.gmra.mrb[0].mxu0 %v4639
    %v4710 = vpop.f32.mrb[0].mxu0
    %v4711 = vadd.f32 %v4636, %v4710
    %v4712 = vpop.f32.mrb[0].mxu0
    %4713 = vmatprep.mubr.f32.mxu0 0.0
    %4714 = vmatmul.mubr.f32.gmra.mrb[0].mxu0 %v4642
    %v4715 = vpop.f32.mrb[0].mxu0
    %v4716 = vadd.f32 %v4636, %v4715
    %v4717 = vpop.f32.mrb[0].mxu0
    %4718 = vdwg.mxu0
    %v4719 = vmax.f32 %v4711, 0.0
    %v4720 = vmax.f32 %v4716, 0.0
    %v4721 = vld [vmem:[%s19] sm:$0xff]
    %v4722 = vld [vmem:[%s19 + $0x8] sm:$0xff]
    %v4723 = vld [vmem:[%s19 + $0x10] sm:$0xff]
    %v4724 = vld [vmem:[%s19 + $0x18] sm:$0xff]
    %v4725 = vld [vmem:[%s19 + $0x20] sm:$0xff]
    %v4726 = vld [vmem:[%s19 + $0x28] sm:$0xff]
    %v4727 = vld [vmem:[%s19 + $0x30] sm:$0xff]
    %v4728 = vld [vmem:[%s19 + $0x38] sm:$0xff]
    %v4729 = vld [vmem:[#allocation10] sm:$0x1]
    %v4731 = vlaneseq
    %v4732 = vshrl.u32 %v4731, 7
    %v4733 = vsub.s32 0, %v4732
    %v4734 = vrot.slane %v4729, %v4733
    %vm4736 = vcmask 523264
    %v4738 = vsel %vm4736, %v4719, 0
    %v4741 = vsel %vm4736, %v4720, 0
    %4743 = vmatprep.subr.mxu0 0.0
    %4744 = vmatpush1.msra.mxu0 %v4721
    %4745 = vmatprep.subr.mxu0 0.0
    %4746 = vmatpush1.msra.mxu0 %v4722
    %4747 = vmatprep.subr.mxu0 0.0
    %4748 = vmatpush1.msra.mxu0 %v4723
    %4749 = vmatprep.subr.mxu0 0.0
    %4750 = vmatpush1.msra.mxu0 %v4724
    %4751 = vmatprep.subr.mxu0 0.0
    %4752 = vmatpush1.msra.mxu0 %v4725
    %4753 = vmatprep.subr.mxu0 0.0
    %4754 = vmatpush1.msra.mxu0 %v4726
    %4755 = vmatprep.subr.mxu0 0.0
    %4756 = vmatpush1.msra.mxu0 %v4727
    %4757 = vmatprep.subr.mxu0 0.0
    %4758 = vmatpush1.msra.mxu0 %v4728
    %4759 = vmatprep.subr.mxu0 0.0
    %4760 = vmatpush1.msra.mxu0 0.0
    %4761 = vmatprep.subr.mxu0 0.0
    %4762 = vmatpush1.msra.mxu0 0.0
    %4763 = vmatprep.subr.mxu0 0.0
    %4764 = vmatpush1.msra.mxu0 0.0
    %4765 = vmatprep.subr.mxu0 0.0
    %4766 = vmatpush1.msra.mxu0 0.0
    %4767 = vmatprep.subr.mxu0 0.0
    %4768 = vmatpush1.msra.mxu0 0.0
    %4769 = vmatprep.subr.mxu0 0.0
    %4770 = vmatpush1.msra.mxu0 0.0
    %4771 = vmatprep.subr.mxu0 0.0
    %4772 = vmatpush1.msra.mxu0 0.0
    %4773 = vmatprep.subr.mxu0 0.0
    %4774 = vmatpush1.msra.mxu0 0.0
    %4775 = vmatprep.subr.mxu0 0.0
    %4776 = vmatpush1.msra.mxu0 0.0
    %4777 = vmatprep.subr.mxu0 0.0
    %4778 = vmatpush1.msra.mxu0 0.0
    %4779 = vmatprep.subr.mxu0 0.0
    %4780 = vmatpush1.msra.mxu0 0.0
    %4781 = vmatprep.subr.mxu0 0.0
    %4782 = vmatpush1.msra.mxu0 0.0
    %4783 = vmatprep.subr.mxu0 0.0
    %4784 = vmatpush1.msra.mxu0 0.0
    %4785 = vmatprep.subr.mxu0 0.0
    %4786 = vmatpush1.msra.mxu0 0.0
    %4787 = vmatprep.subr.mxu0 0.0
    %4788 = vmatpush1.msra.mxu0 0.0
    %4789 = vmatprep.subr.mxu0 0.0
    %4790 = vmatpush1.msra.mxu0 0.0
    %4791 = vmatprep.subr.mxu0 0.0
    %4792 = vmatpush1.msra.mxu0 0.0
    %4793 = vmatprep.subr.mxu0 0.0
    %4794 = vmatpush1.msra.mxu0 0.0
    %4795 = vmatprep.subr.mxu0 0.0
    %4796 = vmatpush1.msra.mxu0 0.0
    %4797 = vmatprep.subr.mxu0 0.0
    %4798 = vmatpush1.msra.mxu0 0.0
    %4799 = vmatprep.subr.mxu0 0.0
    %4800 = vmatpush1.msra.mxu0 0.0
    %4801 = vmatprep.subr.mxu0 0.0
    %4802 = vmatpush1.msra.mxu0 0.0
    %4803 = vmatprep.subr.mxu0 0.0
    %4804 = vmatpush1.msra.mxu0 0.0
    %4805 = vmatprep.subr.mxu0 0.0
    %4806 = vmatpush1.msra.mxu0 0.0
    %4807 = vmatprep.mubr.f32.mxu0 0.0
    %4808 = vmatmul.mubr.f32.gmra.mrb[0].mxu0 %v4738
    %v4809 = vpop.f32.mrb[0].mxu0
    %v4810 = vadd.f32 %v4734, %v4809
    %v4811 = vpop.f32.mrb[0].mxu0
    %4812 = vmatprep.mubr.f32.mxu0 0.0
    %4813 = vmatmul.mubr.f32.gmra.mrb[0].mxu0 %v4741
    %v4814 = vpop.f32.mrb[0].mxu0
    %v4815 = vadd.f32 %v4734, %v4814
    %v4816 = vpop.f32.mrb[0].mxu0
    %4817 = vdwg.mxu0
    %v4818 = vadd.f32 %v4581, %v4810
    %v4819 = vadd.f32 %v4582, %v4815
    %4820 = vst.msk [vmem:[%s21] sm:$0xff] %vm140, %v4818
    %4821 = vst.msk [vmem:[%s21 + $0x8] sm:$0xff] %vm140, %v4819
    // Predicated region
    $region106: #{_decoder_layer_jit.1} parent=1 // pred_check
      _
    $region107: #{_decoder_layer_jit.1} parent=1 // pred_check_branch
      %4823 = sbr.rel (0) target = $region109
    $region108: #{_decoder_layer_jit.1} parent=1 // pred_region
      _
    $region109: #{_decoder_layer_jit.1} parent=1 // pred_fallthru
      _
    // Predicated region
    $region110: #{_decoder_layer_jit.1} parent=1 // pred_check
      _
    $region111: #{_decoder_layer_jit.1} parent=1 // pred_check_branch
      %4825 = sbr.rel (0) target = $region113
    $region112: #{_decoder_layer_jit.1} parent=1 // pred_region
      _
    $region113: #{_decoder_layer_jit.1} parent=1 // pred_fallthru
      _
    %4826 = vsyncpa [#allocation4], 1
    %4827 = vsyncpa [#allocation6], 1
    %4828 = vsyncpa [#allocation9], 1

</llo_original>
